<compile_context>
chip_gen: v7x
topology: tpu7x:2x2x1
jax: 0.10.0
libtpu: 0.0.40
codegen_flags: <defaults>
</compile_context>

<pallas_src>
import jax
import jax.numpy as jnp
from jax.experimental import pallas as pl
from jax.experimental.pallas import tpu as pltpu

# ---------------- model config (small, synthetic) ----------------
VOCAB = 100
SEQ = 8
BATCH = 2
HIDDEN = 64          # original RoBERTa uses 768
NUM_HEADS = 4
HEAD_DIM = HIDDEN // NUM_HEADS
FFN = 128            # original RoBERTa uses 3072
NUM_LAYERS = 2       # original RoBERTa uses 12
NUM_CLASSES = 2
CLS_PAD = 128        # lane-dense padded width for the classification head
LN_EPS = 1e-5
SCALE = 1.0 / (HEAD_DIM ** 0.5)

# ---- packed-weight slab layout (all segment starts 128-lane aligned) ----
OFF_WQKV = 0                     # (H, 3H)  = (64, 192)
OFF_WO = 256                     # (H, H)   = (64, 64)
OFF_W1 = 384                     # (H, FFN) = (64, 128)
OFF_CLS = 512                    # (H, 128) padded cls head (layer-0 slot only)
W_SLAB_W = 640

VEC_W = 192                      # >= 3H, FFN, CLS_PAD
ROW_BQKV, ROW_BO, ROW_LN1G, ROW_LN1B = 0, 1, 2, 3
ROW_B1, ROW_B2, ROW_LN2G, ROW_LN2B = 4, 5, 6, 7
ROW_EMB_LN_G, ROW_EMB_LN_B, ROW_CLS_B = 0, 1, 2   # in the extra "global" layer slot


def _layer_norm(x, gamma, beta, eps=LN_EPS):
    # Single-pass LN: one traversal for sum & sum-of-squares; gamma folded into
    # one scale so the normalize is a single multiply-add.
    mean = jnp.mean(x, axis=-1, keepdims=True)
    mean_sq = jnp.mean(x * x, axis=-1, keepdims=True)
    var = mean_sq - mean * mean
    scale = gamma * jax.lax.rsqrt(var + eps)
    return x * scale + (beta - mean * scale)


# ---------------- fused Pallas kernel ----------------
def fused_forward_kernel(emb_ref, bias_ref, w_ref, w2_ref, vec_ref, out_ref):
    B, S, H = emb_ref.shape
    BS = B * S
    f32, bf16 = jnp.float32, jnp.bfloat16

    # Global (non-layer) vectors from the packed slab.
    emb_g = vec_ref[NUM_LAYERS, ROW_EMB_LN_G:ROW_EMB_LN_G + 1, :H]
    emb_b = vec_ref[NUM_LAYERS, ROW_EMB_LN_B:ROW_EMB_LN_B + 1, :H]
    cls_b = vec_ref[NUM_LAYERS, ROW_CLS_B:ROW_CLS_B + 1, :CLS_PAD]

    # Embedding LayerNorm; batch folded into rows -> lane-dense (BS, H) activations.
    x = _layer_norm(emb_ref[...].reshape(BS, H), emb_g, emb_b)

    # Additive attention-mask bias broadcast (B,1,S)->(B,S,S), hoisted ONCE out of
    # all loops (JAX does not CSE broadcast_in_dim).
    bias_bss = jnp.broadcast_to(bias_ref[...], (B, S, S))

    for l in range(NUM_LAYERS):   # static unroll; all layer weights are VMEM-resident
        wqkv = w_ref[l, :, OFF_WQKV:OFF_WQKV + 3 * H]      # (H, 3H)  bf16
        wo = w_ref[l, :, OFF_WO:OFF_WO + H]                # (H, H)   bf16
        w1 = w_ref[l, :, OFF_W1:OFF_W1 + FFN]              # (H, FFN) bf16
        w2 = w2_ref[l]                                     # (FFN, H) bf16
        bqkv = vec_ref[l, ROW_BQKV:ROW_BQKV + 1, :3 * H]
        bo = vec_ref[l, ROW_BO:ROW_BO + 1, :H]
        ln1g = vec_ref[l, ROW_LN1G:ROW_LN1G + 1, :H]
        ln1b = vec_ref[l, ROW_LN1B:ROW_LN1B + 1, :H]
        b1 = vec_ref[l, ROW_B1:ROW_B1 + 1, :FFN]
        b2 = vec_ref[l, ROW_B2:ROW_B2 + 1, :H]
        ln2g = vec_ref[l, ROW_LN2G:ROW_LN2G + 1, :H]
        ln2b = vec_ref[l, ROW_LN2B:ROW_LN2B + 1, :H]

        # Fused QKV projection: bf16 operands, f32 MXU accumulation, 192-lane output.
        qkv = jnp.dot(x.astype(bf16), wqkv, preferred_element_type=f32) + bqkv
        # 1/sqrt(head_dim) folded into Q (saves per-head score scaling).
        q = (qkv[:, 0 * H:1 * H] * SCALE).reshape(B, S, H)
        k = qkv[:, 1 * H:2 * H].reshape(B, S, H)
        v = qkv[:, 2 * H:3 * H].reshape(B, S, H)

        # Multi-head attention: static head loop, batched over B via single-batch-dim
        # einsums; operands cast to bf16 right before each MXU contraction.
        # TODO(synk): a single 'bqhd,bkhd->bhqk' all-heads contraction is not used
        # because multi-batch-dim dot_general lowering is not robust in Mosaic at
        # these shapes; the per-head einsum path is kept (proven to lower cleanly).
        ctx_heads = []
        for h in range(NUM_HEADS):
            lo, hi = h * HEAD_DIM, (h + 1) * HEAD_DIM
            s = jnp.einsum('bqd,bkd->bqk',
                           q[:, :, lo:hi].astype(bf16), k[:, :, lo:hi].astype(bf16),
                           preferred_element_type=f32) + bias_bss
            s = s - jnp.max(s, axis=-1, keepdims=True)
            p = jnp.exp(s)
            p = p * pl.reciprocal(jnp.sum(p, axis=-1, keepdims=True), approx=True)
            ctx_h = jnp.einsum('bqk,bkd->bqd',
                               p.astype(bf16), v[:, :, lo:hi].astype(bf16),
                               preferred_element_type=f32)
            ctx_heads.append(ctx_h.reshape(BS, HEAD_DIM))
        ctx = jnp.concatenate(ctx_heads, axis=-1)            # (BS, H) f32

        attn_out = jnp.dot(ctx.astype(bf16), wo, preferred_element_type=f32) + bo
        x = _layer_norm(x + attn_out, ln1g, ln1b)

        # TODO(synk): RoBERTa uses exact (erf) GELU; tanh approximation used here.
        h1 = jax.nn.gelu(
            jnp.dot(x.astype(bf16), w1, preferred_element_type=f32) + b1,
            approximate=True)
        h2 = jnp.dot(h1.astype(bf16), w2, preferred_element_type=f32) + b2
        x = _layer_norm(x + h2, ln2g, ln2b)

    # Classification head on the B CLS rows only (row b*S of the folded activations);
    # the (H, 128) padded weight keeps the output store lane-dense.  The wrapper
    # slices the first NUM_CLASSES lanes.
    x_cls = jnp.concatenate([x[b * S:b * S + 1, :] for b in range(B)], axis=0)  # (B, H)
    cls_w = w_ref[0, :, OFF_CLS:OFF_CLS + CLS_PAD]                              # (H, 128)
    out_ref[...] = (jnp.dot(x_cls.astype(bf16), cls_w, preferred_element_type=f32)
                    + cls_b)


# ---------------- cost estimate ----------------
def _cost_estimate(B, S, bytes_accessed):
    BS = B * S
    per_layer = (2 * BS * HIDDEN * 3 * HIDDEN                        # fused QKV
                 + NUM_HEADS * 2 * (2 * B * S * S * HEAD_DIM)        # scores + ctx
                 + 2 * BS * HIDDEN * HIDDEN                          # out proj
                 + 2 * (2 * BS * HIDDEN * FFN))                      # FFN
    flops = NUM_LAYERS * per_layer + 2 * B * HIDDEN * CLS_PAD
    transcendentals = NUM_LAYERS * (NUM_HEADS * B * S * S + BS * FFN)
    return pl.CostEstimate(flops=flops, transcendentals=transcendentals,
                           bytes_accessed=bytes_accessed)


# ---------------- forward pass (gather glue in JAX, everything else fused) ----------------
@jax.jit
def rumour_cls_forward(params, ids, masks):
    B, S = ids.shape
    masks_f = masks.astype(jnp.float32)

    # Embedding gathers are glue.  Position ids follow RoBERTa: cumulative count of
    # non-padded tokens (from the attention mask) + padding_idx (=1), so padded
    # positions map to the pad position id.
    pos_ids = (jnp.cumsum(masks, axis=1) * masks + 1).astype(jnp.int32)
    word = jnp.take(params["word_emb"], ids, axis=0)          # (B, S, H)
    pos = jnp.take(params["pos_emb"], pos_ids, axis=0)        # (B, S, H)
    typ = params["type_emb"][None]                            # (1, 1, H)
    emb = word + pos + typ

    # Additive attention-mask bias (0 keep, -1e9 masked), kept in f32.
    bias = ((1.0 - masks_f) * -1e9).reshape(B, 1, S)

    # Only 5 kernel inputs: activations, mask bias, and 3 pre-packed weight slabs.
    args = (emb, bias, params["w_slab"], params["w2_slab"], params["vec_slab"])
    bytes_accessed = (sum(int(a.size) * a.dtype.itemsize for a in args)
                      + B * CLS_PAD * 4)

    logits_all = pl.pallas_call(
        fused_forward_kernel,
        out_shape=jax.ShapeDtypeStruct((B, CLS_PAD), jnp.float32),
        cost_estimate=_cost_estimate(B, S, bytes_accessed),
        compiler_params=pltpu.CompilerParams(vmem_limit_bytes=32 * 1024 * 1024),
    )(*args)

    # Slice away the lane padding -> (B, NUM_CLASSES) CLS logits.
    return logits_all[:, :NUM_CLASSES]


# ---------------- parameter init (deterministic, synthetic, packed once) ----------------
def init_params(key):
    keys = iter(jax.random.split(key, 4 + NUM_LAYERS * 6))

    def nrm(shape):
        return jax.random.normal(next(keys), shape, jnp.float32) * 0.02

    word_emb = nrm((VOCAB, HIDDEN))
    pos_emb = nrm((SEQ + 2, HIDDEN))
    type_emb = nrm((1, HIDDEN))
    cls_w = nrm((HIDDEN, NUM_CLASSES))
    cls_b = jnp.zeros((NUM_CLASSES,), jnp.float32)

    w_slab = jnp.zeros((NUM_LAYERS, HIDDEN, W_SLAB_W), jnp.float32)
    w2_slab = jnp.zeros((NUM_LAYERS, FFN, HIDDEN), jnp.float32)
    vec_slab = jnp.zeros((NUM_LAYERS + 1, 8, VEC_W), jnp.float32)

    for l in range(NUM_LAYERS):
        wq, wk, wv = nrm((HIDDEN, HIDDEN)), nrm((HIDDEN, HIDDEN)), nrm((HIDDEN, HIDDEN))
        wo = nrm((HIDDEN, HIDDEN))
        w1 = nrm((HIDDEN, FFN))
        w2 = nrm((FFN, HIDDEN))
        w_slab = w_slab.at[l, :, OFF_WQKV:OFF_WQKV + 3 * HIDDEN].set(
            jnp.concatenate([wq, wk, wv], axis=1))             # fused (H, 3H)
        w_slab = w_slab.at[l, :, OFF_WO:OFF_WO + HIDDEN].set(wo)
        w_slab = w_slab.at[l, :, OFF_W1:OFF_W1 + FFN].set(w1)
        w2_slab = w2_slab.at[l].set(w2)
        # Bias rows stay zero; LayerNorm gammas = 1.
        vec_slab = vec_slab.at[l, ROW_LN1G, :HIDDEN].set(1.0)
        vec_slab = vec_slab.at[l, ROW_LN2G, :HIDDEN].set(1.0)

    # Globals: embedding LN (gamma=1, beta=0) + padded cls head, packed once.
    vec_slab = vec_slab.at[NUM_LAYERS, ROW_EMB_LN_G, :HIDDEN].set(1.0)
    vec_slab = vec_slab.at[NUM_LAYERS, ROW_CLS_B, :NUM_CLASSES].set(cls_b)
    w_slab = w_slab.at[0, :, OFF_CLS:OFF_CLS + NUM_CLASSES].set(cls_w)

    return {
        "word_emb": word_emb,
        "pos_emb": pos_emb,
        "type_emb": type_emb,
        "w_slab": w_slab.astype(jnp.bfloat16),     # bf16 MXU operands, cast once here
        "w2_slab": w2_slab.astype(jnp.bfloat16),
        "vec_slab": vec_slab,                      # bias / LN vectors stay f32
    }


if __name__ == "__main__":
    key = jax.random.PRNGKey(0)
    k_param, k_ids = jax.random.split(key)

    params = init_params(k_param)
    ids = jax.random.randint(k_ids, (BATCH, SEQ), 0, VOCAB, dtype=jnp.int32)
    masks = jnp.ones((BATCH, SEQ), jnp.int32)
    masks = masks.at[1, SEQ - 2:].set(0)  # pad the tail of sample 1

    logits = rumour_cls_forward(params, ids, masks)
    jax.block_until_ready(logits)
    assert logits.shape == (BATCH, NUM_CLASSES)
    assert bool(jnp.all(jnp.isfinite(logits)))
    print("KERNEL_OK")
</pallas_src>

<mosaic_0001>
module attributes {stable_mosaic.version = 11 : i64} {
  func.func @fused_forward_kernel(%arg0: memref<2x8x64xf32, #tpu.memory_space<vmem>>, %arg1: memref<2x1x8xf32, #tpu.memory_space<vmem>>, %arg2: memref<2x64x640xbf16, #tpu.memory_space<vmem>>, %arg3: memref<2x128x64xbf16, #tpu.memory_space<vmem>>, %arg4: memref<3x8x192xf32, #tpu.memory_space<vmem>>, %arg5: memref<2x128xf32, #tpu.memory_space<vmem>>) attributes {dimension_semantics = [], scalar_prefetch = 0 : i64, scratch_operands = 0 : i64, tpu.core_type = #tpu.core_type<tc>} {
    %c2 = arith.constant 2 : index
    %c0 = arith.constant 0 : index
    %c0_0 = arith.constant 0 : index
    %0 = vector.load %arg4[%c2, %c0, %c0_0] : memref<3x8x192xf32, #tpu.memory_space<vmem>>, vector<1x1x64xf32>
    %1 = vector.shape_cast %0 : vector<1x1x64xf32> to vector<1x64xf32>
    %c2_1 = arith.constant 2 : index
    %c1 = arith.constant 1 : index
    %c0_2 = arith.constant 0 : index
    %2 = vector.load %arg4[%c2_1, %c1, %c0_2] : memref<3x8x192xf32, #tpu.memory_space<vmem>>, vector<1x1x64xf32>
    %3 = vector.shape_cast %2 : vector<1x1x64xf32> to vector<1x64xf32>
    %c2_3 = arith.constant 2 : index
    %c2_4 = arith.constant 2 : index
    %c0_5 = arith.constant 0 : index
    %4 = vector.load %arg4[%c2_3, %c2_4, %c0_5] : memref<3x8x192xf32, #tpu.memory_space<vmem>>, vector<1x1x128xf32>
    %5 = vector.shape_cast %4 : vector<1x1x128xf32> to vector<1x128xf32>
    %c0_6 = arith.constant 0 : index
    %c0_7 = arith.constant 0 : index
    %c0_8 = arith.constant 0 : index
    %6 = vector.load %arg0[%c0_6, %c0_7, %c0_8] : memref<2x8x64xf32, #tpu.memory_space<vmem>>, vector<2x8x64xf32>
    %7 = vector.shape_cast %6 : vector<2x8x64xf32> to vector<16x64xf32>
    %cst = arith.constant dense<0.000000e+00> : vector<16xf32>
    %8 = vector.multi_reduction <add>, %7, %cst [1] : vector<16x64xf32> to vector<16xf32>
    %9 = vector.shape_cast %8 : vector<16xf32> to vector<16x1xf32>
    %cst_9 = arith.constant 6.400000e+01 : f32
    %10 = vector.broadcast %cst_9 : f32 to vector<16x1xf32>
    %11 = arith.divf %9, %10 : vector<16x1xf32>
    %12 = arith.mulf %7, %7 : vector<16x64xf32>
    %cst_10 = arith.constant dense<0.000000e+00> : vector<16xf32>
    %13 = vector.multi_reduction <add>, %12, %cst_10 [1] : vector<16x64xf32> to vector<16xf32>
    %14 = vector.shape_cast %13 : vector<16xf32> to vector<16x1xf32>
    %cst_11 = arith.constant 6.400000e+01 : f32
    %15 = vector.broadcast %cst_11 : f32 to vector<16x1xf32>
    %16 = arith.divf %14, %15 : vector<16x1xf32>
    %17 = arith.mulf %11, %11 : vector<16x1xf32>
    %18 = arith.subf %16, %17 : vector<16x1xf32>
    %cst_12 = arith.constant 9.99999974E-6 : f32
    %19 = vector.broadcast %cst_12 : f32 to vector<16x1xf32>
    %20 = arith.addf %18, %19 : vector<16x1xf32>
    %21 = math.rsqrt %20 : vector<16x1xf32>
    %22 = vector.broadcast %1 : vector<1x64xf32> to vector<16x64xf32>
    %23 = vector.broadcast %21 : vector<16x1xf32> to vector<16x64xf32>
    %24 = arith.mulf %22, %23 : vector<16x64xf32>
    %25 = arith.mulf %7, %24 : vector<16x64xf32>
    %26 = vector.broadcast %11 : vector<16x1xf32> to vector<16x64xf32>
    %27 = arith.mulf %26, %24 : vector<16x64xf32>
    %28 = vector.broadcast %3 : vector<1x64xf32> to vector<16x64xf32>
    %29 = arith.subf %28, %27 : vector<16x64xf32>
    %30 = arith.addf %25, %29 : vector<16x64xf32>
    %c0_13 = arith.constant 0 : index
    %c0_14 = arith.constant 0 : index
    %c0_15 = arith.constant 0 : index
    %31 = vector.load %arg1[%c0_13, %c0_14, %c0_15] : memref<2x1x8xf32, #tpu.memory_space<vmem>>, vector<2x1x8xf32>
    %32 = vector.shape_cast %31 : vector<2x1x8xf32> to vector<2x1x8xf32>
    %33 = vector.broadcast %32 : vector<2x1x8xf32> to vector<2x8x8xf32>
    %c0_16 = arith.constant 0 : index
    %c0_17 = arith.constant 0 : index
    %c0_18 = arith.constant 0 : index
    %34 = vector.load %arg2[%c0_16, %c0_17, %c0_18] : memref<2x64x640xbf16, #tpu.memory_space<vmem>>, vector<1x64x192xbf16>
    %35 = vector.shape_cast %34 : vector<1x64x192xbf16> to vector<64x192xbf16>
    %c0_19 = arith.constant 0 : index
    %c0_20 = arith.constant 0 : index
    %c256 = arith.constant 256 : index
    %36 = vector.load %arg2[%c0_19, %c0_20, %c256] : memref<2x64x640xbf16, #tpu.memory_space<vmem>>, vector<1x64x64xbf16>
    %37 = vector.shape_cast %36 : vector<1x64x64xbf16> to vector<64x64xbf16>
    %c0_21 = arith.constant 0 : index
    %c0_22 = arith.constant 0 : index
    %c384 = arith.constant 384 : index
    %38 = vector.load %arg2[%c0_21, %c0_22, %c384] : memref<2x64x640xbf16, #tpu.memory_space<vmem>>, vector<1x64x128xbf16>
    %39 = vector.shape_cast %38 : vector<1x64x128xbf16> to vector<64x128xbf16>
    %c0_23 = arith.constant 0 : index
    %c0_24 = arith.constant 0 : index
    %c0_25 = arith.constant 0 : index
    %40 = vector.load %arg3[%c0_23, %c0_24, %c0_25] : memref<2x128x64xbf16, #tpu.memory_space<vmem>>, vector<1x128x64xbf16>
    %41 = vector.shape_cast %40 : vector<1x128x64xbf16> to vector<128x64xbf16>
    %c0_26 = arith.constant 0 : index
    %c0_27 = arith.constant 0 : index
    %c0_28 = arith.constant 0 : index
    %42 = vector.load %arg4[%c0_26, %c0_27, %c0_28] : memref<3x8x192xf32, #tpu.memory_space<vmem>>, vector<1x1x192xf32>
    %43 = vector.shape_cast %42 : vector<1x1x192xf32> to vector<1x192xf32>
    %c0_29 = arith.constant 0 : index
    %c1_30 = arith.constant 1 : index
    %c0_31 = arith.constant 0 : index
    %44 = vector.load %arg4[%c0_29, %c1_30, %c0_31] : memref<3x8x192xf32, #tpu.memory_space<vmem>>, vector<1x1x64xf32>
    %45 = vector.shape_cast %44 : vector<1x1x64xf32> to vector<1x64xf32>
    %c0_32 = arith.constant 0 : index
    %c2_33 = arith.constant 2 : index
    %c0_34 = arith.constant 0 : index
    %46 = vector.load %arg4[%c0_32, %c2_33, %c0_34] : memref<3x8x192xf32, #tpu.memory_space<vmem>>, vector<1x1x64xf32>
    %47 = vector.shape_cast %46 : vector<1x1x64xf32> to vector<1x64xf32>
    %c0_35 = arith.constant 0 : index
    %c3 = arith.constant 3 : index
    %c0_36 = arith.constant 0 : index
    %48 = vector.load %arg4[%c0_35, %c3, %c0_36] : memref<3x8x192xf32, #tpu.memory_space<vmem>>, vector<1x1x64xf32>
    %49 = vector.shape_cast %48 : vector<1x1x64xf32> to vector<1x64xf32>
    %c0_37 = arith.constant 0 : index
    %c4 = arith.constant 4 : index
    %c0_38 = arith.constant 0 : index
    %50 = vector.load %arg4[%c0_37, %c4, %c0_38] : memref<3x8x192xf32, #tpu.memory_space<vmem>>, vector<1x1x128xf32>
    %51 = vector.shape_cast %50 : vector<1x1x128xf32> to vector<1x128xf32>
    %c0_39 = arith.constant 0 : index
    %c5 = arith.constant 5 : index
    %c0_40 = arith.constant 0 : index
    %52 = vector.load %arg4[%c0_39, %c5, %c0_40] : memref<3x8x192xf32, #tpu.memory_space<vmem>>, vector<1x1x64xf32>
    %53 = vector.shape_cast %52 : vector<1x1x64xf32> to vector<1x64xf32>
    %c0_41 = arith.constant 0 : index
    %c6 = arith.constant 6 : index
    %c0_42 = arith.constant 0 : index
    %54 = vector.load %arg4[%c0_41, %c6, %c0_42] : memref<3x8x192xf32, #tpu.memory_space<vmem>>, vector<1x1x64xf32>
    %55 = vector.shape_cast %54 : vector<1x1x64xf32> to vector<1x64xf32>
    %c0_43 = arith.constant 0 : index
    %c7 = arith.constant 7 : index
    %c0_44 = arith.constant 0 : index
    %56 = vector.load %arg4[%c0_43, %c7, %c0_44] : memref<3x8x192xf32, #tpu.memory_space<vmem>>, vector<1x1x64xf32>
    %57 = vector.shape_cast %56 : vector<1x1x64xf32> to vector<1x64xf32>
    %58 = arith.truncf %30 : vector<16x64xf32> to vector<16x64xbf16>
    %cst_45 = arith.constant dense<0.000000e+00> : vector<16x192xf32>
    %59 = tpu.matmul %58, %35, %cst_45 {dimension_numbers = #tpu.dot_dimension_numbers<[1], [0], [0], [1], [0, 0, 1, 1], [], []>} : vector<16x64xbf16>, vector<64x192xbf16>, vector<16x192xf32> -> vector<16x192xf32>
    %60 = vector.broadcast %43 : vector<1x192xf32> to vector<16x192xf32>
    %61 = arith.addf %59, %60 : vector<16x192xf32>
    %62 = vector.extract_strided_slice %61 {offsets = [0, 0], sizes = [16, 64], strides = [1, 1]} : vector<16x192xf32> to vector<16x64xf32>
    %cst_46 = arith.constant 2.500000e-01 : f32
    %63 = vector.broadcast %cst_46 : f32 to vector<16x64xf32>
    %64 = arith.mulf %62, %63 : vector<16x64xf32>
    %65 = vector.shape_cast %64 : vector<16x64xf32> to vector<2x8x64xf32>
    %66 = vector.extract_strided_slice %61 {offsets = [0, 64], sizes = [16, 64], strides = [1, 1]} : vector<16x192xf32> to vector<16x64xf32>
    %67 = vector.shape_cast %66 : vector<16x64xf32> to vector<2x8x64xf32>
    %68 = vector.extract_strided_slice %61 {offsets = [0, 128], sizes = [16, 64], strides = [1, 1]} : vector<16x192xf32> to vector<16x64xf32>
    %69 = vector.shape_cast %68 : vector<16x64xf32> to vector<2x8x64xf32>
    %70 = vector.extract_strided_slice %65 {offsets = [0, 0, 0], sizes = [2, 8, 16], strides = [1, 1, 1]} : vector<2x8x64xf32> to vector<2x8x16xf32>
    %71 = arith.truncf %70 : vector<2x8x16xf32> to vector<2x8x16xbf16>
    %72 = vector.extract_strided_slice %67 {offsets = [0, 0, 0], sizes = [2, 8, 16], strides = [1, 1, 1]} : vector<2x8x64xf32> to vector<2x8x16xf32>
    %73 = arith.truncf %72 : vector<2x8x16xf32> to vector<2x8x16xbf16>
    "tpu.trace_start"() <{level = 10 : i32, message = "bqd,bkd->bqk"}> : () -> ()
    %cst_47 = arith.constant dense<0.000000e+00> : vector<2x8x8xf32>
    %74 = tpu.matmul %71, %73, %cst_47 {dimension_numbers = #tpu.dot_dimension_numbers<[2], [2], [1], [1], [0, 0, 0, 1, 1, 1], [0], [0]>} : vector<2x8x16xbf16>, vector<2x8x16xbf16>, vector<2x8x8xf32> -> vector<2x8x8xf32>
    "tpu.trace_stop"() : () -> ()
    %75 = arith.addf %74, %33 : vector<2x8x8xf32>
    %cst_48 = arith.constant dense<0xFF800000> : vector<2x8xf32>
    %76 = vector.multi_reduction <maximumf>, %75, %cst_48 [2] : vector<2x8x8xf32> to vector<2x8xf32>
    %77 = vector.shape_cast %76 : vector<2x8xf32> to vector<2x8x1xf32>
    %78 = vector.broadcast %77 : vector<2x8x1xf32> to vector<2x8x8xf32>
    %79 = arith.subf %75, %78 : vector<2x8x8xf32>
    %80 = math.exp %79 : vector<2x8x8xf32>
    %cst_49 = arith.constant dense<0.000000e+00> : vector<2x8xf32>
    %81 = vector.multi_reduction <add>, %80, %cst_49 [2] : vector<2x8x8xf32> to vector<2x8xf32>
    %82 = vector.shape_cast %81 : vector<2x8xf32> to vector<2x8x1xf32>
    %83 = tpu.reciprocal %82 {approx = true} : vector<2x8x1xf32> -> vector<2x8x1xf32>
    %84 = vector.broadcast %83 : vector<2x8x1xf32> to vector<2x8x8xf32>
    %85 = arith.mulf %80, %84 : vector<2x8x8xf32>
    %86 = arith.truncf %85 : vector<2x8x8xf32> to vector<2x8x8xbf16>
    %87 = vector.extract_strided_slice %69 {offsets = [0, 0, 0], sizes = [2, 8, 16], strides = [1, 1, 1]} : vector<2x8x64xf32> to vector<2x8x16xf32>
    %88 = arith.truncf %87 : vector<2x8x16xf32> to vector<2x8x16xbf16>
    "tpu.trace_start"() <{level = 10 : i32, message = "bqk,bkd->bqd"}> : () -> ()
    %cst_50 = arith.constant dense<0.000000e+00> : vector<2x8x16xf32>
    %89 = tpu.matmul %86, %88, %cst_50 {dimension_numbers = #tpu.dot_dimension_numbers<[2], [1], [1], [2], [0, 0, 0, 1, 1, 2], [0], [0]>} : vector<2x8x8xbf16>, vector<2x8x16xbf16>, vector<2x8x16xf32> -> vector<2x8x16xf32>
    "tpu.trace_stop"() : () -> ()
    %90 = vector.shape_cast %89 : vector<2x8x16xf32> to vector<16x16xf32>
    %91 = vector.extract_strided_slice %65 {offsets = [0, 0, 16], sizes = [2, 8, 16], strides = [1, 1, 1]} : vector<2x8x64xf32> to vector<2x8x16xf32>
    %92 = arith.truncf %91 : vector<2x8x16xf32> to vector<2x8x16xbf16>
    %93 = vector.extract_strided_slice %67 {offsets = [0, 0, 16], sizes = [2, 8, 16], strides = [1, 1, 1]} : vector<2x8x64xf32> to vector<2x8x16xf32>
    %94 = arith.truncf %93 : vector<2x8x16xf32> to vector<2x8x16xbf16>
    "tpu.trace_start"() <{level = 10 : i32, message = "bqd,bkd->bqk"}> : () -> ()
    %cst_51 = arith.constant dense<0.000000e+00> : vector<2x8x8xf32>
    %95 = tpu.matmul %92, %94, %cst_51 {dimension_numbers = #tpu.dot_dimension_numbers<[2], [2], [1], [1], [0, 0, 0, 1, 1, 1], [0], [0]>} : vector<2x8x16xbf16>, vector<2x8x16xbf16>, vector<2x8x8xf32> -> vector<2x8x8xf32>
    "tpu.trace_stop"() : () -> ()
    %96 = arith.addf %95, %33 : vector<2x8x8xf32>
    %cst_52 = arith.constant dense<0xFF800000> : vector<2x8xf32>
    %97 = vector.multi_reduction <maximumf>, %96, %cst_52 [2] : vector<2x8x8xf32> to vector<2x8xf32>
    %98 = vector.shape_cast %97 : vector<2x8xf32> to vector<2x8x1xf32>
    %99 = vector.broadcast %98 : vector<2x8x1xf32> to vector<2x8x8xf32>
    %100 = arith.subf %96, %99 : vector<2x8x8xf32>
    %101 = math.exp %100 : vector<2x8x8xf32>
    %cst_53 = arith.constant dense<0.000000e+00> : vector<2x8xf32>
    %102 = vector.multi_reduction <add>, %101, %cst_53 [2] : vector<2x8x8xf32> to vector<2x8xf32>
    %103 = vector.shape_cast %102 : vector<2x8xf32> to vector<2x8x1xf32>
    %104 = tpu.reciprocal %103 {approx = true} : vector<2x8x1xf32> -> vector<2x8x1xf32>
    %105 = vector.broadcast %104 : vector<2x8x1xf32> to vector<2x8x8xf32>
    %106 = arith.mulf %101, %105 : vector<2x8x8xf32>
    %107 = arith.truncf %106 : vector<2x8x8xf32> to vector<2x8x8xbf16>
    %108 = vector.extract_strided_slice %69 {offsets = [0, 0, 16], sizes = [2, 8, 16], strides = [1, 1, 1]} : vector<2x8x64xf32> to vector<2x8x16xf32>
    %109 = arith.truncf %108 : vector<2x8x16xf32> to vector<2x8x16xbf16>
    "tpu.trace_start"() <{level = 10 : i32, message = "bqk,bkd->bqd"}> : () -> ()
    %cst_54 = arith.constant dense<0.000000e+00> : vector<2x8x16xf32>
    %110 = tpu.matmul %107, %109, %cst_54 {dimension_numbers = #tpu.dot_dimension_numbers<[2], [1], [1], [2], [0, 0, 0, 1, 1, 2], [0], [0]>} : vector<2x8x8xbf16>, vector<2x8x16xbf16>, vector<2x8x16xf32> -> vector<2x8x16xf32>
    "tpu.trace_stop"() : () -> ()
    %111 = vector.shape_cast %110 : vector<2x8x16xf32> to vector<16x16xf32>
    %112 = vector.extract_strided_slice %65 {offsets = [0, 0, 32], sizes = [2, 8, 16], strides = [1, 1, 1]} : vector<2x8x64xf32> to vector<2x8x16xf32>
    %113 = arith.truncf %112 : vector<2x8x16xf32> to vector<2x8x16xbf16>
    %114 = vector.extract_strided_slice %67 {offsets = [0, 0, 32], sizes = [2, 8, 16], strides = [1, 1, 1]} : vector<2x8x64xf32> to vector<2x8x16xf32>
    %115 = arith.truncf %114 : vector<2x8x16xf32> to vector<2x8x16xbf16>
    "tpu.trace_start"() <{level = 10 : i32, message = "bqd,bkd->bqk"}> : () -> ()
    %cst_55 = arith.constant dense<0.000000e+00> : vector<2x8x8xf32>
    %116 = tpu.matmul %113, %115, %cst_55 {dimension_numbers = #tpu.dot_dimension_numbers<[2], [2], [1], [1], [0, 0, 0, 1, 1, 1], [0], [0]>} : vector<2x8x16xbf16>, vector<2x8x16xbf16>, vector<2x8x8xf32> -> vector<2x8x8xf32>
    "tpu.trace_stop"() : () -> ()
    %117 = arith.addf %116, %33 : vector<2x8x8xf32>
    %cst_56 = arith.constant dense<0xFF800000> : vector<2x8xf32>
    %118 = vector.multi_reduction <maximumf>, %117, %cst_56 [2] : vector<2x8x8xf32> to vector<2x8xf32>
    %119 = vector.shape_cast %118 : vector<2x8xf32> to vector<2x8x1xf32>
    %120 = vector.broadcast %119 : vector<2x8x1xf32> to vector<2x8x8xf32>
    %121 = arith.subf %117, %120 : vector<2x8x8xf32>
    %122 = math.exp %121 : vector<2x8x8xf32>
    %cst_57 = arith.constant dense<0.000000e+00> : vector<2x8xf32>
    %123 = vector.multi_reduction <add>, %122, %cst_57 [2] : vector<2x8x8xf32> to vector<2x8xf32>
    %124 = vector.shape_cast %123 : vector<2x8xf32> to vector<2x8x1xf32>
    %125 = tpu.reciprocal %124 {approx = true} : vector<2x8x1xf32> -> vector<2x8x1xf32>
    %126 = vector.broadcast %125 : vector<2x8x1xf32> to vector<2x8x8xf32>
    %127 = arith.mulf %122, %126 : vector<2x8x8xf32>
    %128 = arith.truncf %127 : vector<2x8x8xf32> to vector<2x8x8xbf16>
    %129 = vector.extract_strided_slice %69 {offsets = [0, 0, 32], sizes = [2, 8, 16], strides = [1, 1, 1]} : vector<2x8x64xf32> to vector<2x8x16xf32>
    %130 = arith.truncf %129 : vector<2x8x16xf32> to vector<2x8x16xbf16>
    "tpu.trace_start"() <{level = 10 : i32, message = "bqk,bkd->bqd"}> : () -> ()
    %cst_58 = arith.constant dense<0.000000e+00> : vector<2x8x16xf32>
    %131 = tpu.matmul %128, %130, %cst_58 {dimension_numbers = #tpu.dot_dimension_numbers<[2], [1], [1], [2], [0, 0, 0, 1, 1, 2], [0], [0]>} : vector<2x8x8xbf16>, vector<2x8x16xbf16>, vector<2x8x16xf32> -> vector<2x8x16xf32>
    "tpu.trace_stop"() : () -> ()
    %132 = vector.shape_cast %131 : vector<2x8x16xf32> to vector<16x16xf32>
    %133 = vector.extract_strided_slice %65 {offsets = [0, 0, 48], sizes = [2, 8, 16], strides = [1, 1, 1]} : vector<2x8x64xf32> to vector<2x8x16xf32>
    %134 = arith.truncf %133 : vector<2x8x16xf32> to vector<2x8x16xbf16>
    %135 = vector.extract_strided_slice %67 {offsets = [0, 0, 48], sizes = [2, 8, 16], strides = [1, 1, 1]} : vector<2x8x64xf32> to vector<2x8x16xf32>
    %136 = arith.truncf %135 : vector<2x8x16xf32> to vector<2x8x16xbf16>
    "tpu.trace_start"() <{level = 10 : i32, message = "bqd,bkd->bqk"}> : () -> ()
    %cst_59 = arith.constant dense<0.000000e+00> : vector<2x8x8xf32>
    %137 = tpu.matmul %134, %136, %cst_59 {dimension_numbers = #tpu.dot_dimension_numbers<[2], [2], [1], [1], [0, 0, 0, 1, 1, 1], [0], [0]>} : vector<2x8x16xbf16>, vector<2x8x16xbf16>, vector<2x8x8xf32> -> vector<2x8x8xf32>
    "tpu.trace_stop"() : () -> ()
    %138 = arith.addf %137, %33 : vector<2x8x8xf32>
    %cst_60 = arith.constant dense<0xFF800000> : vector<2x8xf32>
    %139 = vector.multi_reduction <maximumf>, %138, %cst_60 [2] : vector<2x8x8xf32> to vector<2x8xf32>
    %140 = vector.shape_cast %139 : vector<2x8xf32> to vector<2x8x1xf32>
    %141 = vector.broadcast %140 : vector<2x8x1xf32> to vector<2x8x8xf32>
    %142 = arith.subf %138, %141 : vector<2x8x8xf32>
    %143 = math.exp %142 : vector<2x8x8xf32>
    %cst_61 = arith.constant dense<0.000000e+00> : vector<2x8xf32>
    %144 = vector.multi_reduction <add>, %143, %cst_61 [2] : vector<2x8x8xf32> to vector<2x8xf32>
    %145 = vector.shape_cast %144 : vector<2x8xf32> to vector<2x8x1xf32>
    %146 = tpu.reciprocal %145 {approx = true} : vector<2x8x1xf32> -> vector<2x8x1xf32>
    %147 = vector.broadcast %146 : vector<2x8x1xf32> to vector<2x8x8xf32>
    %148 = arith.mulf %143, %147 : vector<2x8x8xf32>
    %149 = arith.truncf %148 : vector<2x8x8xf32> to vector<2x8x8xbf16>
    %150 = vector.extract_strided_slice %69 {offsets = [0, 0, 48], sizes = [2, 8, 16], strides = [1, 1, 1]} : vector<2x8x64xf32> to vector<2x8x16xf32>
    %151 = arith.truncf %150 : vector<2x8x16xf32> to vector<2x8x16xbf16>
    "tpu.trace_start"() <{level = 10 : i32, message = "bqk,bkd->bqd"}> : () -> ()
    %cst_62 = arith.constant dense<0.000000e+00> : vector<2x8x16xf32>
    %152 = tpu.matmul %149, %151, %cst_62 {dimension_numbers = #tpu.dot_dimension_numbers<[2], [1], [1], [2], [0, 0, 0, 1, 1, 2], [0], [0]>} : vector<2x8x8xbf16>, vector<2x8x16xbf16>, vector<2x8x16xf32> -> vector<2x8x16xf32>
    "tpu.trace_stop"() : () -> ()
    %153 = vector.shape_cast %152 : vector<2x8x16xf32> to vector<16x16xf32>
    %154 = tpu.concatenate %90, %111, %132, %153 in 1 : vector<16x16xf32>, vector<16x16xf32>, vector<16x16xf32>, vector<16x16xf32> -> vector<16x64xf32>
    %155 = arith.truncf %154 : vector<16x64xf32> to vector<16x64xbf16>
    %cst_63 = arith.constant dense<0.000000e+00> : vector<16x64xf32>
    %156 = tpu.matmul %155, %37, %cst_63 {dimension_numbers = #tpu.dot_dimension_numbers<[1], [0], [0], [1], [0, 0, 1, 1], [], []>} : vector<16x64xbf16>, vector<64x64xbf16>, vector<16x64xf32> -> vector<16x64xf32>
    %157 = vector.broadcast %45 : vector<1x64xf32> to vector<16x64xf32>
    %158 = arith.addf %156, %157 : vector<16x64xf32>
    %159 = arith.addf %30, %158 : vector<16x64xf32>
    %cst_64 = arith.constant dense<0.000000e+00> : vector<16xf32>
    %160 = vector.multi_reduction <add>, %159, %cst_64 [1] : vector<16x64xf32> to vector<16xf32>
    %161 = vector.shape_cast %160 : vector<16xf32> to vector<16x1xf32>
    %cst_65 = arith.constant 6.400000e+01 : f32
    %162 = vector.broadcast %cst_65 : f32 to vector<16x1xf32>
    %163 = arith.divf %161, %162 : vector<16x1xf32>
    %164 = arith.mulf %159, %159 : vector<16x64xf32>
    %cst_66 = arith.constant dense<0.000000e+00> : vector<16xf32>
    %165 = vector.multi_reduction <add>, %164, %cst_66 [1] : vector<16x64xf32> to vector<16xf32>
    %166 = vector.shape_cast %165 : vector<16xf32> to vector<16x1xf32>
    %cst_67 = arith.constant 6.400000e+01 : f32
    %167 = vector.broadcast %cst_67 : f32 to vector<16x1xf32>
    %168 = arith.divf %166, %167 : vector<16x1xf32>
    %169 = arith.mulf %163, %163 : vector<16x1xf32>
    %170 = arith.subf %168, %169 : vector<16x1xf32>
    %cst_68 = arith.constant 9.99999974E-6 : f32
    %171 = vector.broadcast %cst_68 : f32 to vector<16x1xf32>
    %172 = arith.addf %170, %171 : vector<16x1xf32>
    %173 = math.rsqrt %172 : vector<16x1xf32>
    %174 = vector.broadcast %47 : vector<1x64xf32> to vector<16x64xf32>
    %175 = vector.broadcast %173 : vector<16x1xf32> to vector<16x64xf32>
    %176 = arith.mulf %174, %175 : vector<16x64xf32>
    %177 = arith.mulf %159, %176 : vector<16x64xf32>
    %178 = vector.broadcast %163 : vector<16x1xf32> to vector<16x64xf32>
    %179 = arith.mulf %178, %176 : vector<16x64xf32>
    %180 = vector.broadcast %49 : vector<1x64xf32> to vector<16x64xf32>
    %181 = arith.subf %180, %179 : vector<16x64xf32>
    %182 = arith.addf %177, %181 : vector<16x64xf32>
    %183 = arith.truncf %182 : vector<16x64xf32> to vector<16x64xbf16>
    %cst_69 = arith.constant dense<0.000000e+00> : vector<16x128xf32>
    %184 = tpu.matmul %183, %39, %cst_69 {dimension_numbers = #tpu.dot_dimension_numbers<[1], [0], [0], [1], [0, 0, 1, 1], [], []>} : vector<16x64xbf16>, vector<64x128xbf16>, vector<16x128xf32> -> vector<16x128xf32>
    %185 = vector.broadcast %51 : vector<1x128xf32> to vector<16x128xf32>
    %186 = arith.addf %184, %185 : vector<16x128xf32>
    %187 = arith.mulf %186, %186 : vector<16x128xf32>
    %188 = arith.mulf %186, %187 : vector<16x128xf32>
    %cst_70 = arith.constant 4.471500e-02 : f32
    %189 = vector.broadcast %cst_70 : f32 to vector<16x128xf32>
    %190 = arith.mulf %189, %188 : vector<16x128xf32>
    %191 = arith.addf %186, %190 : vector<16x128xf32>
    %cst_71 = arith.constant 0.797884583 : f32
    %192 = vector.broadcast %cst_71 : f32 to vector<16x128xf32>
    %193 = arith.mulf %192, %191 : vector<16x128xf32>
    %194 = math.tanh %193 : vector<16x128xf32>
    %cst_72 = arith.constant 1.000000e+00 : f32
    %195 = vector.broadcast %cst_72 : f32 to vector<16x128xf32>
    %196 = arith.addf %195, %194 : vector<16x128xf32>
    %cst_73 = arith.constant 5.000000e-01 : f32
    %197 = vector.broadcast %cst_73 : f32 to vector<16x128xf32>
    %198 = arith.mulf %197, %196 : vector<16x128xf32>
    %199 = arith.mulf %186, %198 : vector<16x128xf32>
    %200 = arith.truncf %199 : vector<16x128xf32> to vector<16x128xbf16>
    %cst_74 = arith.constant dense<0.000000e+00> : vector<16x64xf32>
    %201 = tpu.matmul %200, %41, %cst_74 {dimension_numbers = #tpu.dot_dimension_numbers<[1], [0], [0], [1], [0, 0, 1, 1], [], []>} : vector<16x128xbf16>, vector<128x64xbf16>, vector<16x64xf32> -> vector<16x64xf32>
    %202 = vector.broadcast %53 : vector<1x64xf32> to vector<16x64xf32>
    %203 = arith.addf %201, %202 : vector<16x64xf32>
    %204 = arith.addf %182, %203 : vector<16x64xf32>
    %cst_75 = arith.constant dense<0.000000e+00> : vector<16xf32>
    %205 = vector.multi_reduction <add>, %204, %cst_75 [1] : vector<16x64xf32> to vector<16xf32>
    %206 = vector.shape_cast %205 : vector<16xf32> to vector<16x1xf32>
    %cst_76 = arith.constant 6.400000e+01 : f32
    %207 = vector.broadcast %cst_76 : f32 to vector<16x1xf32>
    %208 = arith.divf %206, %207 : vector<16x1xf32>
    %209 = arith.mulf %204, %204 : vector<16x64xf32>
    %cst_77 = arith.constant dense<0.000000e+00> : vector<16xf32>
    %210 = vector.multi_reduction <add>, %209, %cst_77 [1] : vector<16x64xf32> to vector<16xf32>
    %211 = vector.shape_cast %210 : vector<16xf32> to vector<16x1xf32>
    %cst_78 = arith.constant 6.400000e+01 : f32
    %212 = vector.broadcast %cst_78 : f32 to vector<16x1xf32>
    %213 = arith.divf %211, %212 : vector<16x1xf32>
    %214 = arith.mulf %208, %208 : vector<16x1xf32>
    %215 = arith.subf %213, %214 : vector<16x1xf32>
    %cst_79 = arith.constant 9.99999974E-6 : f32
    %216 = vector.broadcast %cst_79 : f32 to vector<16x1xf32>
    %217 = arith.addf %215, %216 : vector<16x1xf32>
    %218 = math.rsqrt %217 : vector<16x1xf32>
    %219 = vector.broadcast %55 : vector<1x64xf32> to vector<16x64xf32>
    %220 = vector.broadcast %218 : vector<16x1xf32> to vector<16x64xf32>
    %221 = arith.mulf %219, %220 : vector<16x64xf32>
    %222 = arith.mulf %204, %221 : vector<16x64xf32>
    %223 = vector.broadcast %208 : vector<16x1xf32> to vector<16x64xf32>
    %224 = arith.mulf %223, %221 : vector<16x64xf32>
    %225 = vector.broadcast %57 : vector<1x64xf32> to vector<16x64xf32>
    %226 = arith.subf %225, %224 : vector<16x64xf32>
    %227 = arith.addf %222, %226 : vector<16x64xf32>
    %c1_80 = arith.constant 1 : index
    %c0_81 = arith.constant 0 : index
    %c0_82 = arith.constant 0 : index
    %228 = vector.load %arg2[%c1_80, %c0_81, %c0_82] : memref<2x64x640xbf16, #tpu.memory_space<vmem>>, vector<1x64x192xbf16>
    %229 = vector.shape_cast %228 : vector<1x64x192xbf16> to vector<64x192xbf16>
    %c1_83 = arith.constant 1 : index
    %c0_84 = arith.constant 0 : index
    %c256_85 = arith.constant 256 : index
    %230 = vector.load %arg2[%c1_83, %c0_84, %c256_85] : memref<2x64x640xbf16, #tpu.memory_space<vmem>>, vector<1x64x64xbf16>
    %231 = vector.shape_cast %230 : vector<1x64x64xbf16> to vector<64x64xbf16>
    %c1_86 = arith.constant 1 : index
    %c0_87 = arith.constant 0 : index
    %c384_88 = arith.constant 384 : index
    %232 = vector.load %arg2[%c1_86, %c0_87, %c384_88] : memref<2x64x640xbf16, #tpu.memory_space<vmem>>, vector<1x64x128xbf16>
    %233 = vector.shape_cast %232 : vector<1x64x128xbf16> to vector<64x128xbf16>
    %c1_89 = arith.constant 1 : index
    %c0_90 = arith.constant 0 : index
    %c0_91 = arith.constant 0 : index
    %234 = vector.load %arg3[%c1_89, %c0_90, %c0_91] : memref<2x128x64xbf16, #tpu.memory_space<vmem>>, vector<1x128x64xbf16>
    %235 = vector.shape_cast %234 : vector<1x128x64xbf16> to vector<128x64xbf16>
    %c1_92 = arith.constant 1 : index
    %c0_93 = arith.constant 0 : index
    %c0_94 = arith.constant 0 : index
    %236 = vector.load %arg4[%c1_92, %c0_93, %c0_94] : memref<3x8x192xf32, #tpu.memory_space<vmem>>, vector<1x1x192xf32>
    %237 = vector.shape_cast %236 : vector<1x1x192xf32> to vector<1x192xf32>
    %c1_95 = arith.constant 1 : index
    %c1_96 = arith.constant 1 : index
    %c0_97 = arith.constant 0 : index
    %238 = vector.load %arg4[%c1_95, %c1_96, %c0_97] : memref<3x8x192xf32, #tpu.memory_space<vmem>>, vector<1x1x64xf32>
    %239 = vector.shape_cast %238 : vector<1x1x64xf32> to vector<1x64xf32>
    %c1_98 = arith.constant 1 : index
    %c2_99 = arith.constant 2 : index
    %c0_100 = arith.constant 0 : index
    %240 = vector.load %arg4[%c1_98, %c2_99, %c0_100] : memref<3x8x192xf32, #tpu.memory_space<vmem>>, vector<1x1x64xf32>
    %241 = vector.shape_cast %240 : vector<1x1x64xf32> to vector<1x64xf32>
    %c1_101 = arith.constant 1 : index
    %c3_102 = arith.constant 3 : index
    %c0_103 = arith.constant 0 : index
    %242 = vector.load %arg4[%c1_101, %c3_102, %c0_103] : memref<3x8x192xf32, #tpu.memory_space<vmem>>, vector<1x1x64xf32>
    %243 = vector.shape_cast %242 : vector<1x1x64xf32> to vector<1x64xf32>
    %c1_104 = arith.constant 1 : index
    %c4_105 = arith.constant 4 : index
    %c0_106 = arith.constant 0 : index
    %244 = vector.load %arg4[%c1_104, %c4_105, %c0_106] : memref<3x8x192xf32, #tpu.memory_space<vmem>>, vector<1x1x128xf32>
    %245 = vector.shape_cast %244 : vector<1x1x128xf32> to vector<1x128xf32>
    %c1_107 = arith.constant 1 : index
    %c5_108 = arith.constant 5 : index
    %c0_109 = arith.constant 0 : index
    %246 = vector.load %arg4[%c1_107, %c5_108, %c0_109] : memref<3x8x192xf32, #tpu.memory_space<vmem>>, vector<1x1x64xf32>
    %247 = vector.shape_cast %246 : vector<1x1x64xf32> to vector<1x64xf32>
    %c1_110 = arith.constant 1 : index
    %c6_111 = arith.constant 6 : index
    %c0_112 = arith.constant 0 : index
    %248 = vector.load %arg4[%c1_110, %c6_111, %c0_112] : memref<3x8x192xf32, #tpu.memory_space<vmem>>, vector<1x1x64xf32>
    %249 = vector.shape_cast %248 : vector<1x1x64xf32> to vector<1x64xf32>
    %c1_113 = arith.constant 1 : index
    %c7_114 = arith.constant 7 : index
    %c0_115 = arith.constant 0 : index
    %250 = vector.load %arg4[%c1_113, %c7_114, %c0_115] : memref<3x8x192xf32, #tpu.memory_space<vmem>>, vector<1x1x64xf32>
    %251 = vector.shape_cast %250 : vector<1x1x64xf32> to vector<1x64xf32>
    %252 = arith.truncf %227 : vector<16x64xf32> to vector<16x64xbf16>
    %cst_116 = arith.constant dense<0.000000e+00> : vector<16x192xf32>
    %253 = tpu.matmul %252, %229, %cst_116 {dimension_numbers = #tpu.dot_dimension_numbers<[1], [0], [0], [1], [0, 0, 1, 1], [], []>} : vector<16x64xbf16>, vector<64x192xbf16>, vector<16x192xf32> -> vector<16x192xf32>
    %254 = vector.broadcast %237 : vector<1x192xf32> to vector<16x192xf32>
    %255 = arith.addf %253, %254 : vector<16x192xf32>
    %256 = vector.extract_strided_slice %255 {offsets = [0, 0], sizes = [16, 64], strides = [1, 1]} : vector<16x192xf32> to vector<16x64xf32>
    %cst_117 = arith.constant 2.500000e-01 : f32
    %257 = vector.broadcast %cst_117 : f32 to vector<16x64xf32>
    %258 = arith.mulf %256, %257 : vector<16x64xf32>
    %259 = vector.shape_cast %258 : vector<16x64xf32> to vector<2x8x64xf32>
    %260 = vector.extract_strided_slice %255 {offsets = [0, 64], sizes = [16, 64], strides = [1, 1]} : vector<16x192xf32> to vector<16x64xf32>
    %261 = vector.shape_cast %260 : vector<16x64xf32> to vector<2x8x64xf32>
    %262 = vector.extract_strided_slice %255 {offsets = [0, 128], sizes = [16, 64], strides = [1, 1]} : vector<16x192xf32> to vector<16x64xf32>
    %263 = vector.shape_cast %262 : vector<16x64xf32> to vector<2x8x64xf32>
    %264 = vector.extract_strided_slice %259 {offsets = [0, 0, 0], sizes = [2, 8, 16], strides = [1, 1, 1]} : vector<2x8x64xf32> to vector<2x8x16xf32>
    %265 = arith.truncf %264 : vector<2x8x16xf32> to vector<2x8x16xbf16>
    %266 = vector.extract_strided_slice %261 {offsets = [0, 0, 0], sizes = [2, 8, 16], strides = [1, 1, 1]} : vector<2x8x64xf32> to vector<2x8x16xf32>
    %267 = arith.truncf %266 : vector<2x8x16xf32> to vector<2x8x16xbf16>
    "tpu.trace_start"() <{level = 10 : i32, message = "bqd,bkd->bqk"}> : () -> ()
    %cst_118 = arith.constant dense<0.000000e+00> : vector<2x8x8xf32>
    %268 = tpu.matmul %265, %267, %cst_118 {dimension_numbers = #tpu.dot_dimension_numbers<[2], [2], [1], [1], [0, 0, 0, 1, 1, 1], [0], [0]>} : vector<2x8x16xbf16>, vector<2x8x16xbf16>, vector<2x8x8xf32> -> vector<2x8x8xf32>
    "tpu.trace_stop"() : () -> ()
    %269 = arith.addf %268, %33 : vector<2x8x8xf32>
    %cst_119 = arith.constant dense<0xFF800000> : vector<2x8xf32>
    %270 = vector.multi_reduction <maximumf>, %269, %cst_119 [2] : vector<2x8x8xf32> to vector<2x8xf32>
    %271 = vector.shape_cast %270 : vector<2x8xf32> to vector<2x8x1xf32>
    %272 = vector.broadcast %271 : vector<2x8x1xf32> to vector<2x8x8xf32>
    %273 = arith.subf %269, %272 : vector<2x8x8xf32>
    %274 = math.exp %273 : vector<2x8x8xf32>
    %cst_120 = arith.constant dense<0.000000e+00> : vector<2x8xf32>
    %275 = vector.multi_reduction <add>, %274, %cst_120 [2] : vector<2x8x8xf32> to vector<2x8xf32>
    %276 = vector.shape_cast %275 : vector<2x8xf32> to vector<2x8x1xf32>
    %277 = tpu.reciprocal %276 {approx = true} : vector<2x8x1xf32> -> vector<2x8x1xf32>
    %278 = vector.broadcast %277 : vector<2x8x1xf32> to vector<2x8x8xf32>
    %279 = arith.mulf %274, %278 : vector<2x8x8xf32>
    %280 = arith.truncf %279 : vector<2x8x8xf32> to vector<2x8x8xbf16>
    %281 = vector.extract_strided_slice %263 {offsets = [0, 0, 0], sizes = [2, 8, 16], strides = [1, 1, 1]} : vector<2x8x64xf32> to vector<2x8x16xf32>
    %282 = arith.truncf %281 : vector<2x8x16xf32> to vector<2x8x16xbf16>
    "tpu.trace_start"() <{level = 10 : i32, message = "bqk,bkd->bqd"}> : () -> ()
    %cst_121 = arith.constant dense<0.000000e+00> : vector<2x8x16xf32>
    %283 = tpu.matmul %280, %282, %cst_121 {dimension_numbers = #tpu.dot_dimension_numbers<[2], [1], [1], [2], [0, 0, 0, 1, 1, 2], [0], [0]>} : vector<2x8x8xbf16>, vector<2x8x16xbf16>, vector<2x8x16xf32> -> vector<2x8x16xf32>
    "tpu.trace_stop"() : () -> ()
    %284 = vector.shape_cast %283 : vector<2x8x16xf32> to vector<16x16xf32>
    %285 = vector.extract_strided_slice %259 {offsets = [0, 0, 16], sizes = [2, 8, 16], strides = [1, 1, 1]} : vector<2x8x64xf32> to vector<2x8x16xf32>
    %286 = arith.truncf %285 : vector<2x8x16xf32> to vector<2x8x16xbf16>
    %287 = vector.extract_strided_slice %261 {offsets = [0, 0, 16], sizes = [2, 8, 16], strides = [1, 1, 1]} : vector<2x8x64xf32> to vector<2x8x16xf32>
    %288 = arith.truncf %287 : vector<2x8x16xf32> to vector<2x8x16xbf16>
    "tpu.trace_start"() <{level = 10 : i32, message = "bqd,bkd->bqk"}> : () -> ()
    %cst_122 = arith.constant dense<0.000000e+00> : vector<2x8x8xf32>
    %289 = tpu.matmul %286, %288, %cst_122 {dimension_numbers = #tpu.dot_dimension_numbers<[2], [2], [1], [1], [0, 0, 0, 1, 1, 1], [0], [0]>} : vector<2x8x16xbf16>, vector<2x8x16xbf16>, vector<2x8x8xf32> -> vector<2x8x8xf32>
    "tpu.trace_stop"() : () -> ()
    %290 = arith.addf %289, %33 : vector<2x8x8xf32>
    %cst_123 = arith.constant dense<0xFF800000> : vector<2x8xf32>
    %291 = vector.multi_reduction <maximumf>, %290, %cst_123 [2] : vector<2x8x8xf32> to vector<2x8xf32>
    %292 = vector.shape_cast %291 : vector<2x8xf32> to vector<2x8x1xf32>
    %293 = vector.broadcast %292 : vector<2x8x1xf32> to vector<2x8x8xf32>
    %294 = arith.subf %290, %293 : vector<2x8x8xf32>
    %295 = math.exp %294 : vector<2x8x8xf32>
    %cst_124 = arith.constant dense<0.000000e+00> : vector<2x8xf32>
    %296 = vector.multi_reduction <add>, %295, %cst_124 [2] : vector<2x8x8xf32> to vector<2x8xf32>
    %297 = vector.shape_cast %296 : vector<2x8xf32> to vector<2x8x1xf32>
    %298 = tpu.reciprocal %297 {approx = true} : vector<2x8x1xf32> -> vector<2x8x1xf32>
    %299 = vector.broadcast %298 : vector<2x8x1xf32> to vector<2x8x8xf32>
    %300 = arith.mulf %295, %299 : vector<2x8x8xf32>
    %301 = arith.truncf %300 : vector<2x8x8xf32> to vector<2x8x8xbf16>
    %302 = vector.extract_strided_slice %263 {offsets = [0, 0, 16], sizes = [2, 8, 16], strides = [1, 1, 1]} : vector<2x8x64xf32> to vector<2x8x16xf32>
    %303 = arith.truncf %302 : vector<2x8x16xf32> to vector<2x8x16xbf16>
    "tpu.trace_start"() <{level = 10 : i32, message = "bqk,bkd->bqd"}> : () -> ()
    %cst_125 = arith.constant dense<0.000000e+00> : vector<2x8x16xf32>
    %304 = tpu.matmul %301, %303, %cst_125 {dimension_numbers = #tpu.dot_dimension_numbers<[2], [1], [1], [2], [0, 0, 0, 1, 1, 2], [0], [0]>} : vector<2x8x8xbf16>, vector<2x8x16xbf16>, vector<2x8x16xf32> -> vector<2x8x16xf32>
    "tpu.trace_stop"() : () -> ()
    %305 = vector.shape_cast %304 : vector<2x8x16xf32> to vector<16x16xf32>
    %306 = vector.extract_strided_slice %259 {offsets = [0, 0, 32], sizes = [2, 8, 16], strides = [1, 1, 1]} : vector<2x8x64xf32> to vector<2x8x16xf32>
    %307 = arith.truncf %306 : vector<2x8x16xf32> to vector<2x8x16xbf16>
    %308 = vector.extract_strided_slice %261 {offsets = [0, 0, 32], sizes = [2, 8, 16], strides = [1, 1, 1]} : vector<2x8x64xf32> to vector<2x8x16xf32>
    %309 = arith.truncf %308 : vector<2x8x16xf32> to vector<2x8x16xbf16>
    "tpu.trace_start"() <{level = 10 : i32, message = "bqd,bkd->bqk"}> : () -> ()
    %cst_126 = arith.constant dense<0.000000e+00> : vector<2x8x8xf32>
    %310 = tpu.matmul %307, %309, %cst_126 {dimension_numbers = #tpu.dot_dimension_numbers<[2], [2], [1], [1], [0, 0, 0, 1, 1, 1], [0], [0]>} : vector<2x8x16xbf16>, vector<2x8x16xbf16>, vector<2x8x8xf32> -> vector<2x8x8xf32>
    "tpu.trace_stop"() : () -> ()
    %311 = arith.addf %310, %33 : vector<2x8x8xf32>
    %cst_127 = arith.constant dense<0xFF800000> : vector<2x8xf32>
    %312 = vector.multi_reduction <maximumf>, %311, %cst_127 [2] : vector<2x8x8xf32> to vector<2x8xf32>
    %313 = vector.shape_cast %312 : vector<2x8xf32> to vector<2x8x1xf32>
    %314 = vector.broadcast %313 : vector<2x8x1xf32> to vector<2x8x8xf32>
    %315 = arith.subf %311, %314 : vector<2x8x8xf32>
    %316 = math.exp %315 : vector<2x8x8xf32>
    %cst_128 = arith.constant dense<0.000000e+00> : vector<2x8xf32>
    %317 = vector.multi_reduction <add>, %316, %cst_128 [2] : vector<2x8x8xf32> to vector<2x8xf32>
    %318 = vector.shape_cast %317 : vector<2x8xf32> to vector<2x8x1xf32>
    %319 = tpu.reciprocal %318 {approx = true} : vector<2x8x1xf32> -> vector<2x8x1xf32>
    %320 = vector.broadcast %319 : vector<2x8x1xf32> to vector<2x8x8xf32>
    %321 = arith.mulf %316, %320 : vector<2x8x8xf32>
    %322 = arith.truncf %321 : vector<2x8x8xf32> to vector<2x8x8xbf16>
    %323 = vector.extract_strided_slice %263 {offsets = [0, 0, 32], sizes = [2, 8, 16], strides = [1, 1, 1]} : vector<2x8x64xf32> to vector<2x8x16xf32>
    %324 = arith.truncf %323 : vector<2x8x16xf32> to vector<2x8x16xbf16>
    "tpu.trace_start"() <{level = 10 : i32, message = "bqk,bkd->bqd"}> : () -> ()
    %cst_129 = arith.constant dense<0.000000e+00> : vector<2x8x16xf32>
    %325 = tpu.matmul %322, %324, %cst_129 {dimension_numbers = #tpu.dot_dimension_numbers<[2], [1], [1], [2], [0, 0, 0, 1, 1, 2], [0], [0]>} : vector<2x8x8xbf16>, vector<2x8x16xbf16>, vector<2x8x16xf32> -> vector<2x8x16xf32>
    "tpu.trace_stop"() : () -> ()
    %326 = vector.shape_cast %325 : vector<2x8x16xf32> to vector<16x16xf32>
    %327 = vector.extract_strided_slice %259 {offsets = [0, 0, 48], sizes = [2, 8, 16], strides = [1, 1, 1]} : vector<2x8x64xf32> to vector<2x8x16xf32>
    %328 = arith.truncf %327 : vector<2x8x16xf32> to vector<2x8x16xbf16>
    %329 = vector.extract_strided_slice %261 {offsets = [0, 0, 48], sizes = [2, 8, 16], strides = [1, 1, 1]} : vector<2x8x64xf32> to vector<2x8x16xf32>
    %330 = arith.truncf %329 : vector<2x8x16xf32> to vector<2x8x16xbf16>
    "tpu.trace_start"() <{level = 10 : i32, message = "bqd,bkd->bqk"}> : () -> ()
    %cst_130 = arith.constant dense<0.000000e+00> : vector<2x8x8xf32>
    %331 = tpu.matmul %328, %330, %cst_130 {dimension_numbers = #tpu.dot_dimension_numbers<[2], [2], [1], [1], [0, 0, 0, 1, 1, 1], [0], [0]>} : vector<2x8x16xbf16>, vector<2x8x16xbf16>, vector<2x8x8xf32> -> vector<2x8x8xf32>
    "tpu.trace_stop"() : () -> ()
    %332 = arith.addf %331, %33 : vector<2x8x8xf32>
    %cst_131 = arith.constant dense<0xFF800000> : vector<2x8xf32>
    %333 = vector.multi_reduction <maximumf>, %332, %cst_131 [2] : vector<2x8x8xf32> to vector<2x8xf32>
    %334 = vector.shape_cast %333 : vector<2x8xf32> to vector<2x8x1xf32>
    %335 = vector.broadcast %334 : vector<2x8x1xf32> to vector<2x8x8xf32>
    %336 = arith.subf %332, %335 : vector<2x8x8xf32>
    %337 = math.exp %336 : vector<2x8x8xf32>
    %cst_132 = arith.constant dense<0.000000e+00> : vector<2x8xf32>
    %338 = vector.multi_reduction <add>, %337, %cst_132 [2] : vector<2x8x8xf32> to vector<2x8xf32>
    %339 = vector.shape_cast %338 : vector<2x8xf32> to vector<2x8x1xf32>
    %340 = tpu.reciprocal %339 {approx = true} : vector<2x8x1xf32> -> vector<2x8x1xf32>
    %341 = vector.broadcast %340 : vector<2x8x1xf32> to vector<2x8x8xf32>
    %342 = arith.mulf %337, %341 : vector<2x8x8xf32>
    %343 = arith.truncf %342 : vector<2x8x8xf32> to vector<2x8x8xbf16>
    %344 = vector.extract_strided_slice %263 {offsets = [0, 0, 48], sizes = [2, 8, 16], strides = [1, 1, 1]} : vector<2x8x64xf32> to vector<2x8x16xf32>
    %345 = arith.truncf %344 : vector<2x8x16xf32> to vector<2x8x16xbf16>
    "tpu.trace_start"() <{level = 10 : i32, message = "bqk,bkd->bqd"}> : () -> ()
    %cst_133 = arith.constant dense<0.000000e+00> : vector<2x8x16xf32>
    %346 = tpu.matmul %343, %345, %cst_133 {dimension_numbers = #tpu.dot_dimension_numbers<[2], [1], [1], [2], [0, 0, 0, 1, 1, 2], [0], [0]>} : vector<2x8x8xbf16>, vector<2x8x16xbf16>, vector<2x8x16xf32> -> vector<2x8x16xf32>
    "tpu.trace_stop"() : () -> ()
    %347 = vector.shape_cast %346 : vector<2x8x16xf32> to vector<16x16xf32>
    %348 = tpu.concatenate %284, %305, %326, %347 in 1 : vector<16x16xf32>, vector<16x16xf32>, vector<16x16xf32>, vector<16x16xf32> -> vector<16x64xf32>
    %349 = arith.truncf %348 : vector<16x64xf32> to vector<16x64xbf16>
    %cst_134 = arith.constant dense<0.000000e+00> : vector<16x64xf32>
    %350 = tpu.matmul %349, %231, %cst_134 {dimension_numbers = #tpu.dot_dimension_numbers<[1], [0], [0], [1], [0, 0, 1, 1], [], []>} : vector<16x64xbf16>, vector<64x64xbf16>, vector<16x64xf32> -> vector<16x64xf32>
    %351 = vector.broadcast %239 : vector<1x64xf32> to vector<16x64xf32>
    %352 = arith.addf %350, %351 : vector<16x64xf32>
    %353 = arith.addf %227, %352 : vector<16x64xf32>
    %cst_135 = arith.constant dense<0.000000e+00> : vector<16xf32>
    %354 = vector.multi_reduction <add>, %353, %cst_135 [1] : vector<16x64xf32> to vector<16xf32>
    %355 = vector.shape_cast %354 : vector<16xf32> to vector<16x1xf32>
    %cst_136 = arith.constant 6.400000e+01 : f32
    %356 = vector.broadcast %cst_136 : f32 to vector<16x1xf32>
    %357 = arith.divf %355, %356 : vector<16x1xf32>
    %358 = arith.mulf %353, %353 : vector<16x64xf32>
    %cst_137 = arith.constant dense<0.000000e+00> : vector<16xf32>
    %359 = vector.multi_reduction <add>, %358, %cst_137 [1] : vector<16x64xf32> to vector<16xf32>
    %360 = vector.shape_cast %359 : vector<16xf32> to vector<16x1xf32>
    %cst_138 = arith.constant 6.400000e+01 : f32
    %361 = vector.broadcast %cst_138 : f32 to vector<16x1xf32>
    %362 = arith.divf %360, %361 : vector<16x1xf32>
    %363 = arith.mulf %357, %357 : vector<16x1xf32>
    %364 = arith.subf %362, %363 : vector<16x1xf32>
    %cst_139 = arith.constant 9.99999974E-6 : f32
    %365 = vector.broadcast %cst_139 : f32 to vector<16x1xf32>
    %366 = arith.addf %364, %365 : vector<16x1xf32>
    %367 = math.rsqrt %366 : vector<16x1xf32>
    %368 = vector.broadcast %241 : vector<1x64xf32> to vector<16x64xf32>
    %369 = vector.broadcast %367 : vector<16x1xf32> to vector<16x64xf32>
    %370 = arith.mulf %368, %369 : vector<16x64xf32>
    %371 = arith.mulf %353, %370 : vector<16x64xf32>
    %372 = vector.broadcast %357 : vector<16x1xf32> to vector<16x64xf32>
    %373 = arith.mulf %372, %370 : vector<16x64xf32>
    %374 = vector.broadcast %243 : vector<1x64xf32> to vector<16x64xf32>
    %375 = arith.subf %374, %373 : vector<16x64xf32>
    %376 = arith.addf %371, %375 : vector<16x64xf32>
    %377 = arith.truncf %376 : vector<16x64xf32> to vector<16x64xbf16>
    %cst_140 = arith.constant dense<0.000000e+00> : vector<16x128xf32>
    %378 = tpu.matmul %377, %233, %cst_140 {dimension_numbers = #tpu.dot_dimension_numbers<[1], [0], [0], [1], [0, 0, 1, 1], [], []>} : vector<16x64xbf16>, vector<64x128xbf16>, vector<16x128xf32> -> vector<16x128xf32>
    %379 = vector.broadcast %245 : vector<1x128xf32> to vector<16x128xf32>
    %380 = arith.addf %378, %379 : vector<16x128xf32>
    %381 = arith.mulf %380, %380 : vector<16x128xf32>
    %382 = arith.mulf %380, %381 : vector<16x128xf32>
    %cst_141 = arith.constant 4.471500e-02 : f32
    %383 = vector.broadcast %cst_141 : f32 to vector<16x128xf32>
    %384 = arith.mulf %383, %382 : vector<16x128xf32>
    %385 = arith.addf %380, %384 : vector<16x128xf32>
    %cst_142 = arith.constant 0.797884583 : f32
    %386 = vector.broadcast %cst_142 : f32 to vector<16x128xf32>
    %387 = arith.mulf %386, %385 : vector<16x128xf32>
    %388 = math.tanh %387 : vector<16x128xf32>
    %cst_143 = arith.constant 1.000000e+00 : f32
    %389 = vector.broadcast %cst_143 : f32 to vector<16x128xf32>
    %390 = arith.addf %389, %388 : vector<16x128xf32>
    %cst_144 = arith.constant 5.000000e-01 : f32
    %391 = vector.broadcast %cst_144 : f32 to vector<16x128xf32>
    %392 = arith.mulf %391, %390 : vector<16x128xf32>
    %393 = arith.mulf %380, %392 : vector<16x128xf32>
    %394 = arith.truncf %393 : vector<16x128xf32> to vector<16x128xbf16>
    %cst_145 = arith.constant dense<0.000000e+00> : vector<16x64xf32>
    %395 = tpu.matmul %394, %235, %cst_145 {dimension_numbers = #tpu.dot_dimension_numbers<[1], [0], [0], [1], [0, 0, 1, 1], [], []>} : vector<16x128xbf16>, vector<128x64xbf16>, vector<16x64xf32> -> vector<16x64xf32>
    %396 = vector.broadcast %247 : vector<1x64xf32> to vector<16x64xf32>
    %397 = arith.addf %395, %396 : vector<16x64xf32>
    %398 = arith.addf %376, %397 : vector<16x64xf32>
    %cst_146 = arith.constant dense<0.000000e+00> : vector<16xf32>
    %399 = vector.multi_reduction <add>, %398, %cst_146 [1] : vector<16x64xf32> to vector<16xf32>
    %400 = vector.shape_cast %399 : vector<16xf32> to vector<16x1xf32>
    %cst_147 = arith.constant 6.400000e+01 : f32
    %401 = vector.broadcast %cst_147 : f32 to vector<16x1xf32>
    %402 = arith.divf %400, %401 : vector<16x1xf32>
    %403 = arith.mulf %398, %398 : vector<16x64xf32>
    %cst_148 = arith.constant dense<0.000000e+00> : vector<16xf32>
    %404 = vector.multi_reduction <add>, %403, %cst_148 [1] : vector<16x64xf32> to vector<16xf32>
    %405 = vector.shape_cast %404 : vector<16xf32> to vector<16x1xf32>
    %cst_149 = arith.constant 6.400000e+01 : f32
    %406 = vector.broadcast %cst_149 : f32 to vector<16x1xf32>
    %407 = arith.divf %405, %406 : vector<16x1xf32>
    %408 = arith.mulf %402, %402 : vector<16x1xf32>
    %409 = arith.subf %407, %408 : vector<16x1xf32>
    %cst_150 = arith.constant 9.99999974E-6 : f32
    %410 = vector.broadcast %cst_150 : f32 to vector<16x1xf32>
    %411 = arith.addf %409, %410 : vector<16x1xf32>
    %412 = math.rsqrt %411 : vector<16x1xf32>
    %413 = vector.broadcast %249 : vector<1x64xf32> to vector<16x64xf32>
    %414 = vector.broadcast %412 : vector<16x1xf32> to vector<16x64xf32>
    %415 = arith.mulf %413, %414 : vector<16x64xf32>
    %416 = arith.mulf %398, %415 : vector<16x64xf32>
    %417 = vector.broadcast %402 : vector<16x1xf32> to vector<16x64xf32>
    %418 = arith.mulf %417, %415 : vector<16x64xf32>
    %419 = vector.broadcast %251 : vector<1x64xf32> to vector<16x64xf32>
    %420 = arith.subf %419, %418 : vector<16x64xf32>
    %421 = arith.addf %416, %420 : vector<16x64xf32>
    %422 = vector.extract_strided_slice %421 {offsets = [0, 0], sizes = [1, 64], strides = [1, 1]} : vector<16x64xf32> to vector<1x64xf32>
    %423 = vector.extract_strided_slice %421 {offsets = [8, 0], sizes = [1, 64], strides = [1, 1]} : vector<16x64xf32> to vector<1x64xf32>
    %424 = tpu.concatenate %422, %423 in 0 : vector<1x64xf32>, vector<1x64xf32> -> vector<2x64xf32>
    %c0_151 = arith.constant 0 : index
    %c0_152 = arith.constant 0 : index
    %c512 = arith.constant 512 : index
    %425 = vector.load %arg2[%c0_151, %c0_152, %c512] : memref<2x64x640xbf16, #tpu.memory_space<vmem>>, vector<1x64x128xbf16>
    %426 = vector.shape_cast %425 : vector<1x64x128xbf16> to vector<64x128xbf16>
    %427 = arith.truncf %424 : vector<2x64xf32> to vector<2x64xbf16>
    %cst_153 = arith.constant dense<0.000000e+00> : vector<2x128xf32>
    %428 = tpu.matmul %427, %426, %cst_153 {dimension_numbers = #tpu.dot_dimension_numbers<[1], [0], [0], [1], [0, 0, 1, 1], [], []>} : vector<2x64xbf16>, vector<64x128xbf16>, vector<2x128xf32> -> vector<2x128xf32>
    %429 = vector.broadcast %5 : vector<1x128xf32> to vector<2x128xf32>
    %430 = arith.addf %428, %429 : vector<2x128xf32>
    %c0_154 = arith.constant 0 : index
    %c0_155 = arith.constant 0 : index
    %431 = vector.load %arg5[%c0_154, %c0_155] : memref<2x128xf32, #tpu.memory_space<vmem>>, vector<2x128xf32>
    tpu.vector_store %arg5[%c0_154, %c0_155], %430 {strides = array<i32>} : memref<2x128xf32, #tpu.memory_space<vmem>>, vector<2x128xf32>,
    return
  }
}

</mosaic_0001>

<llo_original>
// kernel: rumour_cls_forward.1
$region0: #{rumour_cls_forward.1}
  #allocation0 [shape = 'u32[]', space=smem, size = 0x4, offset = 0x4, fixed_abs, tag = 'smem constant byte address 0x4 - core index']
  #allocation1 [shape = 'u32[144,128]{1,0:T(1,128)}', space=vmem, size = 0x12000, scoped, tag = 'internal scratch']
  %s0 = inlined_call_operand.vmem [shape: f32[2,8,64], index: 0, kind: input, shape index: {}]
  %s1 = inlined_call_operand.vmem [shape: f32[2,1,8], index: 1, kind: input, shape index: {}]
  %s2 = inlined_call_operand.vmem [shape: bf16[2,64,640], index: 2, kind: input, shape index: {}]
  %s3 = inlined_call_operand.vmem [shape: bf16[2,128,64], index: 3, kind: input, shape index: {}]
  %s4 = inlined_call_operand.vmem [shape: f32[3,8,192], index: 4, kind: input, shape index: {}]
  %s5 = inlined_call_operand.hbm [shape: f32[2,128], index: 5, kind: output, shape index: {}]
  %s6 = sld [smem:[#allocation0]]
  $region30: #{rumour_cls_forward.1} parent=0
    _
  %s8 = ssub.s32 1, %s6
  %s9 = scalar_select 0, %s8, %s6
  $region1: #{rumour_cls_forward.1} parent=0
    #allocation2 [shape = 'u8[1024]{0}', space=vmem, size = 0x400, scoped, tag = 'output window, operand 0, single buffered']
    #allocation3 [shape = 's32[1]{0}', space=sflag, size = 0x4, scoped, tag = 'scoped memory for rumour_cls_forward.1']
    %10 = vsyncpa [#allocation3], 0
    // Predicated region
    $region2: #{rumour_cls_forward.1} parent=1 // pred_check
      _
    $region3: #{rumour_cls_forward.1} parent=1 // pred_check_branch
      %12 = sbr.rel (0) target = $region5
    $region4: #{rumour_cls_forward.1} parent=1 // pred_region
      _
    $region5: #{rumour_cls_forward.1} parent=1 // pred_fallthru
      _
    // Predicated region
    $region6: #{rumour_cls_forward.1} parent=1 // pred_check
      _
    $region7: #{rumour_cls_forward.1} parent=1 // pred_check_branch
      %14 = sbr.rel (0) target = $region9
    $region8: #{rumour_cls_forward.1} parent=1 // pred_region
      _
    $region9: #{rumour_cls_forward.1} parent=1 // pred_fallthru
      _
    // Predicated region
    $region10: #{rumour_cls_forward.1} parent=1 // pred_check
      _
    $region11: #{rumour_cls_forward.1} parent=1 // pred_check_branch
      %16 = sbr.rel (0) target = $region13
    $region12: #{rumour_cls_forward.1} parent=1 // pred_region
      _
    $region13: #{rumour_cls_forward.1} parent=1 // pred_fallthru
      _
    // Predicated region
    $region14: #{rumour_cls_forward.1} parent=1 // pred_check
      _
    $region15: #{rumour_cls_forward.1} parent=1 // pred_check_branch
      %18 = sbr.rel (0) target = $region17
    $region16: #{rumour_cls_forward.1} parent=1 // pred_region
      _
    $region17: #{rumour_cls_forward.1} parent=1 // pred_fallthru
      _
    // Predicated region
    $region18: #{rumour_cls_forward.1} parent=1 // pred_check
      _
    $region19: #{rumour_cls_forward.1} parent=1 // pred_check_branch
      %20 = sbr.rel (0) target = $region21
    $region20: #{rumour_cls_forward.1} parent=1 // pred_region
      _
    $region21: #{rumour_cls_forward.1} parent=1 // pred_fallthru
      _
    %s22 = scalar_lea.vmem %s4, 32
    %v23 = vld [vmem:[%s22] ss:$0 sm:$0xff]
    %v24 = vld [vmem:[%s22 + $0x1] ss:$0 sm:$0xff]
    %v25 = vld [vmem:[%s22 + $0x2] ss:$0 sm:$0xff]
    %v26 = vld [vmem:[%s0] sm:$0xff]
    %v27 = vld [vmem:[%s0 + $0x8] sm:$0xff]
    %vm28 = vcmask 523264
    %v29 = vsel %vm28, %v26, 0.0
    %30 = vadd.xlane.f32.xlu0 %v29
    %v31 = vpop.xlane.xlu0 %30
    %v32 = vsel %vm28, %v27, 0.0
    %33 = vadd.xlane.f32.xlu0 %v32
    %v34 = vpop.xlane.xlu0 %33
    %v35 = vrcp.pop 64.0
    %v36 = vmul.f32 %v31, %v35
    %v37 = vmul.f32 %v34, %v35
    %v38 = vmul.f32 %v26, %v26
    %v39 = vmul.f32 %v27, %v27
    %v40 = vsel %vm28, %v38, 0.0
    %41 = vadd.xlane.f32.xlu0 %v40
    %v42 = vpop.xlane.xlu0 %41
    %v43 = vsel %vm28, %v39, 0.0
    %44 = vadd.xlane.f32.xlu0 %v43
    %v45 = vpop.xlane.xlu0 %44
    %v46 = vmul.f32 %v42, %v35
    %v47 = vmul.f32 %v45, %v35
    %v48 = vmul.f32 %v36, %v36
    %v49 = vmul.f32 %v37, %v37
    %v50 = vsub.f32 %v46, %v48
    %v51 = vsub.f32 %v47, %v49
    %v52 = vadd.f32 %v50, 1e-05
    %v53 = vadd.f32 %v51, 1e-05
    %v54 = vrsqrt.pop %v52
    %v55 = vrsqrt.pop %v53
    %v56 = vmul.f32 %v23, %v54
    %v57 = vmul.f32 %v23, %v55
    %v58 = vmul.f32 %v26, %v56
    %v59 = vmul.f32 %v27, %v57
    %v60 = vmul.f32 %v36, %v56
    %v61 = vmul.f32 %v37, %v57
    %v62 = vsub.f32 %v24, %v60
    %v63 = vsub.f32 %v24, %v61
    %v64 = vadd.f32 %v58, %v62
    %v65 = vadd.f32 %v59, %v63
    %v66 = vld [vmem:[%s1] sm:$0x1]
    %v67 = vld [vmem:[%s1 + $0x1] sm:$0x1]
    %v70 = vlaneseq
    %v71 = vshrl.u32 %v70, 7
    %v72 = vsub.s32 0, %v71
    %v73 = vrot.slane %v66, %v72
    %v74 = vlaneseq
    %v75 = vshrl.u32 %v74, 7
    %v76 = vsub.s32 0, %v75
    %v77 = vrot.slane %v67, %v76
    %v80 = vld [vmem:[%s2] sm:$0xff]
    %v81 = vld [vmem:[%s2 + $0x14] sm:$0xff]
    %v82 = vld [vmem:[%s2 + $0x28] sm:$0xff]
    %v83 = vld [vmem:[%s2 + $0x3c] sm:$0xff]
    %v84 = vld [vmem:[%s2 + $0x50] sm:$0xff]
    %v85 = vld [vmem:[%s2 + $0x64] sm:$0xff]
    %v86 = vld [vmem:[%s2 + $0x78] sm:$0xff]
    %v87 = vld [vmem:[%s2 + $0x8c] sm:$0xff]
    %v88 = vld [vmem:[%s2 + $0x8] sm:$0xf]
    %v89 = vld [vmem:[%s2 + $0x1c] sm:$0xf]
    %v90 = vld [vmem:[%s2 + $0x30] sm:$0xf]
    %v91 = vld [vmem:[%s2 + $0x44] sm:$0xf]
    %v92 = vld [vmem:[%s2 + $0x58] sm:$0xf]
    %v93 = vld [vmem:[%s2 + $0x6c] sm:$0xf]
    %v94 = vld [vmem:[%s2 + $0x80] sm:$0xf]
    %v95 = vld [vmem:[%s2 + $0x94] sm:$0xf]
    %v96 = vld [vmem:[%s2 + $0xc] sm:$0xf]
    %v97 = vld [vmem:[%s2 + $0x20] sm:$0xf]
    %v98 = vld [vmem:[%s2 + $0x34] sm:$0xf]
    %v99 = vld [vmem:[%s2 + $0x48] sm:$0xf]
    %v100 = vld [vmem:[%s2 + $0x5c] sm:$0xf]
    %v101 = vld [vmem:[%s2 + $0x70] sm:$0xf]
    %v102 = vld [vmem:[%s2 + $0x84] sm:$0xf]
    %v103 = vld [vmem:[%s2 + $0x98] sm:$0xf]
    %v104 = vld [vmem:[%s3] sm:$0xf]
    %v105 = vld [vmem:[%s3 + $0x4] sm:$0xf]
    %v106 = vld [vmem:[%s3 + $0x8] sm:$0xf]
    %v107 = vld [vmem:[%s3 + $0xc] sm:$0xf]
    %v108 = vld [vmem:[%s3 + $0x10] sm:$0xf]
    %v109 = vld [vmem:[%s3 + $0x14] sm:$0xf]
    %v110 = vld [vmem:[%s3 + $0x18] sm:$0xf]
    %v111 = vld [vmem:[%s3 + $0x1c] sm:$0xf]
    %v112 = vld [vmem:[%s3 + $0x20] sm:$0xf]
    %v113 = vld [vmem:[%s3 + $0x24] sm:$0xf]
    %v114 = vld [vmem:[%s3 + $0x28] sm:$0xf]
    %v115 = vld [vmem:[%s3 + $0x2c] sm:$0xf]
    %v116 = vld [vmem:[%s3 + $0x30] sm:$0xf]
    %v117 = vld [vmem:[%s3 + $0x34] sm:$0xf]
    %v118 = vld [vmem:[%s3 + $0x38] sm:$0xf]
    %v119 = vld [vmem:[%s3 + $0x3c] sm:$0xf]
    %v120 = vld [vmem:[%s4] ss:$8 sm:$0x3]
    %v121 = vld [vmem:[%s4 + $0x1] ss:$0 sm:$0xff]
    %v122 = vld [vmem:[%s4 + $0x2] ss:$0 sm:$0xff]
    %v123 = vld [vmem:[%s4 + $0x3] ss:$0 sm:$0xff]
    %v124 = vld [vmem:[%s4 + $0x4] ss:$0 sm:$0xff]
    %v125 = vld [vmem:[%s4 + $0x5] ss:$0 sm:$0xff]
    %v126 = vld [vmem:[%s4 + $0x6] ss:$0 sm:$0xff]
    %v127 = vld [vmem:[%s4 + $0x7] ss:$0 sm:$0xff]
    %v128 = vpack.c.bf16 %v65, %v64
    %v130 = vlaneseq
    %v131 = vshrl.u32 %v130, 7
    %v132 = vsub.s32 0, %v131
    %v133 = vrot.slane %v120, %v132
    %v134 = vlaneseq
    %v135 = vshrl.u32 %v134, 7
    %v136 = vsub.s32 1, %v135
    %v137 = vrot.slane %v120, %v136
    %v148 = vunpack.c.l.b16 %v80
    %v149 = vunpack.c.h.b16 %v80
    %v150 = vunpack.c.l.b16 %v81
    %v151 = vunpack.c.h.b16 %v81
    %v152 = vunpack.c.l.b16 %v82
    %v153 = vunpack.c.h.b16 %v82
    %v154 = vunpack.c.l.b16 %v83
    %v155 = vunpack.c.h.b16 %v83
    %v156 = vunpack.c.l.b16 %v84
    %v157 = vunpack.c.h.b16 %v84
    %v158 = vunpack.c.l.b16 %v85
    %v159 = vunpack.c.h.b16 %v85
    %v160 = vunpack.c.l.b16 %v86
    %v161 = vunpack.c.h.b16 %v86
    %v162 = vunpack.c.l.b16 %v87
    %v163 = vunpack.c.h.b16 %v87
    %v164 = vpack.c.b16 %v150, %v148
    %v165 = vpack.c.b16 %v151, %v149
    %v166 = vpack.c.b16 %v154, %v152
    %v167 = vpack.c.b16 %v155, %v153
    %v168 = vpack.c.b16 %v158, %v156
    %v169 = vpack.c.b16 %v159, %v157
    %v170 = vpack.c.b16 %v162, %v160
    %v171 = vpack.c.b16 %v163, %v161
    %v181 = vsel %vm28, %v128, 0
    %183 = vmatprep.subr.bf16.mxu0 %v165
    %184 = vmatpush1.bf16.msra.mxu0 %v164
    %185 = vmatprep.subr.bf16.mxu0 %v167
    %186 = vmatpush1.bf16.msra.mxu0 %v166
    %187 = vmatprep.subr.bf16.mxu0 %v169
    %188 = vmatpush1.bf16.msra.mxu0 %v168
    %189 = vmatprep.subr.bf16.mxu0 %v171
    %190 = vmatpush1.bf16.msra.mxu0 %v170
    %191 = vmatprep.subr.bf16.mxu0 0
    %192 = vmatpush1.bf16.msra.mxu0 0
    %193 = vmatprep.subr.bf16.mxu0 0
    %194 = vmatpush1.bf16.msra.mxu0 0
    %195 = vmatprep.subr.bf16.mxu0 0
    %196 = vmatpush1.bf16.msra.mxu0 0
    %197 = vmatprep.subr.bf16.mxu0 0
    %198 = vmatpush1.bf16.msra.mxu0 0
    %199 = vmatprep.subr.bf16.mxu0 0
    %200 = vmatpush1.bf16.msra.mxu0 0
    %201 = vmatprep.subr.bf16.mxu0 0
    %202 = vmatpush1.bf16.msra.mxu0 0
    %203 = vmatprep.subr.bf16.mxu0 0
    %204 = vmatpush1.bf16.msra.mxu0 0
    %205 = vmatprep.subr.bf16.mxu0 0
    %206 = vmatpush1.bf16.msra.mxu0 0
    %207 = vmatprep.subr.bf16.mxu0 0
    %208 = vmatpush1.bf16.msra.mxu0 0
    %209 = vmatprep.subr.bf16.mxu0 0
    %210 = vmatpush1.bf16.msra.mxu0 0
    %211 = vmatprep.subr.bf16.mxu0 0
    %212 = vmatpush1.bf16.msra.mxu0 0
    %213 = vmatprep.subr.bf16.mxu0 0
    %214 = vmatpush1.bf16.msra.mxu0 0
    %215 = vmatprep.mubr.bf16.mxu0 0
    %216 = vmatmul.mubr.bf16.gmra.mrb[0].mxu0 %v181
    %v217 = vpop.f32.mrb[0].mxu0
    %v218 = vadd.f32 %v133, %v217
    %v219 = vpop.f32.mrb[0].mxu0
    %v220 = vadd.f32 %v137, %v219
    %v221 = vpop.f32.mrb[0].mxu0
    %v222 = vadd.f32 %v133, %v221
    %v223 = vpop.f32.mrb[0].mxu0
    %v224 = vadd.f32 %v137, %v223
    %225 = vdwg.mxu0
    %v226 = vmul.f32 %v218, 0.25
    %v227 = vmul.f32 %v222, 0.25
    %v228 = vpack.c.bf16 %v226, %v226
    %v229 = vpack.c.bf16 %v227, %v227
    %v230 = vpack.c.bf16 %v218, %v218
    %v231 = vpack.c.bf16 %v222, %v222
    %233 = vrot.lane.b32.xlu0 %v230, 64
    %v234 = vpop.permute.xlu0 %233
    %vm235 = vcmask 130048
    %v237 = vsel %vm235, %v228, 0
    %v240 = vsel %vm235, %v234, 0
    %242 = vmatprep.subr.bf16.mxu0 0
    %243 = vmatpush1.bf16.xpose.msra.mxu0 %v240
    %244 = vmatprep.subr.bf16.mxu0 0
    %245 = vmatpush1.bf16.xpose.msra.mxu0 0
    %246 = vmatprep.subr.bf16.mxu0 0
    %247 = vmatpush1.bf16.xpose.msra.mxu0 0
    %248 = vmatprep.subr.bf16.mxu0 0
    %249 = vmatpush1.bf16.xpose.msra.mxu0 0
    %250 = vmatprep.subr.bf16.mxu0 0
    %251 = vmatpush1.bf16.xpose.msra.mxu0 0
    %252 = vmatprep.subr.bf16.mxu0 0
    %253 = vmatpush1.bf16.xpose.msra.mxu0 0
    %254 = vmatprep.subr.bf16.mxu0 0
    %255 = vmatpush1.bf16.xpose.msra.mxu0 0
    %256 = vmatprep.subr.bf16.mxu0 0
    %257 = vmatpush1.bf16.xpose.msra.mxu0 0
    %258 = vmatprep.subr.bf16.mxu0 0
    %259 = vmatpush1.bf16.xpose.msra.mxu0 0
    %260 = vmatprep.subr.bf16.mxu0 0
    %261 = vmatpush1.bf16.xpose.msra.mxu0 0
    %262 = vmatprep.subr.bf16.mxu0 0
    %263 = vmatpush1.bf16.xpose.msra.mxu0 0
    %264 = vmatprep.subr.bf16.mxu0 0
    %265 = vmatpush1.bf16.xpose.msra.mxu0 0
    %266 = vmatprep.subr.bf16.mxu0 0
    %267 = vmatpush1.bf16.xpose.msra.mxu0 0
    %268 = vmatprep.subr.bf16.mxu0 0
    %269 = vmatpush1.bf16.xpose.msra.mxu0 0
    %270 = vmatprep.subr.bf16.mxu0 0
    %271 = vmatpush1.bf16.xpose.msra.mxu0 0
    %272 = vmatprep.subr.bf16.mxu0 0
    %273 = vmatpush1.bf16.xpose.msra.mxu0 0
    %274 = vmatprep.mubr.bf16.mxu0 0
    %275 = vmatmul.mubr.bf16.gmra.mrb[0].mxu0 %v237
    %v276 = vpop.f32.mrb[0].mxu0
    %v277 = vadd.f32 %v73, %v276
    %v278 = vpop.f32.mrb[0].mxu0
    %v279 = vpop.f32.mrb[0].mxu0
    %v280 = vpop.f32.mrb[0].mxu0
    %281 = vdwg.mxu0
    %283 = vrot.lane.b32.xlu0 %v231, 64
    %v284 = vpop.permute.xlu0 %283
    %v286 = vsel %vm235, %v229, 0
    %v289 = vsel %vm235, %v284, 0
    %291 = vmatprep.subr.bf16.mxu0 0
    %292 = vmatpush1.bf16.xpose.msra.mxu0 %v289
    %293 = vmatprep.subr.bf16.mxu0 0
    %294 = vmatpush1.bf16.xpose.msra.mxu0 0
    %295 = vmatprep.subr.bf16.mxu0 0
    %296 = vmatpush1.bf16.xpose.msra.mxu0 0
    %297 = vmatprep.subr.bf16.mxu0 0
    %298 = vmatpush1.bf16.xpose.msra.mxu0 0
    %299 = vmatprep.subr.bf16.mxu0 0
    %300 = vmatpush1.bf16.xpose.msra.mxu0 0
    %301 = vmatprep.subr.bf16.mxu0 0
    %302 = vmatpush1.bf16.xpose.msra.mxu0 0
    %303 = vmatprep.subr.bf16.mxu0 0
    %304 = vmatpush1.bf16.xpose.msra.mxu0 0
    %305 = vmatprep.subr.bf16.mxu0 0
    %306 = vmatpush1.bf16.xpose.msra.mxu0 0
    %307 = vmatprep.subr.bf16.mxu0 0
    %308 = vmatpush1.bf16.xpose.msra.mxu0 0
    %309 = vmatprep.subr.bf16.mxu0 0
    %310 = vmatpush1.bf16.xpose.msra.mxu0 0
    %311 = vmatprep.subr.bf16.mxu0 0
    %312 = vmatpush1.bf16.xpose.msra.mxu0 0
    %313 = vmatprep.subr.bf16.mxu0 0
    %314 = vmatpush1.bf16.xpose.msra.mxu0 0
    %315 = vmatprep.subr.bf16.mxu0 0
    %316 = vmatpush1.bf16.xpose.msra.mxu0 0
    %317 = vmatprep.subr.bf16.mxu0 0
    %318 = vmatpush1.bf16.xpose.msra.mxu0 0
    %319 = vmatprep.subr.bf16.mxu0 0
    %320 = vmatpush1.bf16.xpose.msra.mxu0 0
    %321 = vmatprep.subr.bf16.mxu0 0
    %322 = vmatpush1.bf16.xpose.msra.mxu0 0
    %323 = vmatprep.mubr.bf16.mxu0 0
    %324 = vmatmul.mubr.bf16.gmra.mrb[0].mxu0 %v286
    %v325 = vpop.f32.mrb[0].mxu0
    %v326 = vadd.f32 %v77, %v325
    %v327 = vpop.f32.mrb[0].mxu0
    %v328 = vpop.f32.mrb[0].mxu0
    %v329 = vpop.f32.mrb[0].mxu0
    %330 = vdwg.mxu0
    %vm331 = vcmask 64512
    %v332 = vsel %vm331, %v277, -inf
    %333 = vmax.xlane.f32.xlu0 %v332
    %v334 = vpop.xlane.xlu0 %333
    %v335 = vsel %vm331, %v326, -inf
    %336 = vmax.xlane.f32.xlu0 %v335
    %v337 = vpop.xlane.xlu0 %336
    %v338 = vsub.f32 %v277, %v334
    %v339 = vsub.f32 %v326, %v337
    %v340 = vmul.f32 %v338, 1.442695
    %v341 = vpow.pop %v340
    %v342 = vmul.f32 %v339, 1.442695
    %v343 = vpow.pop %v342
    %v344 = vsel %vm331, %v341, 0.0
    %345 = vadd.xlane.f32.xlu0 %v344
    %v346 = vpop.xlane.xlu0 %345
    %v347 = vsel %vm331, %v343, 0.0
    %348 = vadd.xlane.f32.xlu0 %v347
    %v349 = vpop.xlane.xlu0 %348
    %v350 = vrcp.pop %v346
    %v351 = vrcp.pop %v349
    %v352 = vmul.f32 %v341, %v350
    %v353 = vmul.f32 %v343, %v351
    %v354 = vpack.c.bf16 %v352, %v352
    %v355 = vpack.c.bf16 %v353, %v353
    %v356 = vpack.c.bf16 %v220, %v220
    %v357 = vpack.c.bf16 %v224, %v224
    %v359 = vsel %vm331, %v354, 0
    %vm361 = vcmask 1043456
    %v363 = vsel %vm361, %v356, 0
    %365 = vmatprep.subr.bf16.mxu0 0
    %366 = vmatpush1.bf16.msra.mxu0 %v363
    %367 = vmatprep.subr.bf16.mxu0 0
    %368 = vmatpush1.bf16.msra.mxu0 0
    %369 = vmatprep.subr.bf16.mxu0 0
    %370 = vmatpush1.bf16.msra.mxu0 0
    %371 = vmatprep.subr.bf16.mxu0 0
    %372 = vmatpush1.bf16.msra.mxu0 0
    %373 = vmatprep.subr.bf16.mxu0 0
    %374 = vmatpush1.bf16.msra.mxu0 0
    %375 = vmatprep.subr.bf16.mxu0 0
    %376 = vmatpush1.bf16.msra.mxu0 0
    %377 = vmatprep.subr.bf16.mxu0 0
    %378 = vmatpush1.bf16.msra.mxu0 0
    %379 = vmatprep.subr.bf16.mxu0 0
    %380 = vmatpush1.bf16.msra.mxu0 0
    %381 = vmatprep.subr.bf16.mxu0 0
    %382 = vmatpush1.bf16.msra.mxu0 0
    %383 = vmatprep.subr.bf16.mxu0 0
    %384 = vmatpush1.bf16.msra.mxu0 0
    %385 = vmatprep.subr.bf16.mxu0 0
    %386 = vmatpush1.bf16.msra.mxu0 0
    %387 = vmatprep.subr.bf16.mxu0 0
    %388 = vmatpush1.bf16.msra.mxu0 0
    %389 = vmatprep.subr.bf16.mxu0 0
    %390 = vmatpush1.bf16.msra.mxu0 0
    %391 = vmatprep.subr.bf16.mxu0 0
    %392 = vmatpush1.bf16.msra.mxu0 0
    %393 = vmatprep.subr.bf16.mxu0 0
    %394 = vmatpush1.bf16.msra.mxu0 0
    %395 = vmatprep.subr.bf16.mxu0 0
    %396 = vmatpush1.bf16.msra.mxu0 0
    %397 = vmatprep.mubr.bf16.mxu0 0
    %398 = vmatmul.mubr.bf16.gmra.mrb[0].mxu0 %v359
    %v399 = vpop.f32.mrb[0].mxu0
    %v400 = vadd.f32 0.0, %v399
    %v401 = vpop.f32.mrb[0].mxu0
    %v402 = vpop.f32.mrb[0].mxu0
    %v403 = vpop.f32.mrb[0].mxu0
    %404 = vdwg.mxu0
    %v406 = vsel %vm331, %v355, 0
    %v409 = vsel %vm361, %v357, 0
    %411 = vmatprep.subr.bf16.mxu0 0
    %412 = vmatpush1.bf16.msra.mxu0 %v409
    %413 = vmatprep.subr.bf16.mxu0 0
    %414 = vmatpush1.bf16.msra.mxu0 0
    %415 = vmatprep.subr.bf16.mxu0 0
    %416 = vmatpush1.bf16.msra.mxu0 0
    %417 = vmatprep.subr.bf16.mxu0 0
    %418 = vmatpush1.bf16.msra.mxu0 0
    %419 = vmatprep.subr.bf16.mxu0 0
    %420 = vmatpush1.bf16.msra.mxu0 0
    %421 = vmatprep.subr.bf16.mxu0 0
    %422 = vmatpush1.bf16.msra.mxu0 0
    %423 = vmatprep.subr.bf16.mxu0 0
    %424 = vmatpush1.bf16.msra.mxu0 0
    %425 = vmatprep.subr.bf16.mxu0 0
    %426 = vmatpush1.bf16.msra.mxu0 0
    %427 = vmatprep.subr.bf16.mxu0 0
    %428 = vmatpush1.bf16.msra.mxu0 0
    %429 = vmatprep.subr.bf16.mxu0 0
    %430 = vmatpush1.bf16.msra.mxu0 0
    %431 = vmatprep.subr.bf16.mxu0 0
    %432 = vmatpush1.bf16.msra.mxu0 0
    %433 = vmatprep.subr.bf16.mxu0 0
    %434 = vmatpush1.bf16.msra.mxu0 0
    %435 = vmatprep.subr.bf16.mxu0 0
    %436 = vmatpush1.bf16.msra.mxu0 0
    %437 = vmatprep.subr.bf16.mxu0 0
    %438 = vmatpush1.bf16.msra.mxu0 0
    %439 = vmatprep.subr.bf16.mxu0 0
    %440 = vmatpush1.bf16.msra.mxu0 0
    %441 = vmatprep.subr.bf16.mxu0 0
    %442 = vmatpush1.bf16.msra.mxu0 0
    %443 = vmatprep.mubr.bf16.mxu0 0
    %444 = vmatmul.mubr.bf16.gmra.mrb[0].mxu0 %v406
    %v445 = vpop.f32.mrb[0].mxu0
    %v446 = vadd.f32 0.0, %v445
    %v447 = vpop.f32.mrb[0].mxu0
    %v448 = vpop.f32.mrb[0].mxu0
    %v449 = vpop.f32.mrb[0].mxu0
    %450 = vdwg.mxu0
    %452 = vrot.lane.b32.xlu0 %v228, 112
    %v453 = vpop.permute.xlu0 %452
    %454 = vrot.lane.b32.xlu0 %v230, 48
    %v455 = vpop.permute.xlu0 %454
    %v457 = vsel %vm235, %v453, 0
    %v460 = vsel %vm235, %v455, 0
    %462 = vmatprep.subr.bf16.mxu0 0
    %463 = vmatpush1.bf16.xpose.msra.mxu0 %v460
    %464 = vmatprep.subr.bf16.mxu0 0
    %465 = vmatpush1.bf16.xpose.msra.mxu0 0
    %466 = vmatprep.subr.bf16.mxu0 0
    %467 = vmatpush1.bf16.xpose.msra.mxu0 0
    %468 = vmatprep.subr.bf16.mxu0 0
    %469 = vmatpush1.bf16.xpose.msra.mxu0 0
    %470 = vmatprep.subr.bf16.mxu0 0
    %471 = vmatpush1.bf16.xpose.msra.mxu0 0
    %472 = vmatprep.subr.bf16.mxu0 0
    %473 = vmatpush1.bf16.xpose.msra.mxu0 0
    %474 = vmatprep.subr.bf16.mxu0 0
    %475 = vmatpush1.bf16.xpose.msra.mxu0 0
    %476 = vmatprep.subr.bf16.mxu0 0
    %477 = vmatpush1.bf16.xpose.msra.mxu0 0
    %478 = vmatprep.subr.bf16.mxu0 0
    %479 = vmatpush1.bf16.xpose.msra.mxu0 0
    %480 = vmatprep.subr.bf16.mxu0 0
    %481 = vmatpush1.bf16.xpose.msra.mxu0 0
    %482 = vmatprep.subr.bf16.mxu0 0
    %483 = vmatpush1.bf16.xpose.msra.mxu0 0
    %484 = vmatprep.subr.bf16.mxu0 0
    %485 = vmatpush1.bf16.xpose.msra.mxu0 0
    %486 = vmatprep.subr.bf16.mxu0 0
    %487 = vmatpush1.bf16.xpose.msra.mxu0 0
    %488 = vmatprep.subr.bf16.mxu0 0
    %489 = vmatpush1.bf16.xpose.msra.mxu0 0
    %490 = vmatprep.subr.bf16.mxu0 0
    %491 = vmatpush1.bf16.xpose.msra.mxu0 0
    %492 = vmatprep.subr.bf16.mxu0 0
    %493 = vmatpush1.bf16.xpose.msra.mxu0 0
    %494 = vmatprep.mubr.bf16.mxu0 0
    %495 = vmatmul.mubr.bf16.gmra.mrb[0].mxu0 %v457
    %v496 = vpop.f32.mrb[0].mxu0
    %v497 = vadd.f32 %v73, %v496
    %v498 = vpop.f32.mrb[0].mxu0
    %v499 = vpop.f32.mrb[0].mxu0
    %v500 = vpop.f32.mrb[0].mxu0
    %501 = vdwg.mxu0
    %503 = vrot.lane.b32.xlu0 %v229, 112
    %v504 = vpop.permute.xlu0 %503
    %505 = vrot.lane.b32.xlu0 %v231, 48
    %v506 = vpop.permute.xlu0 %505
    %v508 = vsel %vm235, %v504, 0
    %v511 = vsel %vm235, %v506, 0
    %513 = vmatprep.subr.bf16.mxu0 0
    %514 = vmatpush1.bf16.xpose.msra.mxu0 %v511
    %515 = vmatprep.subr.bf16.mxu0 0
    %516 = vmatpush1.bf16.xpose.msra.mxu0 0
    %517 = vmatprep.subr.bf16.mxu0 0
    %518 = vmatpush1.bf16.xpose.msra.mxu0 0
    %519 = vmatprep.subr.bf16.mxu0 0
    %520 = vmatpush1.bf16.xpose.msra.mxu0 0
    %521 = vmatprep.subr.bf16.mxu0 0
    %522 = vmatpush1.bf16.xpose.msra.mxu0 0
    %523 = vmatprep.subr.bf16.mxu0 0
    %524 = vmatpush1.bf16.xpose.msra.mxu0 0
    %525 = vmatprep.subr.bf16.mxu0 0
    %526 = vmatpush1.bf16.xpose.msra.mxu0 0
    %527 = vmatprep.subr.bf16.mxu0 0
    %528 = vmatpush1.bf16.xpose.msra.mxu0 0
    %529 = vmatprep.subr.bf16.mxu0 0
    %530 = vmatpush1.bf16.xpose.msra.mxu0 0
    %531 = vmatprep.subr.bf16.mxu0 0
    %532 = vmatpush1.bf16.xpose.msra.mxu0 0
    %533 = vmatprep.subr.bf16.mxu0 0
    %534 = vmatpush1.bf16.xpose.msra.mxu0 0
    %535 = vmatprep.subr.bf16.mxu0 0
    %536 = vmatpush1.bf16.xpose.msra.mxu0 0
    %537 = vmatprep.subr.bf16.mxu0 0
    %538 = vmatpush1.bf16.xpose.msra.mxu0 0
    %539 = vmatprep.subr.bf16.mxu0 0
    %540 = vmatpush1.bf16.xpose.msra.mxu0 0
    %541 = vmatprep.subr.bf16.mxu0 0
    %542 = vmatpush1.bf16.xpose.msra.mxu0 0
    %543 = vmatprep.subr.bf16.mxu0 0
    %544 = vmatpush1.bf16.xpose.msra.mxu0 0
    %545 = vmatprep.mubr.bf16.mxu0 0
    %546 = vmatmul.mubr.bf16.gmra.mrb[0].mxu0 %v508
    %v547 = vpop.f32.mrb[0].mxu0
    %v548 = vadd.f32 %v77, %v547
    %v549 = vpop.f32.mrb[0].mxu0
    %v550 = vpop.f32.mrb[0].mxu0
    %v551 = vpop.f32.mrb[0].mxu0
    %552 = vdwg.mxu0
    %v553 = vsel %vm331, %v497, -inf
    %554 = vmax.xlane.f32.xlu0 %v553
    %v555 = vpop.xlane.xlu0 %554
    %v556 = vsel %vm331, %v548, -inf
    %557 = vmax.xlane.f32.xlu0 %v556
    %v558 = vpop.xlane.xlu0 %557
    %v559 = vsub.f32 %v497, %v555
    %v560 = vsub.f32 %v548, %v558
    %v561 = vmul.f32 %v559, 1.442695
    %v562 = vpow.pop %v561
    %v563 = vmul.f32 %v560, 1.442695
    %v564 = vpow.pop %v563
    %v565 = vsel %vm331, %v562, 0.0
    %566 = vadd.xlane.f32.xlu0 %v565
    %v567 = vpop.xlane.xlu0 %566
    %v568 = vsel %vm331, %v564, 0.0
    %569 = vadd.xlane.f32.xlu0 %v568
    %v570 = vpop.xlane.xlu0 %569
    %v571 = vrcp.pop %v567
    %v572 = vrcp.pop %v570
    %v573 = vmul.f32 %v562, %v571
    %v574 = vmul.f32 %v564, %v572
    %v575 = vpack.c.bf16 %v573, %v573
    %v576 = vpack.c.bf16 %v574, %v574
    %578 = vrot.lane.b32.xlu0 %v356, 112
    %v579 = vpop.permute.xlu0 %578
    %v581 = vsel %vm331, %v575, 0
    %v584 = vsel %vm361, %v579, 0
    %586 = vmatprep.subr.bf16.mxu0 0
    %587 = vmatpush1.bf16.msra.mxu0 %v584
    %588 = vmatprep.subr.bf16.mxu0 0
    %589 = vmatpush1.bf16.msra.mxu0 0
    %590 = vmatprep.subr.bf16.mxu0 0
    %591 = vmatpush1.bf16.msra.mxu0 0
    %592 = vmatprep.subr.bf16.mxu0 0
    %593 = vmatpush1.bf16.msra.mxu0 0
    %594 = vmatprep.subr.bf16.mxu0 0
    %595 = vmatpush1.bf16.msra.mxu0 0
    %596 = vmatprep.subr.bf16.mxu0 0
    %597 = vmatpush1.bf16.msra.mxu0 0
    %598 = vmatprep.subr.bf16.mxu0 0
    %599 = vmatpush1.bf16.msra.mxu0 0
    %600 = vmatprep.subr.bf16.mxu0 0
    %601 = vmatpush1.bf16.msra.mxu0 0
    %602 = vmatprep.subr.bf16.mxu0 0
    %603 = vmatpush1.bf16.msra.mxu0 0
    %604 = vmatprep.subr.bf16.mxu0 0
    %605 = vmatpush1.bf16.msra.mxu0 0
    %606 = vmatprep.subr.bf16.mxu0 0
    %607 = vmatpush1.bf16.msra.mxu0 0
    %608 = vmatprep.subr.bf16.mxu0 0
    %609 = vmatpush1.bf16.msra.mxu0 0
    %610 = vmatprep.subr.bf16.mxu0 0
    %611 = vmatpush1.bf16.msra.mxu0 0
    %612 = vmatprep.subr.bf16.mxu0 0
    %613 = vmatpush1.bf16.msra.mxu0 0
    %614 = vmatprep.subr.bf16.mxu0 0
    %615 = vmatpush1.bf16.msra.mxu0 0
    %616 = vmatprep.subr.bf16.mxu0 0
    %617 = vmatpush1.bf16.msra.mxu0 0
    %618 = vmatprep.mubr.bf16.mxu0 0
    %619 = vmatmul.mubr.bf16.gmra.mrb[0].mxu0 %v581
    %v620 = vpop.f32.mrb[0].mxu0
    %v621 = vadd.f32 0.0, %v620
    %v622 = vpop.f32.mrb[0].mxu0
    %v623 = vpop.f32.mrb[0].mxu0
    %v624 = vpop.f32.mrb[0].mxu0
    %625 = vdwg.mxu0
    %627 = vrot.lane.b32.xlu0 %v357, 112
    %v628 = vpop.permute.xlu0 %627
    %v630 = vsel %vm331, %v576, 0
    %v633 = vsel %vm361, %v628, 0
    %635 = vmatprep.subr.bf16.mxu0 0
    %636 = vmatpush1.bf16.msra.mxu0 %v633
    %637 = vmatprep.subr.bf16.mxu0 0
    %638 = vmatpush1.bf16.msra.mxu0 0
    %639 = vmatprep.subr.bf16.mxu0 0
    %640 = vmatpush1.bf16.msra.mxu0 0
    %641 = vmatprep.subr.bf16.mxu0 0
    %642 = vmatpush1.bf16.msra.mxu0 0
    %643 = vmatprep.subr.bf16.mxu0 0
    %644 = vmatpush1.bf16.msra.mxu0 0
    %645 = vmatprep.subr.bf16.mxu0 0
    %646 = vmatpush1.bf16.msra.mxu0 0
    %647 = vmatprep.subr.bf16.mxu0 0
    %648 = vmatpush1.bf16.msra.mxu0 0
    %649 = vmatprep.subr.bf16.mxu0 0
    %650 = vmatpush1.bf16.msra.mxu0 0
    %651 = vmatprep.subr.bf16.mxu0 0
    %652 = vmatpush1.bf16.msra.mxu0 0
    %653 = vmatprep.subr.bf16.mxu0 0
    %654 = vmatpush1.bf16.msra.mxu0 0
    %655 = vmatprep.subr.bf16.mxu0 0
    %656 = vmatpush1.bf16.msra.mxu0 0
    %657 = vmatprep.subr.bf16.mxu0 0
    %658 = vmatpush1.bf16.msra.mxu0 0
    %659 = vmatprep.subr.bf16.mxu0 0
    %660 = vmatpush1.bf16.msra.mxu0 0
    %661 = vmatprep.subr.bf16.mxu0 0
    %662 = vmatpush1.bf16.msra.mxu0 0
    %663 = vmatprep.subr.bf16.mxu0 0
    %664 = vmatpush1.bf16.msra.mxu0 0
    %665 = vmatprep.subr.bf16.mxu0 0
    %666 = vmatpush1.bf16.msra.mxu0 0
    %667 = vmatprep.mubr.bf16.mxu0 0
    %668 = vmatmul.mubr.bf16.gmra.mrb[0].mxu0 %v630
    %v669 = vpop.f32.mrb[0].mxu0
    %v670 = vadd.f32 0.0, %v669
    %v671 = vpop.f32.mrb[0].mxu0
    %v672 = vpop.f32.mrb[0].mxu0
    %v673 = vpop.f32.mrb[0].mxu0
    %674 = vdwg.mxu0
    %675 = vrot.lane.b32.xlu0 %v228, 96
    %v676 = vpop.permute.xlu0 %675
    %677 = vrot.lane.b32.xlu0 %v230, 32
    %v678 = vpop.permute.xlu0 %677
    %v680 = vsel %vm235, %v676, 0
    %v683 = vsel %vm235, %v678, 0
    %685 = vmatprep.subr.bf16.mxu0 0
    %686 = vmatpush1.bf16.xpose.msra.mxu0 %v683
    %687 = vmatprep.subr.bf16.mxu0 0
    %688 = vmatpush1.bf16.xpose.msra.mxu0 0
    %689 = vmatprep.subr.bf16.mxu0 0
    %690 = vmatpush1.bf16.xpose.msra.mxu0 0
    %691 = vmatprep.subr.bf16.mxu0 0
    %692 = vmatpush1.bf16.xpose.msra.mxu0 0
    %693 = vmatprep.subr.bf16.mxu0 0
    %694 = vmatpush1.bf16.xpose.msra.mxu0 0
    %695 = vmatprep.subr.bf16.mxu0 0
    %696 = vmatpush1.bf16.xpose.msra.mxu0 0
    %697 = vmatprep.subr.bf16.mxu0 0
    %698 = vmatpush1.bf16.xpose.msra.mxu0 0
    %699 = vmatprep.subr.bf16.mxu0 0
    %700 = vmatpush1.bf16.xpose.msra.mxu0 0
    %701 = vmatprep.subr.bf16.mxu0 0
    %702 = vmatpush1.bf16.xpose.msra.mxu0 0
    %703 = vmatprep.subr.bf16.mxu0 0
    %704 = vmatpush1.bf16.xpose.msra.mxu0 0
    %705 = vmatprep.subr.bf16.mxu0 0
    %706 = vmatpush1.bf16.xpose.msra.mxu0 0
    %707 = vmatprep.subr.bf16.mxu0 0
    %708 = vmatpush1.bf16.xpose.msra.mxu0 0
    %709 = vmatprep.subr.bf16.mxu0 0
    %710 = vmatpush1.bf16.xpose.msra.mxu0 0
    %711 = vmatprep.subr.bf16.mxu0 0
    %712 = vmatpush1.bf16.xpose.msra.mxu0 0
    %713 = vmatprep.subr.bf16.mxu0 0
    %714 = vmatpush1.bf16.xpose.msra.mxu0 0
    %715 = vmatprep.subr.bf16.mxu0 0
    %716 = vmatpush1.bf16.xpose.msra.mxu0 0
    %717 = vmatprep.mubr.bf16.mxu0 0
    %718 = vmatmul.mubr.bf16.gmra.mrb[0].mxu0 %v680
    %v719 = vpop.f32.mrb[0].mxu0
    %v720 = vadd.f32 %v73, %v719
    %v721 = vpop.f32.mrb[0].mxu0
    %v722 = vpop.f32.mrb[0].mxu0
    %v723 = vpop.f32.mrb[0].mxu0
    %724 = vdwg.mxu0
    %725 = vrot.lane.b32.xlu0 %v229, 96
    %v726 = vpop.permute.xlu0 %725
    %727 = vrot.lane.b32.xlu0 %v231, 32
    %v728 = vpop.permute.xlu0 %727
    %v730 = vsel %vm235, %v726, 0
    %v733 = vsel %vm235, %v728, 0
    %735 = vmatprep.subr.bf16.mxu0 0
    %736 = vmatpush1.bf16.xpose.msra.mxu0 %v733
    %737 = vmatprep.subr.bf16.mxu0 0
    %738 = vmatpush1.bf16.xpose.msra.mxu0 0
    %739 = vmatprep.subr.bf16.mxu0 0
    %740 = vmatpush1.bf16.xpose.msra.mxu0 0
    %741 = vmatprep.subr.bf16.mxu0 0
    %742 = vmatpush1.bf16.xpose.msra.mxu0 0
    %743 = vmatprep.subr.bf16.mxu0 0
    %744 = vmatpush1.bf16.xpose.msra.mxu0 0
    %745 = vmatprep.subr.bf16.mxu0 0
    %746 = vmatpush1.bf16.xpose.msra.mxu0 0
    %747 = vmatprep.subr.bf16.mxu0 0
    %748 = vmatpush1.bf16.xpose.msra.mxu0 0
    %749 = vmatprep.subr.bf16.mxu0 0
    %750 = vmatpush1.bf16.xpose.msra.mxu0 0
    %751 = vmatprep.subr.bf16.mxu0 0
    %752 = vmatpush1.bf16.xpose.msra.mxu0 0
    %753 = vmatprep.subr.bf16.mxu0 0
    %754 = vmatpush1.bf16.xpose.msra.mxu0 0
    %755 = vmatprep.subr.bf16.mxu0 0
    %756 = vmatpush1.bf16.xpose.msra.mxu0 0
    %757 = vmatprep.subr.bf16.mxu0 0
    %758 = vmatpush1.bf16.xpose.msra.mxu0 0
    %759 = vmatprep.subr.bf16.mxu0 0
    %760 = vmatpush1.bf16.xpose.msra.mxu0 0
    %761 = vmatprep.subr.bf16.mxu0 0
    %762 = vmatpush1.bf16.xpose.msra.mxu0 0
    %763 = vmatprep.subr.bf16.mxu0 0
    %764 = vmatpush1.bf16.xpose.msra.mxu0 0
    %765 = vmatprep.subr.bf16.mxu0 0
    %766 = vmatpush1.bf16.xpose.msra.mxu0 0
    %767 = vmatprep.mubr.bf16.mxu0 0
    %768 = vmatmul.mubr.bf16.gmra.mrb[0].mxu0 %v730
    %v769 = vpop.f32.mrb[0].mxu0
    %v770 = vadd.f32 %v77, %v769
    %v771 = vpop.f32.mrb[0].mxu0
    %v772 = vpop.f32.mrb[0].mxu0
    %v773 = vpop.f32.mrb[0].mxu0
    %774 = vdwg.mxu0
    %v775 = vsel %vm331, %v720, -inf
    %776 = vmax.xlane.f32.xlu0 %v775
    %v777 = vpop.xlane.xlu0 %776
    %v778 = vsel %vm331, %v770, -inf
    %779 = vmax.xlane.f32.xlu0 %v778
    %v780 = vpop.xlane.xlu0 %779
    %v781 = vsub.f32 %v720, %v777
    %v782 = vsub.f32 %v770, %v780
    %v783 = vmul.f32 %v781, 1.442695
    %v784 = vpow.pop %v783
    %v785 = vmul.f32 %v782, 1.442695
    %v786 = vpow.pop %v785
    %v787 = vsel %vm331, %v784, 0.0
    %788 = vadd.xlane.f32.xlu0 %v787
    %v789 = vpop.xlane.xlu0 %788
    %v790 = vsel %vm331, %v786, 0.0
    %791 = vadd.xlane.f32.xlu0 %v790
    %v792 = vpop.xlane.xlu0 %791
    %v793 = vrcp.pop %v789
    %v794 = vrcp.pop %v792
    %v795 = vmul.f32 %v784, %v793
    %v796 = vmul.f32 %v786, %v794
    %v797 = vpack.c.bf16 %v795, %v795
    %v798 = vpack.c.bf16 %v796, %v796
    %799 = vrot.lane.b32.xlu0 %v356, 96
    %v800 = vpop.permute.xlu0 %799
    %v802 = vsel %vm331, %v797, 0
    %v805 = vsel %vm361, %v800, 0
    %807 = vmatprep.subr.bf16.mxu0 0
    %808 = vmatpush1.bf16.msra.mxu0 %v805
    %809 = vmatprep.subr.bf16.mxu0 0
    %810 = vmatpush1.bf16.msra.mxu0 0
    %811 = vmatprep.subr.bf16.mxu0 0
    %812 = vmatpush1.bf16.msra.mxu0 0
    %813 = vmatprep.subr.bf16.mxu0 0
    %814 = vmatpush1.bf16.msra.mxu0 0
    %815 = vmatprep.subr.bf16.mxu0 0
    %816 = vmatpush1.bf16.msra.mxu0 0
    %817 = vmatprep.subr.bf16.mxu0 0
    %818 = vmatpush1.bf16.msra.mxu0 0
    %819 = vmatprep.subr.bf16.mxu0 0
    %820 = vmatpush1.bf16.msra.mxu0 0
    %821 = vmatprep.subr.bf16.mxu0 0
    %822 = vmatpush1.bf16.msra.mxu0 0
    %823 = vmatprep.subr.bf16.mxu0 0
    %824 = vmatpush1.bf16.msra.mxu0 0
    %825 = vmatprep.subr.bf16.mxu0 0
    %826 = vmatpush1.bf16.msra.mxu0 0
    %827 = vmatprep.subr.bf16.mxu0 0
    %828 = vmatpush1.bf16.msra.mxu0 0
    %829 = vmatprep.subr.bf16.mxu0 0
    %830 = vmatpush1.bf16.msra.mxu0 0
    %831 = vmatprep.subr.bf16.mxu0 0
    %832 = vmatpush1.bf16.msra.mxu0 0
    %833 = vmatprep.subr.bf16.mxu0 0
    %834 = vmatpush1.bf16.msra.mxu0 0
    %835 = vmatprep.subr.bf16.mxu0 0
    %836 = vmatpush1.bf16.msra.mxu0 0
    %837 = vmatprep.subr.bf16.mxu0 0
    %838 = vmatpush1.bf16.msra.mxu0 0
    %839 = vmatprep.mubr.bf16.mxu0 0
    %840 = vmatmul.mubr.bf16.gmra.mrb[0].mxu0 %v802
    %v841 = vpop.f32.mrb[0].mxu0
    %v842 = vadd.f32 0.0, %v841
    %v843 = vpop.f32.mrb[0].mxu0
    %v844 = vpop.f32.mrb[0].mxu0
    %v845 = vpop.f32.mrb[0].mxu0
    %846 = vdwg.mxu0
    %847 = vrot.lane.b32.xlu0 %v357, 96
    %v848 = vpop.permute.xlu0 %847
    %v850 = vsel %vm331, %v798, 0
    %v853 = vsel %vm361, %v848, 0
    %855 = vmatprep.subr.bf16.mxu0 0
    %856 = vmatpush1.bf16.msra.mxu0 %v853
    %857 = vmatprep.subr.bf16.mxu0 0
    %858 = vmatpush1.bf16.msra.mxu0 0
    %859 = vmatprep.subr.bf16.mxu0 0
    %860 = vmatpush1.bf16.msra.mxu0 0
    %861 = vmatprep.subr.bf16.mxu0 0
    %862 = vmatpush1.bf16.msra.mxu0 0
    %863 = vmatprep.subr.bf16.mxu0 0
    %864 = vmatpush1.bf16.msra.mxu0 0
    %865 = vmatprep.subr.bf16.mxu0 0
    %866 = vmatpush1.bf16.msra.mxu0 0
    %867 = vmatprep.subr.bf16.mxu0 0
    %868 = vmatpush1.bf16.msra.mxu0 0
    %869 = vmatprep.subr.bf16.mxu0 0
    %870 = vmatpush1.bf16.msra.mxu0 0
    %871 = vmatprep.subr.bf16.mxu0 0
    %872 = vmatpush1.bf16.msra.mxu0 0
    %873 = vmatprep.subr.bf16.mxu0 0
    %874 = vmatpush1.bf16.msra.mxu0 0
    %875 = vmatprep.subr.bf16.mxu0 0
    %876 = vmatpush1.bf16.msra.mxu0 0
    %877 = vmatprep.subr.bf16.mxu0 0
    %878 = vmatpush1.bf16.msra.mxu0 0
    %879 = vmatprep.subr.bf16.mxu0 0
    %880 = vmatpush1.bf16.msra.mxu0 0
    %881 = vmatprep.subr.bf16.mxu0 0
    %882 = vmatpush1.bf16.msra.mxu0 0
    %883 = vmatprep.subr.bf16.mxu0 0
    %884 = vmatpush1.bf16.msra.mxu0 0
    %885 = vmatprep.subr.bf16.mxu0 0
    %886 = vmatpush1.bf16.msra.mxu0 0
    %887 = vmatprep.mubr.bf16.mxu0 0
    %888 = vmatmul.mubr.bf16.gmra.mrb[0].mxu0 %v850
    %v889 = vpop.f32.mrb[0].mxu0
    %v890 = vadd.f32 0.0, %v889
    %v891 = vpop.f32.mrb[0].mxu0
    %v892 = vpop.f32.mrb[0].mxu0
    %v893 = vpop.f32.mrb[0].mxu0
    %894 = vdwg.mxu0
    %895 = vrot.lane.b32.xlu0 %v228, 80
    %v896 = vpop.permute.xlu0 %895
    %897 = vrot.lane.b32.xlu0 %v230, 16
    %v898 = vpop.permute.xlu0 %897
    %v900 = vsel %vm235, %v896, 0
    %v903 = vsel %vm235, %v898, 0
    %905 = vmatprep.subr.bf16.mxu0 0
    %906 = vmatpush1.bf16.xpose.msra.mxu0 %v903
    %907 = vmatprep.subr.bf16.mxu0 0
    %908 = vmatpush1.bf16.xpose.msra.mxu0 0
    %909 = vmatprep.subr.bf16.mxu0 0
    %910 = vmatpush1.bf16.xpose.msra.mxu0 0
    %911 = vmatprep.subr.bf16.mxu0 0
    %912 = vmatpush1.bf16.xpose.msra.mxu0 0
    %913 = vmatprep.subr.bf16.mxu0 0
    %914 = vmatpush1.bf16.xpose.msra.mxu0 0
    %915 = vmatprep.subr.bf16.mxu0 0
    %916 = vmatpush1.bf16.xpose.msra.mxu0 0
    %917 = vmatprep.subr.bf16.mxu0 0
    %918 = vmatpush1.bf16.xpose.msra.mxu0 0
    %919 = vmatprep.subr.bf16.mxu0 0
    %920 = vmatpush1.bf16.xpose.msra.mxu0 0
    %921 = vmatprep.subr.bf16.mxu0 0
    %922 = vmatpush1.bf16.xpose.msra.mxu0 0
    %923 = vmatprep.subr.bf16.mxu0 0
    %924 = vmatpush1.bf16.xpose.msra.mxu0 0
    %925 = vmatprep.subr.bf16.mxu0 0
    %926 = vmatpush1.bf16.xpose.msra.mxu0 0
    %927 = vmatprep.subr.bf16.mxu0 0
    %928 = vmatpush1.bf16.xpose.msra.mxu0 0
    %929 = vmatprep.subr.bf16.mxu0 0
    %930 = vmatpush1.bf16.xpose.msra.mxu0 0
    %931 = vmatprep.subr.bf16.mxu0 0
    %932 = vmatpush1.bf16.xpose.msra.mxu0 0
    %933 = vmatprep.subr.bf16.mxu0 0
    %934 = vmatpush1.bf16.xpose.msra.mxu0 0
    %935 = vmatprep.subr.bf16.mxu0 0
    %936 = vmatpush1.bf16.xpose.msra.mxu0 0
    %937 = vmatprep.mubr.bf16.mxu0 0
    %938 = vmatmul.mubr.bf16.gmra.mrb[0].mxu0 %v900
    %v939 = vpop.f32.mrb[0].mxu0
    %v940 = vadd.f32 %v73, %v939
    %v941 = vpop.f32.mrb[0].mxu0
    %v942 = vpop.f32.mrb[0].mxu0
    %v943 = vpop.f32.mrb[0].mxu0
    %944 = vdwg.mxu0
    %945 = vrot.lane.b32.xlu0 %v229, 80
    %v946 = vpop.permute.xlu0 %945
    %947 = vrot.lane.b32.xlu0 %v231, 16
    %v948 = vpop.permute.xlu0 %947
    %v950 = vsel %vm235, %v946, 0
    %v953 = vsel %vm235, %v948, 0
    %955 = vmatprep.subr.bf16.mxu0 0
    %956 = vmatpush1.bf16.xpose.msra.mxu0 %v953
    %957 = vmatprep.subr.bf16.mxu0 0
    %958 = vmatpush1.bf16.xpose.msra.mxu0 0
    %959 = vmatprep.subr.bf16.mxu0 0
    %960 = vmatpush1.bf16.xpose.msra.mxu0 0
    %961 = vmatprep.subr.bf16.mxu0 0
    %962 = vmatpush1.bf16.xpose.msra.mxu0 0
    %963 = vmatprep.subr.bf16.mxu0 0
    %964 = vmatpush1.bf16.xpose.msra.mxu0 0
    %965 = vmatprep.subr.bf16.mxu0 0
    %966 = vmatpush1.bf16.xpose.msra.mxu0 0
    %967 = vmatprep.subr.bf16.mxu0 0
    %968 = vmatpush1.bf16.xpose.msra.mxu0 0
    %969 = vmatprep.subr.bf16.mxu0 0
    %970 = vmatpush1.bf16.xpose.msra.mxu0 0
    %971 = vmatprep.subr.bf16.mxu0 0
    %972 = vmatpush1.bf16.xpose.msra.mxu0 0
    %973 = vmatprep.subr.bf16.mxu0 0
    %974 = vmatpush1.bf16.xpose.msra.mxu0 0
    %975 = vmatprep.subr.bf16.mxu0 0
    %976 = vmatpush1.bf16.xpose.msra.mxu0 0
    %977 = vmatprep.subr.bf16.mxu0 0
    %978 = vmatpush1.bf16.xpose.msra.mxu0 0
    %979 = vmatprep.subr.bf16.mxu0 0
    %980 = vmatpush1.bf16.xpose.msra.mxu0 0
    %981 = vmatprep.subr.bf16.mxu0 0
    %982 = vmatpush1.bf16.xpose.msra.mxu0 0
    %983 = vmatprep.subr.bf16.mxu0 0
    %984 = vmatpush1.bf16.xpose.msra.mxu0 0
    %985 = vmatprep.subr.bf16.mxu0 0
    %986 = vmatpush1.bf16.xpose.msra.mxu0 0
    %987 = vmatprep.mubr.bf16.mxu0 0
    %988 = vmatmul.mubr.bf16.gmra.mrb[0].mxu0 %v950
    %v989 = vpop.f32.mrb[0].mxu0
    %v990 = vadd.f32 %v77, %v989
    %v991 = vpop.f32.mrb[0].mxu0
    %v992 = vpop.f32.mrb[0].mxu0
    %v993 = vpop.f32.mrb[0].mxu0
    %994 = vdwg.mxu0
    %v995 = vsel %vm331, %v940, -inf
    %996 = vmax.xlane.f32.xlu0 %v995
    %v997 = vpop.xlane.xlu0 %996
    %v998 = vsel %vm331, %v990, -inf
    %999 = vmax.xlane.f32.xlu0 %v998
    %v1000 = vpop.xlane.xlu0 %999
    %v1001 = vsub.f32 %v940, %v997
    %v1002 = vsub.f32 %v990, %v1000
    %v1003 = vmul.f32 %v1001, 1.442695
    %v1004 = vpow.pop %v1003
    %v1005 = vmul.f32 %v1002, 1.442695
    %v1006 = vpow.pop %v1005
    %v1007 = vsel %vm331, %v1004, 0.0
    %1008 = vadd.xlane.f32.xlu0 %v1007
    %v1009 = vpop.xlane.xlu0 %1008
    %v1010 = vsel %vm331, %v1006, 0.0
    %1011 = vadd.xlane.f32.xlu0 %v1010
    %v1012 = vpop.xlane.xlu0 %1011
    %v1013 = vrcp.pop %v1009
    %v1014 = vrcp.pop %v1012
    %v1015 = vmul.f32 %v1004, %v1013
    %v1016 = vmul.f32 %v1006, %v1014
    %v1017 = vpack.c.bf16 %v1015, %v1015
    %v1018 = vpack.c.bf16 %v1016, %v1016
    %1019 = vrot.lane.b32.xlu0 %v356, 80
    %v1020 = vpop.permute.xlu0 %1019
    %v1022 = vsel %vm331, %v1017, 0
    %v1025 = vsel %vm361, %v1020, 0
    %1027 = vmatprep.subr.bf16.mxu0 0
    %1028 = vmatpush1.bf16.msra.mxu0 %v1025
    %1029 = vmatprep.subr.bf16.mxu0 0
    %1030 = vmatpush1.bf16.msra.mxu0 0
    %1031 = vmatprep.subr.bf16.mxu0 0
    %1032 = vmatpush1.bf16.msra.mxu0 0
    %1033 = vmatprep.subr.bf16.mxu0 0
    %1034 = vmatpush1.bf16.msra.mxu0 0
    %1035 = vmatprep.subr.bf16.mxu0 0
    %1036 = vmatpush1.bf16.msra.mxu0 0
    %1037 = vmatprep.subr.bf16.mxu0 0
    %1038 = vmatpush1.bf16.msra.mxu0 0
    %1039 = vmatprep.subr.bf16.mxu0 0
    %1040 = vmatpush1.bf16.msra.mxu0 0
    %1041 = vmatprep.subr.bf16.mxu0 0
    %1042 = vmatpush1.bf16.msra.mxu0 0
    %1043 = vmatprep.subr.bf16.mxu0 0
    %1044 = vmatpush1.bf16.msra.mxu0 0
    %1045 = vmatprep.subr.bf16.mxu0 0
    %1046 = vmatpush1.bf16.msra.mxu0 0
    %1047 = vmatprep.subr.bf16.mxu0 0
    %1048 = vmatpush1.bf16.msra.mxu0 0
    %1049 = vmatprep.subr.bf16.mxu0 0
    %1050 = vmatpush1.bf16.msra.mxu0 0
    %1051 = vmatprep.subr.bf16.mxu0 0
    %1052 = vmatpush1.bf16.msra.mxu0 0
    %1053 = vmatprep.subr.bf16.mxu0 0
    %1054 = vmatpush1.bf16.msra.mxu0 0
    %1055 = vmatprep.subr.bf16.mxu0 0
    %1056 = vmatpush1.bf16.msra.mxu0 0
    %1057 = vmatprep.subr.bf16.mxu0 0
    %1058 = vmatpush1.bf16.msra.mxu0 0
    %1059 = vmatprep.mubr.bf16.mxu0 0
    %1060 = vmatmul.mubr.bf16.gmra.mrb[0].mxu0 %v1022
    %v1061 = vpop.f32.mrb[0].mxu0
    %v1062 = vadd.f32 0.0, %v1061
    %v1063 = vpop.f32.mrb[0].mxu0
    %v1064 = vpop.f32.mrb[0].mxu0
    %v1065 = vpop.f32.mrb[0].mxu0
    %1066 = vdwg.mxu0
    %1067 = vrot.lane.b32.xlu0 %v357, 80
    %v1068 = vpop.permute.xlu0 %1067
    %v1070 = vsel %vm331, %v1018, 0
    %v1073 = vsel %vm361, %v1068, 0
    %1075 = vmatprep.subr.bf16.mxu0 0
    %1076 = vmatpush1.bf16.msra.mxu0 %v1073
    %1077 = vmatprep.subr.bf16.mxu0 0
    %1078 = vmatpush1.bf16.msra.mxu0 0
    %1079 = vmatprep.subr.bf16.mxu0 0
    %1080 = vmatpush1.bf16.msra.mxu0 0
    %1081 = vmatprep.subr.bf16.mxu0 0
    %1082 = vmatpush1.bf16.msra.mxu0 0
    %1083 = vmatprep.subr.bf16.mxu0 0
    %1084 = vmatpush1.bf16.msra.mxu0 0
    %1085 = vmatprep.subr.bf16.mxu0 0
    %1086 = vmatpush1.bf16.msra.mxu0 0
    %1087 = vmatprep.subr.bf16.mxu0 0
    %1088 = vmatpush1.bf16.msra.mxu0 0
    %1089 = vmatprep.subr.bf16.mxu0 0
    %1090 = vmatpush1.bf16.msra.mxu0 0
    %1091 = vmatprep.subr.bf16.mxu0 0
    %1092 = vmatpush1.bf16.msra.mxu0 0
    %1093 = vmatprep.subr.bf16.mxu0 0
    %1094 = vmatpush1.bf16.msra.mxu0 0
    %1095 = vmatprep.subr.bf16.mxu0 0
    %1096 = vmatpush1.bf16.msra.mxu0 0
    %1097 = vmatprep.subr.bf16.mxu0 0
    %1098 = vmatpush1.bf16.msra.mxu0 0
    %1099 = vmatprep.subr.bf16.mxu0 0
    %1100 = vmatpush1.bf16.msra.mxu0 0
    %1101 = vmatprep.subr.bf16.mxu0 0
    %1102 = vmatpush1.bf16.msra.mxu0 0
    %1103 = vmatprep.subr.bf16.mxu0 0
    %1104 = vmatpush1.bf16.msra.mxu0 0
    %1105 = vmatprep.subr.bf16.mxu0 0
    %1106 = vmatpush1.bf16.msra.mxu0 0
    %1107 = vmatprep.mubr.bf16.mxu0 0
    %1108 = vmatmul.mubr.bf16.gmra.mrb[0].mxu0 %v1070
    %v1109 = vpop.f32.mrb[0].mxu0
    %v1110 = vadd.f32 0.0, %v1109
    %v1111 = vpop.f32.mrb[0].mxu0
    %v1112 = vpop.f32.mrb[0].mxu0
    %v1113 = vpop.f32.mrb[0].mxu0
    %1114 = vdwg.mxu0
    %1117 = vrot.lane.b32.xlu0 %v621, 16
    %v1118 = vpop.permute.xlu0 %1117
    %1119 = vrot.lane.b32.xlu0 %v670, 16
    %v1120 = vpop.permute.xlu0 %1119
    %1125 = vrot.lane.b32.xlu0 %v842, 32
    %v1126 = vpop.permute.xlu0 %1125
    %1127 = vrot.lane.b32.xlu0 %v890, 32
    %v1128 = vpop.permute.xlu0 %1127
    %1133 = vrot.lane.b32.xlu0 %v1062, 48
    %v1134 = vpop.permute.xlu0 %1133
    %1135 = vrot.lane.b32.xlu0 %v1110, 48
    %v1136 = vpop.permute.xlu0 %1135
    %v1139 = vsel %vm235, %v400, %v1118
    %v1140 = vsel %vm235, %v446, %v1120
    %vm1141 = vcmask 261120
    %v1142 = vsel %vm1141, %v1139, %v1126
    %v1143 = vsel %vm1141, %v1140, %v1128
    %vm1144 = vcmask 392192
    %v1145 = vsel %vm1144, %v1142, %v1134
    %v1146 = vsel %vm1144, %v1143, %v1136
    %v1147 = vpack.c.bf16 %v1146, %v1145
    %v1156 = vunpack.c.l.b16 %v88
    %v1157 = vunpack.c.l.b16 %v89
    %v1158 = vunpack.c.l.b16 %v90
    %v1159 = vunpack.c.l.b16 %v91
    %v1160 = vunpack.c.l.b16 %v92
    %v1161 = vunpack.c.l.b16 %v93
    %v1162 = vunpack.c.l.b16 %v94
    %v1163 = vunpack.c.l.b16 %v95
    %v1164 = vpack.c.b16 %v1157, %v1156
    %v1165 = vpack.c.b16 %v1159, %v1158
    %v1166 = vpack.c.b16 %v1161, %v1160
    %v1167 = vpack.c.b16 %v1163, %v1162
    %v1173 = vsel %vm28, %v1147, 0
    %1175 = vmatprep.subr.bf16.mxu0 0
    %1176 = vmatpush1.bf16.msra.mxu0 %v1164
    %1177 = vmatprep.subr.bf16.mxu0 0
    %1178 = vmatpush1.bf16.msra.mxu0 %v1165
    %1179 = vmatprep.subr.bf16.mxu0 0
    %1180 = vmatpush1.bf16.msra.mxu0 %v1166
    %1181 = vmatprep.subr.bf16.mxu0 0
    %1182 = vmatpush1.bf16.msra.mxu0 %v1167
    %1183 = vmatprep.subr.bf16.mxu0 0
    %1184 = vmatpush1.bf16.msra.mxu0 0
    %1185 = vmatprep.subr.bf16.mxu0 0
    %1186 = vmatpush1.bf16.msra.mxu0 0
    %1187 = vmatprep.subr.bf16.mxu0 0
    %1188 = vmatpush1.bf16.msra.mxu0 0
    %1189 = vmatprep.subr.bf16.mxu0 0
    %1190 = vmatpush1.bf16.msra.mxu0 0
    %1191 = vmatprep.subr.bf16.mxu0 0
    %1192 = vmatpush1.bf16.msra.mxu0 0
    %1193 = vmatprep.subr.bf16.mxu0 0
    %1194 = vmatpush1.bf16.msra.mxu0 0
    %1195 = vmatprep.subr.bf16.mxu0 0
    %1196 = vmatpush1.bf16.msra.mxu0 0
    %1197 = vmatprep.subr.bf16.mxu0 0
    %1198 = vmatpush1.bf16.msra.mxu0 0
    %1199 = vmatprep.subr.bf16.mxu0 0
    %1200 = vmatpush1.bf16.msra.mxu0 0
    %1201 = vmatprep.subr.bf16.mxu0 0
    %1202 = vmatpush1.bf16.msra.mxu0 0
    %1203 = vmatprep.subr.bf16.mxu0 0
    %1204 = vmatpush1.bf16.msra.mxu0 0
    %1205 = vmatprep.subr.bf16.mxu0 0
    %1206 = vmatpush1.bf16.msra.mxu0 0
    %1207 = vmatprep.mubr.bf16.mxu0 0
    %1208 = vmatmul.mubr.bf16.gmra.mrb[0].mxu0 %v1173
    %v1209 = vpop.f32.mrb[0].mxu0
    %v1210 = vadd.f32 %v121, %v1209
    %v1211 = vpop.f32.mrb[0].mxu0
    %v1212 = vpop.f32.mrb[0].mxu0
    %v1213 = vadd.f32 %v121, %v1212
    %v1214 = vpop.f32.mrb[0].mxu0
    %1215 = vdwg.mxu0
    %v1216 = vadd.f32 %v64, %v1210
    %v1217 = vadd.f32 %v65, %v1213
    %v1218 = vsel %vm28, %v1216, 0.0
    %1219 = vadd.xlane.f32.xlu0 %v1218
    %v1220 = vpop.xlane.xlu0 %1219
    %v1221 = vsel %vm28, %v1217, 0.0
    %1222 = vadd.xlane.f32.xlu0 %v1221
    %v1223 = vpop.xlane.xlu0 %1222
    %v1224 = vmul.f32 %v1220, %v35
    %v1225 = vmul.f32 %v1223, %v35
    %v1226 = vmul.f32 %v1216, %v1216
    %v1227 = vmul.f32 %v1217, %v1217
    %v1228 = vsel %vm28, %v1226, 0.0
    %1229 = vadd.xlane.f32.xlu0 %v1228
    %v1230 = vpop.xlane.xlu0 %1229
    %v1231 = vsel %vm28, %v1227, 0.0
    %1232 = vadd.xlane.f32.xlu0 %v1231
    %v1233 = vpop.xlane.xlu0 %1232
    %v1234 = vmul.f32 %v1230, %v35
    %v1235 = vmul.f32 %v1233, %v35
    %v1236 = vmul.f32 %v1224, %v1224
    %v1237 = vmul.f32 %v1225, %v1225
    %v1238 = vsub.f32 %v1234, %v1236
    %v1239 = vsub.f32 %v1235, %v1237
    %v1240 = vadd.f32 %v1238, 1e-05
    %v1241 = vadd.f32 %v1239, 1e-05
    %v1242 = vrsqrt.pop %v1240
    %v1243 = vrsqrt.pop %v1241
    %v1244 = vmul.f32 %v122, %v1242
    %v1245 = vmul.f32 %v122, %v1243
    %v1246 = vmul.f32 %v1216, %v1244
    %v1247 = vmul.f32 %v1217, %v1245
    %v1248 = vmul.f32 %v1224, %v1244
    %v1249 = vmul.f32 %v1225, %v1245
    %v1250 = vsub.f32 %v123, %v1248
    %v1251 = vsub.f32 %v123, %v1249
    %v1252 = vadd.f32 %v1246, %v1250
    %v1253 = vadd.f32 %v1247, %v1251
    %v1254 = vpack.c.bf16 %v1253, %v1252
    %v1263 = vunpack.c.l.b16 %v96
    %v1264 = vunpack.c.l.b16 %v97
    %v1265 = vunpack.c.l.b16 %v98
    %v1266 = vunpack.c.l.b16 %v99
    %v1267 = vunpack.c.l.b16 %v100
    %v1268 = vunpack.c.l.b16 %v101
    %v1269 = vunpack.c.l.b16 %v102
    %v1270 = vunpack.c.l.b16 %v103
    %v1271 = vpack.c.b16 %v1264, %v1263
    %v1272 = vpack.c.b16 %v1266, %v1265
    %v1273 = vpack.c.b16 %v1268, %v1267
    %v1274 = vpack.c.b16 %v1270, %v1269
    %v1280 = vsel %vm28, %v1254, 0
    %1282 = vmatprep.subr.bf16.mxu0 0
    %1283 = vmatpush1.bf16.msra.mxu0 %v1271
    %1284 = vmatprep.subr.bf16.mxu0 0
    %1285 = vmatpush1.bf16.msra.mxu0 %v1272
    %1286 = vmatprep.subr.bf16.mxu0 0
    %1287 = vmatpush1.bf16.msra.mxu0 %v1273
    %1288 = vmatprep.subr.bf16.mxu0 0
    %1289 = vmatpush1.bf16.msra.mxu0 %v1274
    %1290 = vmatprep.subr.bf16.mxu0 0
    %1291 = vmatpush1.bf16.msra.mxu0 0
    %1292 = vmatprep.subr.bf16.mxu0 0
    %1293 = vmatpush1.bf16.msra.mxu0 0
    %1294 = vmatprep.subr.bf16.mxu0 0
    %1295 = vmatpush1.bf16.msra.mxu0 0
    %1296 = vmatprep.subr.bf16.mxu0 0
    %1297 = vmatpush1.bf16.msra.mxu0 0
    %1298 = vmatprep.subr.bf16.mxu0 0
    %1299 = vmatpush1.bf16.msra.mxu0 0
    %1300 = vmatprep.subr.bf16.mxu0 0
    %1301 = vmatpush1.bf16.msra.mxu0 0
    %1302 = vmatprep.subr.bf16.mxu0 0
    %1303 = vmatpush1.bf16.msra.mxu0 0
    %1304 = vmatprep.subr.bf16.mxu0 0
    %1305 = vmatpush1.bf16.msra.mxu0 0
    %1306 = vmatprep.subr.bf16.mxu0 0
    %1307 = vmatpush1.bf16.msra.mxu0 0
    %1308 = vmatprep.subr.bf16.mxu0 0
    %1309 = vmatpush1.bf16.msra.mxu0 0
    %1310 = vmatprep.subr.bf16.mxu0 0
    %1311 = vmatpush1.bf16.msra.mxu0 0
    %1312 = vmatprep.subr.bf16.mxu0 0
    %1313 = vmatpush1.bf16.msra.mxu0 0
    %1314 = vmatprep.mubr.bf16.mxu0 0
    %1315 = vmatmul.mubr.bf16.gmra.mrb[0].mxu0 %v1280
    %v1316 = vpop.f32.mrb[0].mxu0
    %v1317 = vadd.f32 %v124, %v1316
    %v1318 = vpop.f32.mrb[0].mxu0
    %v1319 = vpop.f32.mrb[0].mxu0
    %v1320 = vadd.f32 %v124, %v1319
    %v1321 = vpop.f32.mrb[0].mxu0
    %1322 = vdwg.mxu0
    %v1323 = vmul.f32 %v1317, %v1317
    %v1324 = vmul.f32 %v1320, %v1320
    %v1325 = vmul.f32 %v1317, %v1323
    %v1326 = vmul.f32 %v1320, %v1324
    %v1327 = vmul.f32 %v1325, 0.044715
    %v1328 = vmul.f32 %v1326, 0.044715
    %v1329 = vadd.f32 %v1317, %v1327
    %v1330 = vadd.f32 %v1320, %v1328
    %v1331 = vmul.f32 %v1329, 0.7978846
    %v1332 = vmul.f32 %v1330, 0.7978846
    %v1333 = vtanh.pop %v1331
    %v1334 = vtanh.pop %v1332
    %v1335 = vadd.f32 %v1333, 1.0
    %v1336 = vadd.f32 %v1334, 1.0
    %v1337 = vmul.f32 %v1335, 0.5
    %v1338 = vmul.f32 %v1336, 0.5
    %v1339 = vmul.f32 %v1317, %v1337
    %v1340 = vmul.f32 %v1320, %v1338
    %v1341 = vpack.c.bf16 %v1340, %v1339
    %v1358 = vunpack.c.l.b16 %v104
    %v1359 = vunpack.c.l.b16 %v105
    %v1360 = vunpack.c.l.b16 %v106
    %v1361 = vunpack.c.l.b16 %v107
    %v1362 = vunpack.c.l.b16 %v108
    %v1363 = vunpack.c.l.b16 %v109
    %v1364 = vunpack.c.l.b16 %v110
    %v1365 = vunpack.c.l.b16 %v111
    %v1366 = vunpack.c.l.b16 %v112
    %v1367 = vunpack.c.l.b16 %v113
    %v1368 = vunpack.c.l.b16 %v114
    %v1369 = vunpack.c.l.b16 %v115
    %v1370 = vunpack.c.l.b16 %v116
    %v1371 = vunpack.c.l.b16 %v117
    %v1372 = vunpack.c.l.b16 %v118
    %v1373 = vunpack.c.l.b16 %v119
    %v1374 = vpack.c.b16 %v1359, %v1358
    %v1375 = vpack.c.b16 %v1361, %v1360
    %v1376 = vpack.c.b16 %v1363, %v1362
    %v1377 = vpack.c.b16 %v1365, %v1364
    %v1378 = vpack.c.b16 %v1367, %v1366
    %v1379 = vpack.c.b16 %v1369, %v1368
    %v1380 = vpack.c.b16 %v1371, %v1370
    %v1381 = vpack.c.b16 %v1373, %v1372
    %1390 = vmatprep.subr.bf16.mxu0 0
    %1391 = vmatpush1.bf16.msra.mxu0 %v1374
    %1392 = vmatprep.subr.bf16.mxu0 0
    %1393 = vmatpush1.bf16.msra.mxu0 %v1375
    %1394 = vmatprep.subr.bf16.mxu0 0
    %1395 = vmatpush1.bf16.msra.mxu0 %v1376
    %1396 = vmatprep.subr.bf16.mxu0 0
    %1397 = vmatpush1.bf16.msra.mxu0 %v1377
    %1398 = vmatprep.subr.bf16.mxu0 0
    %1399 = vmatpush1.bf16.msra.mxu0 %v1378
    %1400 = vmatprep.subr.bf16.mxu0 0
    %1401 = vmatpush1.bf16.msra.mxu0 %v1379
    %1402 = vmatprep.subr.bf16.mxu0 0
    %1403 = vmatpush1.bf16.msra.mxu0 %v1380
    %1404 = vmatprep.subr.bf16.mxu0 0
    %1405 = vmatpush1.bf16.msra.mxu0 %v1381
    %1406 = vmatprep.subr.bf16.mxu0 0
    %1407 = vmatpush1.bf16.msra.mxu0 0
    %1408 = vmatprep.subr.bf16.mxu0 0
    %1409 = vmatpush1.bf16.msra.mxu0 0
    %1410 = vmatprep.subr.bf16.mxu0 0
    %1411 = vmatpush1.bf16.msra.mxu0 0
    %1412 = vmatprep.subr.bf16.mxu0 0
    %1413 = vmatpush1.bf16.msra.mxu0 0
    %1414 = vmatprep.subr.bf16.mxu0 0
    %1415 = vmatpush1.bf16.msra.mxu0 0
    %1416 = vmatprep.subr.bf16.mxu0 0
    %1417 = vmatpush1.bf16.msra.mxu0 0
    %1418 = vmatprep.subr.bf16.mxu0 0
    %1419 = vmatpush1.bf16.msra.mxu0 0
    %1420 = vmatprep.subr.bf16.mxu0 0
    %1421 = vmatpush1.bf16.msra.mxu0 0
    %1422 = vmatprep.mubr.bf16.mxu0 0
    %1423 = vmatmul.mubr.bf16.gmra.mrb[0].mxu0 %v1341
    %v1424 = vpop.f32.mrb[0].mxu0
    %v1425 = vadd.f32 %v125, %v1424
    %v1426 = vpop.f32.mrb[0].mxu0
    %v1427 = vpop.f32.mrb[0].mxu0
    %v1428 = vadd.f32 %v125, %v1427
    %v1429 = vpop.f32.mrb[0].mxu0
    %1430 = vdwg.mxu0
    %v1431 = vadd.f32 %v1252, %v1425
    %v1432 = vadd.f32 %v1253, %v1428
    %v1433 = vsel %vm28, %v1431, 0.0
    %1434 = vadd.xlane.f32.xlu0 %v1433
    %v1435 = vpop.xlane.xlu0 %1434
    %v1436 = vsel %vm28, %v1432, 0.0
    %1437 = vadd.xlane.f32.xlu0 %v1436
    %v1438 = vpop.xlane.xlu0 %1437
    %v1439 = vmul.f32 %v1435, %v35
    %v1440 = vmul.f32 %v1438, %v35
    %v1441 = vmul.f32 %v1431, %v1431
    %v1442 = vmul.f32 %v1432, %v1432
    %v1443 = vsel %vm28, %v1441, 0.0
    %1444 = vadd.xlane.f32.xlu0 %v1443
    %v1445 = vpop.xlane.xlu0 %1444
    %v1446 = vsel %vm28, %v1442, 0.0
    %1447 = vadd.xlane.f32.xlu0 %v1446
    %v1448 = vpop.xlane.xlu0 %1447
    %v1449 = vmul.f32 %v1445, %v35
    %v1450 = vmul.f32 %v1448, %v35
    %v1451 = vmul.f32 %v1439, %v1439
    %v1452 = vmul.f32 %v1440, %v1440
    %v1453 = vsub.f32 %v1449, %v1451
    %v1454 = vsub.f32 %v1450, %v1452
    %v1455 = vadd.f32 %v1453, 1e-05
    %v1456 = vadd.f32 %v1454, 1e-05
    %v1457 = vrsqrt.pop %v1455
    %v1458 = vrsqrt.pop %v1456
    %v1459 = vmul.f32 %v126, %v1457
    %v1460 = vmul.f32 %v126, %v1458
    %v1461 = vmul.f32 %v1431, %v1459
    %v1462 = vmul.f32 %v1432, %v1460
    %v1463 = vmul.f32 %v1439, %v1459
    %v1464 = vmul.f32 %v1440, %v1460
    %v1465 = vsub.f32 %v127, %v1463
    %v1466 = vsub.f32 %v127, %v1464
    %v1467 = vadd.f32 %v1461, %v1465
    %v1468 = vadd.f32 %v1462, %v1466
    %s1469 = scalar_lea.vmem %s2, 160
    %v1470 = vld [vmem:[%s1469] sm:$0xff]
    %v1471 = vld [vmem:[%s1469 + $0x14] sm:$0xff]
    %v1472 = vld [vmem:[%s1469 + $0x28] sm:$0xff]
    %v1473 = vld [vmem:[%s1469 + $0x3c] sm:$0xff]
    %v1474 = vld [vmem:[%s1469 + $0x50] sm:$0xff]
    %v1475 = vld [vmem:[%s1469 + $0x64] sm:$0xff]
    %v1476 = vld [vmem:[%s1469 + $0x78] sm:$0xff]
    %v1477 = vld [vmem:[%s1469 + $0x8c] sm:$0xff]
    %v1478 = vld [vmem:[%s1469 + $0x8] sm:$0xf]
    %v1479 = vld [vmem:[%s1469 + $0x1c] sm:$0xf]
    %v1480 = vld [vmem:[%s1469 + $0x30] sm:$0xf]
    %v1481 = vld [vmem:[%s1469 + $0x44] sm:$0xf]
    %v1482 = vld [vmem:[%s1469 + $0x58] sm:$0xf]
    %v1483 = vld [vmem:[%s1469 + $0x6c] sm:$0xf]
    %v1484 = vld [vmem:[%s1469 + $0x80] sm:$0xf]
    %v1485 = vld [vmem:[%s1469 + $0x94] sm:$0xf]
    %v1486 = vld [vmem:[%s1469 + $0xc] sm:$0xf]
    %v1487 = vld [vmem:[%s1469 + $0x20] sm:$0xf]
    %v1488 = vld [vmem:[%s1469 + $0x34] sm:$0xf]
    %v1489 = vld [vmem:[%s1469 + $0x48] sm:$0xf]
    %v1490 = vld [vmem:[%s1469 + $0x5c] sm:$0xf]
    %v1491 = vld [vmem:[%s1469 + $0x70] sm:$0xf]
    %v1492 = vld [vmem:[%s1469 + $0x84] sm:$0xf]
    %v1493 = vld [vmem:[%s1469 + $0x98] sm:$0xf]
    %s1494 = scalar_lea.vmem %s3, 64
    %v1495 = vld [vmem:[%s1494] sm:$0xf]
    %v1496 = vld [vmem:[%s1494 + $0x4] sm:$0xf]
    %v1497 = vld [vmem:[%s1494 + $0x8] sm:$0xf]
    %v1498 = vld [vmem:[%s1494 + $0xc] sm:$0xf]
    %v1499 = vld [vmem:[%s1494 + $0x10] sm:$0xf]
    %v1500 = vld [vmem:[%s1494 + $0x14] sm:$0xf]
    %v1501 = vld [vmem:[%s1494 + $0x18] sm:$0xf]
    %v1502 = vld [vmem:[%s1494 + $0x1c] sm:$0xf]
    %v1503 = vld [vmem:[%s1494 + $0x20] sm:$0xf]
    %v1504 = vld [vmem:[%s1494 + $0x24] sm:$0xf]
    %v1505 = vld [vmem:[%s1494 + $0x28] sm:$0xf]
    %v1506 = vld [vmem:[%s1494 + $0x2c] sm:$0xf]
    %v1507 = vld [vmem:[%s1494 + $0x30] sm:$0xf]
    %v1508 = vld [vmem:[%s1494 + $0x34] sm:$0xf]
    %v1509 = vld [vmem:[%s1494 + $0x38] sm:$0xf]
    %v1510 = vld [vmem:[%s1494 + $0x3c] sm:$0xf]
    %s1511 = scalar_lea.vmem %s4, 16
    %v1512 = vld [vmem:[%s1511] ss:$8 sm:$0x3]
    %v1513 = vld [vmem:[%s1511 + $0x1] ss:$0 sm:$0xff]
    %v1514 = vld [vmem:[%s1511 + $0x2] ss:$0 sm:$0xff]
    %v1515 = vld [vmem:[%s1511 + $0x3] ss:$0 sm:$0xff]
    %v1516 = vld [vmem:[%s1511 + $0x4] ss:$0 sm:$0xff]
    %v1517 = vld [vmem:[%s1511 + $0x5] ss:$0 sm:$0xff]
    %v1518 = vld [vmem:[%s1511 + $0x6] ss:$0 sm:$0xff]
    %v1519 = vld [vmem:[%s1511 + $0x7] ss:$0 sm:$0xff]
    %v1520 = vpack.c.bf16 %v1468, %v1467
    %v1522 = vlaneseq
    %v1523 = vshrl.u32 %v1522, 7
    %v1524 = vsub.s32 0, %v1523
    %v1525 = vrot.slane %v1512, %v1524
    %v1526 = vlaneseq
    %v1527 = vshrl.u32 %v1526, 7
    %v1528 = vsub.s32 1, %v1527
    %v1529 = vrot.slane %v1512, %v1528
    %v1540 = vunpack.c.l.b16 %v1470
    %v1541 = vunpack.c.h.b16 %v1470
    %v1542 = vunpack.c.l.b16 %v1471
    %v1543 = vunpack.c.h.b16 %v1471
    %v1544 = vunpack.c.l.b16 %v1472
    %v1545 = vunpack.c.h.b16 %v1472
    %v1546 = vunpack.c.l.b16 %v1473
    %v1547 = vunpack.c.h.b16 %v1473
    %v1548 = vunpack.c.l.b16 %v1474
    %v1549 = vunpack.c.h.b16 %v1474
    %v1550 = vunpack.c.l.b16 %v1475
    %v1551 = vunpack.c.h.b16 %v1475
    %v1552 = vunpack.c.l.b16 %v1476
    %v1553 = vunpack.c.h.b16 %v1476
    %v1554 = vunpack.c.l.b16 %v1477
    %v1555 = vunpack.c.h.b16 %v1477
    %v1556 = vpack.c.b16 %v1542, %v1540
    %v1557 = vpack.c.b16 %v1543, %v1541
    %v1558 = vpack.c.b16 %v1546, %v1544
    %v1559 = vpack.c.b16 %v1547, %v1545
    %v1560 = vpack.c.b16 %v1550, %v1548
    %v1561 = vpack.c.b16 %v1551, %v1549
    %v1562 = vpack.c.b16 %v1554, %v1552
    %v1563 = vpack.c.b16 %v1555, %v1553
    %v1573 = vsel %vm28, %v1520, 0
    %1575 = vmatprep.subr.bf16.mxu0 %v1557
    %1576 = vmatpush1.bf16.msra.mxu0 %v1556
    %1577 = vmatprep.subr.bf16.mxu0 %v1559
    %1578 = vmatpush1.bf16.msra.mxu0 %v1558
    %1579 = vmatprep.subr.bf16.mxu0 %v1561
    %1580 = vmatpush1.bf16.msra.mxu0 %v1560
    %1581 = vmatprep.subr.bf16.mxu0 %v1563
    %1582 = vmatpush1.bf16.msra.mxu0 %v1562
    %1583 = vmatprep.subr.bf16.mxu0 0
    %1584 = vmatpush1.bf16.msra.mxu0 0
    %1585 = vmatprep.subr.bf16.mxu0 0
    %1586 = vmatpush1.bf16.msra.mxu0 0
    %1587 = vmatprep.subr.bf16.mxu0 0
    %1588 = vmatpush1.bf16.msra.mxu0 0
    %1589 = vmatprep.subr.bf16.mxu0 0
    %1590 = vmatpush1.bf16.msra.mxu0 0
    %1591 = vmatprep.subr.bf16.mxu0 0
    %1592 = vmatpush1.bf16.msra.mxu0 0
    %1593 = vmatprep.subr.bf16.mxu0 0
    %1594 = vmatpush1.bf16.msra.mxu0 0
    %1595 = vmatprep.subr.bf16.mxu0 0
    %1596 = vmatpush1.bf16.msra.mxu0 0
    %1597 = vmatprep.subr.bf16.mxu0 0
    %1598 = vmatpush1.bf16.msra.mxu0 0
    %1599 = vmatprep.subr.bf16.mxu0 0
    %1600 = vmatpush1.bf16.msra.mxu0 0
    %1601 = vmatprep.subr.bf16.mxu0 0
    %1602 = vmatpush1.bf16.msra.mxu0 0
    %1603 = vmatprep.subr.bf16.mxu0 0
    %1604 = vmatpush1.bf16.msra.mxu0 0
    %1605 = vmatprep.subr.bf16.mxu0 0
    %1606 = vmatpush1.bf16.msra.mxu0 0
    %1607 = vmatprep.mubr.bf16.mxu0 0
    %1608 = vmatmul.mubr.bf16.gmra.mrb[0].mxu0 %v1573
    %v1609 = vpop.f32.mrb[0].mxu0
    %v1610 = vadd.f32 %v1525, %v1609
    %v1611 = vpop.f32.mrb[0].mxu0
    %v1612 = vadd.f32 %v1529, %v1611
    %v1613 = vpop.f32.mrb[0].mxu0
    %v1614 = vadd.f32 %v1525, %v1613
    %v1615 = vpop.f32.mrb[0].mxu0
    %v1616 = vadd.f32 %v1529, %v1615
    %1617 = vdwg.mxu0
    %v1618 = vmul.f32 %v1610, 0.25
    %v1619 = vmul.f32 %v1614, 0.25
    %v1620 = vpack.c.bf16 %v1618, %v1618
    %v1621 = vpack.c.bf16 %v1619, %v1619
    %v1622 = vpack.c.bf16 %v1610, %v1610
    %v1623 = vpack.c.bf16 %v1614, %v1614
    %1625 = vrot.lane.b32.xlu0 %v1622, 64
    %v1626 = vpop.permute.xlu0 %1625
    %v1628 = vsel %vm235, %v1620, 0
    %v1631 = vsel %vm235, %v1626, 0
    %1633 = vmatprep.subr.bf16.mxu0 0
    %1634 = vmatpush1.bf16.xpose.msra.mxu0 %v1631
    %1635 = vmatprep.subr.bf16.mxu0 0
    %1636 = vmatpush1.bf16.xpose.msra.mxu0 0
    %1637 = vmatprep.subr.bf16.mxu0 0
    %1638 = vmatpush1.bf16.xpose.msra.mxu0 0
    %1639 = vmatprep.subr.bf16.mxu0 0
    %1640 = vmatpush1.bf16.xpose.msra.mxu0 0
    %1641 = vmatprep.subr.bf16.mxu0 0
    %1642 = vmatpush1.bf16.xpose.msra.mxu0 0
    %1643 = vmatprep.subr.bf16.mxu0 0
    %1644 = vmatpush1.bf16.xpose.msra.mxu0 0
    %1645 = vmatprep.subr.bf16.mxu0 0
    %1646 = vmatpush1.bf16.xpose.msra.mxu0 0
    %1647 = vmatprep.subr.bf16.mxu0 0
    %1648 = vmatpush1.bf16.xpose.msra.mxu0 0
    %1649 = vmatprep.subr.bf16.mxu0 0
    %1650 = vmatpush1.bf16.xpose.msra.mxu0 0
    %1651 = vmatprep.subr.bf16.mxu0 0
    %1652 = vmatpush1.bf16.xpose.msra.mxu0 0
    %1653 = vmatprep.subr.bf16.mxu0 0
    %1654 = vmatpush1.bf16.xpose.msra.mxu0 0
    %1655 = vmatprep.subr.bf16.mxu0 0
    %1656 = vmatpush1.bf16.xpose.msra.mxu0 0
    %1657 = vmatprep.subr.bf16.mxu0 0
    %1658 = vmatpush1.bf16.xpose.msra.mxu0 0
    %1659 = vmatprep.subr.bf16.mxu0 0
    %1660 = vmatpush1.bf16.xpose.msra.mxu0 0
    %1661 = vmatprep.subr.bf16.mxu0 0
    %1662 = vmatpush1.bf16.xpose.msra.mxu0 0
    %1663 = vmatprep.subr.bf16.mxu0 0
    %1664 = vmatpush1.bf16.xpose.msra.mxu0 0
    %1665 = vmatprep.mubr.bf16.mxu0 0
    %1666 = vmatmul.mubr.bf16.gmra.mrb[0].mxu0 %v1628
    %v1667 = vpop.f32.mrb[0].mxu0
    %v1668 = vadd.f32 %v73, %v1667
    %v1669 = vpop.f32.mrb[0].mxu0
    %v1670 = vpop.f32.mrb[0].mxu0
    %v1671 = vpop.f32.mrb[0].mxu0
    %1672 = vdwg.mxu0
    %1674 = vrot.lane.b32.xlu0 %v1623, 64
    %v1675 = vpop.permute.xlu0 %1674
    %v1677 = vsel %vm235, %v1621, 0
    %v1680 = vsel %vm235, %v1675, 0
    %1682 = vmatprep.subr.bf16.mxu0 0
    %1683 = vmatpush1.bf16.xpose.msra.mxu0 %v1680
    %1684 = vmatprep.subr.bf16.mxu0 0
    %1685 = vmatpush1.bf16.xpose.msra.mxu0 0
    %1686 = vmatprep.subr.bf16.mxu0 0
    %1687 = vmatpush1.bf16.xpose.msra.mxu0 0
    %1688 = vmatprep.subr.bf16.mxu0 0
    %1689 = vmatpush1.bf16.xpose.msra.mxu0 0
    %1690 = vmatprep.subr.bf16.mxu0 0
    %1691 = vmatpush1.bf16.xpose.msra.mxu0 0
    %1692 = vmatprep.subr.bf16.mxu0 0
    %1693 = vmatpush1.bf16.xpose.msra.mxu0 0
    %1694 = vmatprep.subr.bf16.mxu0 0
    %1695 = vmatpush1.bf16.xpose.msra.mxu0 0
    %1696 = vmatprep.subr.bf16.mxu0 0
    %1697 = vmatpush1.bf16.xpose.msra.mxu0 0
    %1698 = vmatprep.subr.bf16.mxu0 0
    %1699 = vmatpush1.bf16.xpose.msra.mxu0 0
    %1700 = vmatprep.subr.bf16.mxu0 0
    %1701 = vmatpush1.bf16.xpose.msra.mxu0 0
    %1702 = vmatprep.subr.bf16.mxu0 0
    %1703 = vmatpush1.bf16.xpose.msra.mxu0 0
    %1704 = vmatprep.subr.bf16.mxu0 0
    %1705 = vmatpush1.bf16.xpose.msra.mxu0 0
    %1706 = vmatprep.subr.bf16.mxu0 0
    %1707 = vmatpush1.bf16.xpose.msra.mxu0 0
    %1708 = vmatprep.subr.bf16.mxu0 0
    %1709 = vmatpush1.bf16.xpose.msra.mxu0 0
    %1710 = vmatprep.subr.bf16.mxu0 0
    %1711 = vmatpush1.bf16.xpose.msra.mxu0 0
    %1712 = vmatprep.subr.bf16.mxu0 0
    %1713 = vmatpush1.bf16.xpose.msra.mxu0 0
    %1714 = vmatprep.mubr.bf16.mxu0 0
    %1715 = vmatmul.mubr.bf16.gmra.mrb[0].mxu0 %v1677
    %v1716 = vpop.f32.mrb[0].mxu0
    %v1717 = vadd.f32 %v77, %v1716
    %v1718 = vpop.f32.mrb[0].mxu0
    %v1719 = vpop.f32.mrb[0].mxu0
    %v1720 = vpop.f32.mrb[0].mxu0
    %1721 = vdwg.mxu0
    %v1722 = vsel %vm331, %v1668, -inf
    %1723 = vmax.xlane.f32.xlu0 %v1722
    %v1724 = vpop.xlane.xlu0 %1723
    %v1725 = vsel %vm331, %v1717, -inf
    %1726 = vmax.xlane.f32.xlu0 %v1725
    %v1727 = vpop.xlane.xlu0 %1726
    %v1728 = vsub.f32 %v1668, %v1724
    %v1729 = vsub.f32 %v1717, %v1727
    %v1730 = vmul.f32 %v1728, 1.442695
    %v1731 = vpow.pop %v1730
    %v1732 = vmul.f32 %v1729, 1.442695
    %v1733 = vpow.pop %v1732
    %v1734 = vsel %vm331, %v1731, 0.0
    %1735 = vadd.xlane.f32.xlu0 %v1734
    %v1736 = vpop.xlane.xlu0 %1735
    %v1737 = vsel %vm331, %v1733, 0.0
    %1738 = vadd.xlane.f32.xlu0 %v1737
    %v1739 = vpop.xlane.xlu0 %1738
    %v1740 = vrcp.pop %v1736
    %v1741 = vrcp.pop %v1739
    %v1742 = vmul.f32 %v1731, %v1740
    %v1743 = vmul.f32 %v1733, %v1741
    %v1744 = vpack.c.bf16 %v1742, %v1742
    %v1745 = vpack.c.bf16 %v1743, %v1743
    %v1746 = vpack.c.bf16 %v1612, %v1612
    %v1747 = vpack.c.bf16 %v1616, %v1616
    %v1749 = vsel %vm331, %v1744, 0
    %v1752 = vsel %vm361, %v1746, 0
    %1754 = vmatprep.subr.bf16.mxu0 0
    %1755 = vmatpush1.bf16.msra.mxu0 %v1752
    %1756 = vmatprep.subr.bf16.mxu0 0
    %1757 = vmatpush1.bf16.msra.mxu0 0
    %1758 = vmatprep.subr.bf16.mxu0 0
    %1759 = vmatpush1.bf16.msra.mxu0 0
    %1760 = vmatprep.subr.bf16.mxu0 0
    %1761 = vmatpush1.bf16.msra.mxu0 0
    %1762 = vmatprep.subr.bf16.mxu0 0
    %1763 = vmatpush1.bf16.msra.mxu0 0
    %1764 = vmatprep.subr.bf16.mxu0 0
    %1765 = vmatpush1.bf16.msra.mxu0 0
    %1766 = vmatprep.subr.bf16.mxu0 0
    %1767 = vmatpush1.bf16.msra.mxu0 0
    %1768 = vmatprep.subr.bf16.mxu0 0
    %1769 = vmatpush1.bf16.msra.mxu0 0
    %1770 = vmatprep.subr.bf16.mxu0 0
    %1771 = vmatpush1.bf16.msra.mxu0 0
    %1772 = vmatprep.subr.bf16.mxu0 0
    %1773 = vmatpush1.bf16.msra.mxu0 0
    %1774 = vmatprep.subr.bf16.mxu0 0
    %1775 = vmatpush1.bf16.msra.mxu0 0
    %1776 = vmatprep.subr.bf16.mxu0 0
    %1777 = vmatpush1.bf16.msra.mxu0 0
    %1778 = vmatprep.subr.bf16.mxu0 0
    %1779 = vmatpush1.bf16.msra.mxu0 0
    %1780 = vmatprep.subr.bf16.mxu0 0
    %1781 = vmatpush1.bf16.msra.mxu0 0
    %1782 = vmatprep.subr.bf16.mxu0 0
    %1783 = vmatpush1.bf16.msra.mxu0 0
    %1784 = vmatprep.subr.bf16.mxu0 0
    %1785 = vmatpush1.bf16.msra.mxu0 0
    %1786 = vmatprep.mubr.bf16.mxu0 0
    %1787 = vmatmul.mubr.bf16.gmra.mrb[0].mxu0 %v1749
    %v1788 = vpop.f32.mrb[0].mxu0
    %v1789 = vadd.f32 0.0, %v1788
    %v1790 = vpop.f32.mrb[0].mxu0
    %v1791 = vpop.f32.mrb[0].mxu0
    %v1792 = vpop.f32.mrb[0].mxu0
    %1793 = vdwg.mxu0
    %v1795 = vsel %vm331, %v1745, 0
    %v1798 = vsel %vm361, %v1747, 0
    %1800 = vmatprep.subr.bf16.mxu0 0
    %1801 = vmatpush1.bf16.msra.mxu0 %v1798
    %1802 = vmatprep.subr.bf16.mxu0 0
    %1803 = vmatpush1.bf16.msra.mxu0 0
    %1804 = vmatprep.subr.bf16.mxu0 0
    %1805 = vmatpush1.bf16.msra.mxu0 0
    %1806 = vmatprep.subr.bf16.mxu0 0
    %1807 = vmatpush1.bf16.msra.mxu0 0
    %1808 = vmatprep.subr.bf16.mxu0 0
    %1809 = vmatpush1.bf16.msra.mxu0 0
    %1810 = vmatprep.subr.bf16.mxu0 0
    %1811 = vmatpush1.bf16.msra.mxu0 0
    %1812 = vmatprep.subr.bf16.mxu0 0
    %1813 = vmatpush1.bf16.msra.mxu0 0
    %1814 = vmatprep.subr.bf16.mxu0 0
    %1815 = vmatpush1.bf16.msra.mxu0 0
    %1816 = vmatprep.subr.bf16.mxu0 0
    %1817 = vmatpush1.bf16.msra.mxu0 0
    %1818 = vmatprep.subr.bf16.mxu0 0
    %1819 = vmatpush1.bf16.msra.mxu0 0
    %1820 = vmatprep.subr.bf16.mxu0 0
    %1821 = vmatpush1.bf16.msra.mxu0 0
    %1822 = vmatprep.subr.bf16.mxu0 0
    %1823 = vmatpush1.bf16.msra.mxu0 0
    %1824 = vmatprep.subr.bf16.mxu0 0
    %1825 = vmatpush1.bf16.msra.mxu0 0
    %1826 = vmatprep.subr.bf16.mxu0 0
    %1827 = vmatpush1.bf16.msra.mxu0 0
    %1828 = vmatprep.subr.bf16.mxu0 0
    %1829 = vmatpush1.bf16.msra.mxu0 0
    %1830 = vmatprep.subr.bf16.mxu0 0
    %1831 = vmatpush1.bf16.msra.mxu0 0
    %1832 = vmatprep.mubr.bf16.mxu0 0
    %1833 = vmatmul.mubr.bf16.gmra.mrb[0].mxu0 %v1795
    %v1834 = vpop.f32.mrb[0].mxu0
    %v1835 = vadd.f32 0.0, %v1834
    %v1836 = vpop.f32.mrb[0].mxu0
    %v1837 = vpop.f32.mrb[0].mxu0
    %v1838 = vpop.f32.mrb[0].mxu0
    %1839 = vdwg.mxu0
    %1841 = vrot.lane.b32.xlu0 %v1620, 112
    %v1842 = vpop.permute.xlu0 %1841
    %1843 = vrot.lane.b32.xlu0 %v1622, 48
    %v1844 = vpop.permute.xlu0 %1843
    %v1846 = vsel %vm235, %v1842, 0
    %v1849 = vsel %vm235, %v1844, 0
    %1851 = vmatprep.subr.bf16.mxu0 0
    %1852 = vmatpush1.bf16.xpose.msra.mxu0 %v1849
    %1853 = vmatprep.subr.bf16.mxu0 0
    %1854 = vmatpush1.bf16.xpose.msra.mxu0 0
    %1855 = vmatprep.subr.bf16.mxu0 0
    %1856 = vmatpush1.bf16.xpose.msra.mxu0 0
    %1857 = vmatprep.subr.bf16.mxu0 0
    %1858 = vmatpush1.bf16.xpose.msra.mxu0 0
    %1859 = vmatprep.subr.bf16.mxu0 0
    %1860 = vmatpush1.bf16.xpose.msra.mxu0 0
    %1861 = vmatprep.subr.bf16.mxu0 0
    %1862 = vmatpush1.bf16.xpose.msra.mxu0 0
    %1863 = vmatprep.subr.bf16.mxu0 0
    %1864 = vmatpush1.bf16.xpose.msra.mxu0 0
    %1865 = vmatprep.subr.bf16.mxu0 0
    %1866 = vmatpush1.bf16.xpose.msra.mxu0 0
    %1867 = vmatprep.subr.bf16.mxu0 0
    %1868 = vmatpush1.bf16.xpose.msra.mxu0 0
    %1869 = vmatprep.subr.bf16.mxu0 0
    %1870 = vmatpush1.bf16.xpose.msra.mxu0 0
    %1871 = vmatprep.subr.bf16.mxu0 0
    %1872 = vmatpush1.bf16.xpose.msra.mxu0 0
    %1873 = vmatprep.subr.bf16.mxu0 0
    %1874 = vmatpush1.bf16.xpose.msra.mxu0 0
    %1875 = vmatprep.subr.bf16.mxu0 0
    %1876 = vmatpush1.bf16.xpose.msra.mxu0 0
    %1877 = vmatprep.subr.bf16.mxu0 0
    %1878 = vmatpush1.bf16.xpose.msra.mxu0 0
    %1879 = vmatprep.subr.bf16.mxu0 0
    %1880 = vmatpush1.bf16.xpose.msra.mxu0 0
    %1881 = vmatprep.subr.bf16.mxu0 0
    %1882 = vmatpush1.bf16.xpose.msra.mxu0 0
    %1883 = vmatprep.mubr.bf16.mxu0 0
    %1884 = vmatmul.mubr.bf16.gmra.mrb[0].mxu0 %v1846
    %v1885 = vpop.f32.mrb[0].mxu0
    %v1886 = vadd.f32 %v73, %v1885
    %v1887 = vpop.f32.mrb[0].mxu0
    %v1888 = vpop.f32.mrb[0].mxu0
    %v1889 = vpop.f32.mrb[0].mxu0
    %1890 = vdwg.mxu0
    %1892 = vrot.lane.b32.xlu0 %v1621, 112
    %v1893 = vpop.permute.xlu0 %1892
    %1894 = vrot.lane.b32.xlu0 %v1623, 48
    %v1895 = vpop.permute.xlu0 %1894
    %v1897 = vsel %vm235, %v1893, 0
    %v1900 = vsel %vm235, %v1895, 0
    %1902 = vmatprep.subr.bf16.mxu0 0
    %1903 = vmatpush1.bf16.xpose.msra.mxu0 %v1900
    %1904 = vmatprep.subr.bf16.mxu0 0
    %1905 = vmatpush1.bf16.xpose.msra.mxu0 0
    %1906 = vmatprep.subr.bf16.mxu0 0
    %1907 = vmatpush1.bf16.xpose.msra.mxu0 0
    %1908 = vmatprep.subr.bf16.mxu0 0
    %1909 = vmatpush1.bf16.xpose.msra.mxu0 0
    %1910 = vmatprep.subr.bf16.mxu0 0
    %1911 = vmatpush1.bf16.xpose.msra.mxu0 0
    %1912 = vmatprep.subr.bf16.mxu0 0
    %1913 = vmatpush1.bf16.xpose.msra.mxu0 0
    %1914 = vmatprep.subr.bf16.mxu0 0
    %1915 = vmatpush1.bf16.xpose.msra.mxu0 0
    %1916 = vmatprep.subr.bf16.mxu0 0
    %1917 = vmatpush1.bf16.xpose.msra.mxu0 0
    %1918 = vmatprep.subr.bf16.mxu0 0
    %1919 = vmatpush1.bf16.xpose.msra.mxu0 0
    %1920 = vmatprep.subr.bf16.mxu0 0
    %1921 = vmatpush1.bf16.xpose.msra.mxu0 0
    %1922 = vmatprep.subr.bf16.mxu0 0
    %1923 = vmatpush1.bf16.xpose.msra.mxu0 0
    %1924 = vmatprep.subr.bf16.mxu0 0
    %1925 = vmatpush1.bf16.xpose.msra.mxu0 0
    %1926 = vmatprep.subr.bf16.mxu0 0
    %1927 = vmatpush1.bf16.xpose.msra.mxu0 0
    %1928 = vmatprep.subr.bf16.mxu0 0
    %1929 = vmatpush1.bf16.xpose.msra.mxu0 0
    %1930 = vmatprep.subr.bf16.mxu0 0
    %1931 = vmatpush1.bf16.xpose.msra.mxu0 0
    %1932 = vmatprep.subr.bf16.mxu0 0
    %1933 = vmatpush1.bf16.xpose.msra.mxu0 0
    %1934 = vmatprep.mubr.bf16.mxu0 0
    %1935 = vmatmul.mubr.bf16.gmra.mrb[0].mxu0 %v1897
    %v1936 = vpop.f32.mrb[0].mxu0
    %v1937 = vadd.f32 %v77, %v1936
    %v1938 = vpop.f32.mrb[0].mxu0
    %v1939 = vpop.f32.mrb[0].mxu0
    %v1940 = vpop.f32.mrb[0].mxu0
    %1941 = vdwg.mxu0
    %v1942 = vsel %vm331, %v1886, -inf
    %1943 = vmax.xlane.f32.xlu0 %v1942
    %v1944 = vpop.xlane.xlu0 %1943
    %v1945 = vsel %vm331, %v1937, -inf
    %1946 = vmax.xlane.f32.xlu0 %v1945
    %v1947 = vpop.xlane.xlu0 %1946
    %v1948 = vsub.f32 %v1886, %v1944
    %v1949 = vsub.f32 %v1937, %v1947
    %v1950 = vmul.f32 %v1948, 1.442695
    %v1951 = vpow.pop %v1950
    %v1952 = vmul.f32 %v1949, 1.442695
    %v1953 = vpow.pop %v1952
    %v1954 = vsel %vm331, %v1951, 0.0
    %1955 = vadd.xlane.f32.xlu0 %v1954
    %v1956 = vpop.xlane.xlu0 %1955
    %v1957 = vsel %vm331, %v1953, 0.0
    %1958 = vadd.xlane.f32.xlu0 %v1957
    %v1959 = vpop.xlane.xlu0 %1958
    %v1960 = vrcp.pop %v1956
    %v1961 = vrcp.pop %v1959
    %v1962 = vmul.f32 %v1951, %v1960
    %v1963 = vmul.f32 %v1953, %v1961
    %v1964 = vpack.c.bf16 %v1962, %v1962
    %v1965 = vpack.c.bf16 %v1963, %v1963
    %1967 = vrot.lane.b32.xlu0 %v1746, 112
    %v1968 = vpop.permute.xlu0 %1967
    %v1970 = vsel %vm331, %v1964, 0
    %v1973 = vsel %vm361, %v1968, 0
    %1975 = vmatprep.subr.bf16.mxu0 0
    %1976 = vmatpush1.bf16.msra.mxu0 %v1973
    %1977 = vmatprep.subr.bf16.mxu0 0
    %1978 = vmatpush1.bf16.msra.mxu0 0
    %1979 = vmatprep.subr.bf16.mxu0 0
    %1980 = vmatpush1.bf16.msra.mxu0 0
    %1981 = vmatprep.subr.bf16.mxu0 0
    %1982 = vmatpush1.bf16.msra.mxu0 0
    %1983 = vmatprep.subr.bf16.mxu0 0
    %1984 = vmatpush1.bf16.msra.mxu0 0
    %1985 = vmatprep.subr.bf16.mxu0 0
    %1986 = vmatpush1.bf16.msra.mxu0 0
    %1987 = vmatprep.subr.bf16.mxu0 0
    %1988 = vmatpush1.bf16.msra.mxu0 0
    %1989 = vmatprep.subr.bf16.mxu0 0
    %1990 = vmatpush1.bf16.msra.mxu0 0
    %1991 = vmatprep.subr.bf16.mxu0 0
    %1992 = vmatpush1.bf16.msra.mxu0 0
    %1993 = vmatprep.subr.bf16.mxu0 0
    %1994 = vmatpush1.bf16.msra.mxu0 0
    %1995 = vmatprep.subr.bf16.mxu0 0
    %1996 = vmatpush1.bf16.msra.mxu0 0
    %1997 = vmatprep.subr.bf16.mxu0 0
    %1998 = vmatpush1.bf16.msra.mxu0 0
    %1999 = vmatprep.subr.bf16.mxu0 0
    %2000 = vmatpush1.bf16.msra.mxu0 0
    %2001 = vmatprep.subr.bf16.mxu0 0
    %2002 = vmatpush1.bf16.msra.mxu0 0
    %2003 = vmatprep.subr.bf16.mxu0 0
    %2004 = vmatpush1.bf16.msra.mxu0 0
    %2005 = vmatprep.subr.bf16.mxu0 0
    %2006 = vmatpush1.bf16.msra.mxu0 0
    %2007 = vmatprep.mubr.bf16.mxu0 0
    %2008 = vmatmul.mubr.bf16.gmra.mrb[0].mxu0 %v1970
    %v2009 = vpop.f32.mrb[0].mxu0
    %v2010 = vadd.f32 0.0, %v2009
    %v2011 = vpop.f32.mrb[0].mxu0
    %v2012 = vpop.f32.mrb[0].mxu0
    %v2013 = vpop.f32.mrb[0].mxu0
    %2014 = vdwg.mxu0
    %2016 = vrot.lane.b32.xlu0 %v1747, 112
    %v2017 = vpop.permute.xlu0 %2016
    %v2019 = vsel %vm331, %v1965, 0
    %v2022 = vsel %vm361, %v2017, 0
    %2024 = vmatprep.subr.bf16.mxu0 0
    %2025 = vmatpush1.bf16.msra.mxu0 %v2022
    %2026 = vmatprep.subr.bf16.mxu0 0
    %2027 = vmatpush1.bf16.msra.mxu0 0
    %2028 = vmatprep.subr.bf16.mxu0 0
    %2029 = vmatpush1.bf16.msra.mxu0 0
    %2030 = vmatprep.subr.bf16.mxu0 0
    %2031 = vmatpush1.bf16.msra.mxu0 0
    %2032 = vmatprep.subr.bf16.mxu0 0
    %2033 = vmatpush1.bf16.msra.mxu0 0
    %2034 = vmatprep.subr.bf16.mxu0 0
    %2035 = vmatpush1.bf16.msra.mxu0 0
    %2036 = vmatprep.subr.bf16.mxu0 0
    %2037 = vmatpush1.bf16.msra.mxu0 0
    %2038 = vmatprep.subr.bf16.mxu0 0
    %2039 = vmatpush1.bf16.msra.mxu0 0
    %2040 = vmatprep.subr.bf16.mxu0 0
    %2041 = vmatpush1.bf16.msra.mxu0 0
    %2042 = vmatprep.subr.bf16.mxu0 0
    %2043 = vmatpush1.bf16.msra.mxu0 0
    %2044 = vmatprep.subr.bf16.mxu0 0
    %2045 = vmatpush1.bf16.msra.mxu0 0
    %2046 = vmatprep.subr.bf16.mxu0 0
    %2047 = vmatpush1.bf16.msra.mxu0 0
    %2048 = vmatprep.subr.bf16.mxu0 0
    %2049 = vmatpush1.bf16.msra.mxu0 0
    %2050 = vmatprep.subr.bf16.mxu0 0
    %2051 = vmatpush1.bf16.msra.mxu0 0
    %2052 = vmatprep.subr.bf16.mxu0 0
    %2053 = vmatpush1.bf16.msra.mxu0 0
    %2054 = vmatprep.subr.bf16.mxu0 0
    %2055 = vmatpush1.bf16.msra.mxu0 0
    %2056 = vmatprep.mubr.bf16.mxu0 0
    %2057 = vmatmul.mubr.bf16.gmra.mrb[0].mxu0 %v2019
    %v2058 = vpop.f32.mrb[0].mxu0
    %v2059 = vadd.f32 0.0, %v2058
    %v2060 = vpop.f32.mrb[0].mxu0
    %v2061 = vpop.f32.mrb[0].mxu0
    %v2062 = vpop.f32.mrb[0].mxu0
    %2063 = vdwg.mxu0
    %2064 = vrot.lane.b32.xlu0 %v1620, 96
    %v2065 = vpop.permute.xlu0 %2064
    %2066 = vrot.lane.b32.xlu0 %v1622, 32
    %v2067 = vpop.permute.xlu0 %2066
    %v2069 = vsel %vm235, %v2065, 0
    %v2072 = vsel %vm235, %v2067, 0
    %2074 = vmatprep.subr.bf16.mxu0 0
    %2075 = vmatpush1.bf16.xpose.msra.mxu0 %v2072
    %2076 = vmatprep.subr.bf16.mxu0 0
    %2077 = vmatpush1.bf16.xpose.msra.mxu0 0
    %2078 = vmatprep.subr.bf16.mxu0 0
    %2079 = vmatpush1.bf16.xpose.msra.mxu0 0
    %2080 = vmatprep.subr.bf16.mxu0 0
    %2081 = vmatpush1.bf16.xpose.msra.mxu0 0
    %2082 = vmatprep.subr.bf16.mxu0 0
    %2083 = vmatpush1.bf16.xpose.msra.mxu0 0
    %2084 = vmatprep.subr.bf16.mxu0 0
    %2085 = vmatpush1.bf16.xpose.msra.mxu0 0
    %2086 = vmatprep.subr.bf16.mxu0 0
    %2087 = vmatpush1.bf16.xpose.msra.mxu0 0
    %2088 = vmatprep.subr.bf16.mxu0 0
    %2089 = vmatpush1.bf16.xpose.msra.mxu0 0
    %2090 = vmatprep.subr.bf16.mxu0 0
    %2091 = vmatpush1.bf16.xpose.msra.mxu0 0
    %2092 = vmatprep.subr.bf16.mxu0 0
    %2093 = vmatpush1.bf16.xpose.msra.mxu0 0
    %2094 = vmatprep.subr.bf16.mxu0 0
    %2095 = vmatpush1.bf16.xpose.msra.mxu0 0
    %2096 = vmatprep.subr.bf16.mxu0 0
    %2097 = vmatpush1.bf16.xpose.msra.mxu0 0
    %2098 = vmatprep.subr.bf16.mxu0 0
    %2099 = vmatpush1.bf16.xpose.msra.mxu0 0
    %2100 = vmatprep.subr.bf16.mxu0 0
    %2101 = vmatpush1.bf16.xpose.msra.mxu0 0
    %2102 = vmatprep.subr.bf16.mxu0 0
    %2103 = vmatpush1.bf16.xpose.msra.mxu0 0
    %2104 = vmatprep.subr.bf16.mxu0 0
    %2105 = vmatpush1.bf16.xpose.msra.mxu0 0
    %2106 = vmatprep.mubr.bf16.mxu0 0
    %2107 = vmatmul.mubr.bf16.gmra.mrb[0].mxu0 %v2069
    %v2108 = vpop.f32.mrb[0].mxu0
    %v2109 = vadd.f32 %v73, %v2108
    %v2110 = vpop.f32.mrb[0].mxu0
    %v2111 = vpop.f32.mrb[0].mxu0
    %v2112 = vpop.f32.mrb[0].mxu0
    %2113 = vdwg.mxu0
    %2114 = vrot.lane.b32.xlu0 %v1621, 96
    %v2115 = vpop.permute.xlu0 %2114
    %2116 = vrot.lane.b32.xlu0 %v1623, 32
    %v2117 = vpop.permute.xlu0 %2116
    %v2119 = vsel %vm235, %v2115, 0
    %v2122 = vsel %vm235, %v2117, 0
    %2124 = vmatprep.subr.bf16.mxu0 0
    %2125 = vmatpush1.bf16.xpose.msra.mxu0 %v2122
    %2126 = vmatprep.subr.bf16.mxu0 0
    %2127 = vmatpush1.bf16.xpose.msra.mxu0 0
    %2128 = vmatprep.subr.bf16.mxu0 0
    %2129 = vmatpush1.bf16.xpose.msra.mxu0 0
    %2130 = vmatprep.subr.bf16.mxu0 0
    %2131 = vmatpush1.bf16.xpose.msra.mxu0 0
    %2132 = vmatprep.subr.bf16.mxu0 0
    %2133 = vmatpush1.bf16.xpose.msra.mxu0 0
    %2134 = vmatprep.subr.bf16.mxu0 0
    %2135 = vmatpush1.bf16.xpose.msra.mxu0 0
    %2136 = vmatprep.subr.bf16.mxu0 0
    %2137 = vmatpush1.bf16.xpose.msra.mxu0 0
    %2138 = vmatprep.subr.bf16.mxu0 0
    %2139 = vmatpush1.bf16.xpose.msra.mxu0 0
    %2140 = vmatprep.subr.bf16.mxu0 0
    %2141 = vmatpush1.bf16.xpose.msra.mxu0 0
    %2142 = vmatprep.subr.bf16.mxu0 0
    %2143 = vmatpush1.bf16.xpose.msra.mxu0 0
    %2144 = vmatprep.subr.bf16.mxu0 0
    %2145 = vmatpush1.bf16.xpose.msra.mxu0 0
    %2146 = vmatprep.subr.bf16.mxu0 0
    %2147 = vmatpush1.bf16.xpose.msra.mxu0 0
    %2148 = vmatprep.subr.bf16.mxu0 0
    %2149 = vmatpush1.bf16.xpose.msra.mxu0 0
    %2150 = vmatprep.subr.bf16.mxu0 0
    %2151 = vmatpush1.bf16.xpose.msra.mxu0 0
    %2152 = vmatprep.subr.bf16.mxu0 0
    %2153 = vmatpush1.bf16.xpose.msra.mxu0 0
    %2154 = vmatprep.subr.bf16.mxu0 0
    %2155 = vmatpush1.bf16.xpose.msra.mxu0 0
    %2156 = vmatprep.mubr.bf16.mxu0 0
    %2157 = vmatmul.mubr.bf16.gmra.mrb[0].mxu0 %v2119
    %v2158 = vpop.f32.mrb[0].mxu0
    %v2159 = vadd.f32 %v77, %v2158
    %v2160 = vpop.f32.mrb[0].mxu0
    %v2161 = vpop.f32.mrb[0].mxu0
    %v2162 = vpop.f32.mrb[0].mxu0
    %2163 = vdwg.mxu0
    %v2164 = vsel %vm331, %v2109, -inf
    %2165 = vmax.xlane.f32.xlu0 %v2164
    %v2166 = vpop.xlane.xlu0 %2165
    %v2167 = vsel %vm331, %v2159, -inf
    %2168 = vmax.xlane.f32.xlu0 %v2167
    %v2169 = vpop.xlane.xlu0 %2168
    %v2170 = vsub.f32 %v2109, %v2166
    %v2171 = vsub.f32 %v2159, %v2169
    %v2172 = vmul.f32 %v2170, 1.442695
    %v2173 = vpow.pop %v2172
    %v2174 = vmul.f32 %v2171, 1.442695
    %v2175 = vpow.pop %v2174
    %v2176 = vsel %vm331, %v2173, 0.0
    %2177 = vadd.xlane.f32.xlu0 %v2176
    %v2178 = vpop.xlane.xlu0 %2177
    %v2179 = vsel %vm331, %v2175, 0.0
    %2180 = vadd.xlane.f32.xlu0 %v2179
    %v2181 = vpop.xlane.xlu0 %2180
    %v2182 = vrcp.pop %v2178
    %v2183 = vrcp.pop %v2181
    %v2184 = vmul.f32 %v2173, %v2182
    %v2185 = vmul.f32 %v2175, %v2183
    %v2186 = vpack.c.bf16 %v2184, %v2184
    %v2187 = vpack.c.bf16 %v2185, %v2185
    %2188 = vrot.lane.b32.xlu0 %v1746, 96
    %v2189 = vpop.permute.xlu0 %2188
    %v2191 = vsel %vm331, %v2186, 0
    %v2194 = vsel %vm361, %v2189, 0
    %2196 = vmatprep.subr.bf16.mxu0 0
    %2197 = vmatpush1.bf16.msra.mxu0 %v2194
    %2198 = vmatprep.subr.bf16.mxu0 0
    %2199 = vmatpush1.bf16.msra.mxu0 0
    %2200 = vmatprep.subr.bf16.mxu0 0
    %2201 = vmatpush1.bf16.msra.mxu0 0
    %2202 = vmatprep.subr.bf16.mxu0 0
    %2203 = vmatpush1.bf16.msra.mxu0 0
    %2204 = vmatprep.subr.bf16.mxu0 0
    %2205 = vmatpush1.bf16.msra.mxu0 0
    %2206 = vmatprep.subr.bf16.mxu0 0
    %2207 = vmatpush1.bf16.msra.mxu0 0
    %2208 = vmatprep.subr.bf16.mxu0 0
    %2209 = vmatpush1.bf16.msra.mxu0 0
    %2210 = vmatprep.subr.bf16.mxu0 0
    %2211 = vmatpush1.bf16.msra.mxu0 0
    %2212 = vmatprep.subr.bf16.mxu0 0
    %2213 = vmatpush1.bf16.msra.mxu0 0
    %2214 = vmatprep.subr.bf16.mxu0 0
    %2215 = vmatpush1.bf16.msra.mxu0 0
    %2216 = vmatprep.subr.bf16.mxu0 0
    %2217 = vmatpush1.bf16.msra.mxu0 0
    %2218 = vmatprep.subr.bf16.mxu0 0
    %2219 = vmatpush1.bf16.msra.mxu0 0
    %2220 = vmatprep.subr.bf16.mxu0 0
    %2221 = vmatpush1.bf16.msra.mxu0 0
    %2222 = vmatprep.subr.bf16.mxu0 0
    %2223 = vmatpush1.bf16.msra.mxu0 0
    %2224 = vmatprep.subr.bf16.mxu0 0
    %2225 = vmatpush1.bf16.msra.mxu0 0
    %2226 = vmatprep.subr.bf16.mxu0 0
    %2227 = vmatpush1.bf16.msra.mxu0 0
    %2228 = vmatprep.mubr.bf16.mxu0 0
    %2229 = vmatmul.mubr.bf16.gmra.mrb[0].mxu0 %v2191
    %v2230 = vpop.f32.mrb[0].mxu0
    %v2231 = vadd.f32 0.0, %v2230
    %v2232 = vpop.f32.mrb[0].mxu0
    %v2233 = vpop.f32.mrb[0].mxu0
    %v2234 = vpop.f32.mrb[0].mxu0
    %2235 = vdwg.mxu0
    %2236 = vrot.lane.b32.xlu0 %v1747, 96
    %v2237 = vpop.permute.xlu0 %2236
    %v2239 = vsel %vm331, %v2187, 0
    %v2242 = vsel %vm361, %v2237, 0
    %2244 = vmatprep.subr.bf16.mxu0 0
    %2245 = vmatpush1.bf16.msra.mxu0 %v2242
    %2246 = vmatprep.subr.bf16.mxu0 0
    %2247 = vmatpush1.bf16.msra.mxu0 0
    %2248 = vmatprep.subr.bf16.mxu0 0
    %2249 = vmatpush1.bf16.msra.mxu0 0
    %2250 = vmatprep.subr.bf16.mxu0 0
    %2251 = vmatpush1.bf16.msra.mxu0 0
    %2252 = vmatprep.subr.bf16.mxu0 0
    %2253 = vmatpush1.bf16.msra.mxu0 0
    %2254 = vmatprep.subr.bf16.mxu0 0
    %2255 = vmatpush1.bf16.msra.mxu0 0
    %2256 = vmatprep.subr.bf16.mxu0 0
    %2257 = vmatpush1.bf16.msra.mxu0 0
    %2258 = vmatprep.subr.bf16.mxu0 0
    %2259 = vmatpush1.bf16.msra.mxu0 0
    %2260 = vmatprep.subr.bf16.mxu0 0
    %2261 = vmatpush1.bf16.msra.mxu0 0
    %2262 = vmatprep.subr.bf16.mxu0 0
    %2263 = vmatpush1.bf16.msra.mxu0 0
    %2264 = vmatprep.subr.bf16.mxu0 0
    %2265 = vmatpush1.bf16.msra.mxu0 0
    %2266 = vmatprep.subr.bf16.mxu0 0
    %2267 = vmatpush1.bf16.msra.mxu0 0
    %2268 = vmatprep.subr.bf16.mxu0 0
    %2269 = vmatpush1.bf16.msra.mxu0 0
    %2270 = vmatprep.subr.bf16.mxu0 0
    %2271 = vmatpush1.bf16.msra.mxu0 0
    %2272 = vmatprep.subr.bf16.mxu0 0
    %2273 = vmatpush1.bf16.msra.mxu0 0
    %2274 = vmatprep.subr.bf16.mxu0 0
    %2275 = vmatpush1.bf16.msra.mxu0 0
    %2276 = vmatprep.mubr.bf16.mxu0 0
    %2277 = vmatmul.mubr.bf16.gmra.mrb[0].mxu0 %v2239
    %v2278 = vpop.f32.mrb[0].mxu0
    %v2279 = vadd.f32 0.0, %v2278
    %v2280 = vpop.f32.mrb[0].mxu0
    %v2281 = vpop.f32.mrb[0].mxu0
    %v2282 = vpop.f32.mrb[0].mxu0
    %2283 = vdwg.mxu0
    %2284 = vrot.lane.b32.xlu0 %v1620, 80
    %v2285 = vpop.permute.xlu0 %2284
    %2286 = vrot.lane.b32.xlu0 %v1622, 16
    %v2287 = vpop.permute.xlu0 %2286
    %v2289 = vsel %vm235, %v2285, 0
    %v2292 = vsel %vm235, %v2287, 0
    %2294 = vmatprep.subr.bf16.mxu0 0
    %2295 = vmatpush1.bf16.xpose.msra.mxu0 %v2292
    %2296 = vmatprep.subr.bf16.mxu0 0
    %2297 = vmatpush1.bf16.xpose.msra.mxu0 0
    %2298 = vmatprep.subr.bf16.mxu0 0
    %2299 = vmatpush1.bf16.xpose.msra.mxu0 0
    %2300 = vmatprep.subr.bf16.mxu0 0
    %2301 = vmatpush1.bf16.xpose.msra.mxu0 0
    %2302 = vmatprep.subr.bf16.mxu0 0
    %2303 = vmatpush1.bf16.xpose.msra.mxu0 0
    %2304 = vmatprep.subr.bf16.mxu0 0
    %2305 = vmatpush1.bf16.xpose.msra.mxu0 0
    %2306 = vmatprep.subr.bf16.mxu0 0
    %2307 = vmatpush1.bf16.xpose.msra.mxu0 0
    %2308 = vmatprep.subr.bf16.mxu0 0
    %2309 = vmatpush1.bf16.xpose.msra.mxu0 0
    %2310 = vmatprep.subr.bf16.mxu0 0
    %2311 = vmatpush1.bf16.xpose.msra.mxu0 0
    %2312 = vmatprep.subr.bf16.mxu0 0
    %2313 = vmatpush1.bf16.xpose.msra.mxu0 0
    %2314 = vmatprep.subr.bf16.mxu0 0
    %2315 = vmatpush1.bf16.xpose.msra.mxu0 0
    %2316 = vmatprep.subr.bf16.mxu0 0
    %2317 = vmatpush1.bf16.xpose.msra.mxu0 0
    %2318 = vmatprep.subr.bf16.mxu0 0
    %2319 = vmatpush1.bf16.xpose.msra.mxu0 0
    %2320 = vmatprep.subr.bf16.mxu0 0
    %2321 = vmatpush1.bf16.xpose.msra.mxu0 0
    %2322 = vmatprep.subr.bf16.mxu0 0
    %2323 = vmatpush1.bf16.xpose.msra.mxu0 0
    %2324 = vmatprep.subr.bf16.mxu0 0
    %2325 = vmatpush1.bf16.xpose.msra.mxu0 0
    %2326 = vmatprep.mubr.bf16.mxu0 0
    %2327 = vmatmul.mubr.bf16.gmra.mrb[0].mxu0 %v2289
    %v2328 = vpop.f32.mrb[0].mxu0
    %v2329 = vadd.f32 %v73, %v2328
    %v2330 = vpop.f32.mrb[0].mxu0
    %v2331 = vpop.f32.mrb[0].mxu0
    %v2332 = vpop.f32.mrb[0].mxu0
    %2333 = vdwg.mxu0
    %2334 = vrot.lane.b32.xlu0 %v1621, 80
    %v2335 = vpop.permute.xlu0 %2334
    %2336 = vrot.lane.b32.xlu0 %v1623, 16
    %v2337 = vpop.permute.xlu0 %2336
    %v2339 = vsel %vm235, %v2335, 0
    %v2342 = vsel %vm235, %v2337, 0
    %2344 = vmatprep.subr.bf16.mxu0 0
    %2345 = vmatpush1.bf16.xpose.msra.mxu0 %v2342
    %2346 = vmatprep.subr.bf16.mxu0 0
    %2347 = vmatpush1.bf16.xpose.msra.mxu0 0
    %2348 = vmatprep.subr.bf16.mxu0 0
    %2349 = vmatpush1.bf16.xpose.msra.mxu0 0
    %2350 = vmatprep.subr.bf16.mxu0 0
    %2351 = vmatpush1.bf16.xpose.msra.mxu0 0
    %2352 = vmatprep.subr.bf16.mxu0 0
    %2353 = vmatpush1.bf16.xpose.msra.mxu0 0
    %2354 = vmatprep.subr.bf16.mxu0 0
    %2355 = vmatpush1.bf16.xpose.msra.mxu0 0
    %2356 = vmatprep.subr.bf16.mxu0 0
    %2357 = vmatpush1.bf16.xpose.msra.mxu0 0
    %2358 = vmatprep.subr.bf16.mxu0 0
    %2359 = vmatpush1.bf16.xpose.msra.mxu0 0
    %2360 = vmatprep.subr.bf16.mxu0 0
    %2361 = vmatpush1.bf16.xpose.msra.mxu0 0
    %2362 = vmatprep.subr.bf16.mxu0 0
    %2363 = vmatpush1.bf16.xpose.msra.mxu0 0
    %2364 = vmatprep.subr.bf16.mxu0 0
    %2365 = vmatpush1.bf16.xpose.msra.mxu0 0
    %2366 = vmatprep.subr.bf16.mxu0 0
    %2367 = vmatpush1.bf16.xpose.msra.mxu0 0
    %2368 = vmatprep.subr.bf16.mxu0 0
    %2369 = vmatpush1.bf16.xpose.msra.mxu0 0
    %2370 = vmatprep.subr.bf16.mxu0 0
    %2371 = vmatpush1.bf16.xpose.msra.mxu0 0
    %2372 = vmatprep.subr.bf16.mxu0 0
    %2373 = vmatpush1.bf16.xpose.msra.mxu0 0
    %2374 = vmatprep.subr.bf16.mxu0 0
    %2375 = vmatpush1.bf16.xpose.msra.mxu0 0
    %2376 = vmatprep.mubr.bf16.mxu0 0
    %2377 = vmatmul.mubr.bf16.gmra.mrb[0].mxu0 %v2339
    %v2378 = vpop.f32.mrb[0].mxu0
    %v2379 = vadd.f32 %v77, %v2378
    %v2380 = vpop.f32.mrb[0].mxu0
    %v2381 = vpop.f32.mrb[0].mxu0
    %v2382 = vpop.f32.mrb[0].mxu0
    %2383 = vdwg.mxu0
    %v2384 = vsel %vm331, %v2329, -inf
    %2385 = vmax.xlane.f32.xlu0 %v2384
    %v2386 = vpop.xlane.xlu0 %2385
    %v2387 = vsel %vm331, %v2379, -inf
    %2388 = vmax.xlane.f32.xlu0 %v2387
    %v2389 = vpop.xlane.xlu0 %2388
    %v2390 = vsub.f32 %v2329, %v2386
    %v2391 = vsub.f32 %v2379, %v2389
    %v2392 = vmul.f32 %v2390, 1.442695
    %v2393 = vpow.pop %v2392
    %v2394 = vmul.f32 %v2391, 1.442695
    %v2395 = vpow.pop %v2394
    %v2396 = vsel %vm331, %v2393, 0.0
    %2397 = vadd.xlane.f32.xlu0 %v2396
    %v2398 = vpop.xlane.xlu0 %2397
    %v2399 = vsel %vm331, %v2395, 0.0
    %2400 = vadd.xlane.f32.xlu0 %v2399
    %v2401 = vpop.xlane.xlu0 %2400
    %v2402 = vrcp.pop %v2398
    %v2403 = vrcp.pop %v2401
    %v2404 = vmul.f32 %v2393, %v2402
    %v2405 = vmul.f32 %v2395, %v2403
    %v2406 = vpack.c.bf16 %v2404, %v2404
    %v2407 = vpack.c.bf16 %v2405, %v2405
    %2408 = vrot.lane.b32.xlu0 %v1746, 80
    %v2409 = vpop.permute.xlu0 %2408
    %v2411 = vsel %vm331, %v2406, 0
    %v2414 = vsel %vm361, %v2409, 0
    %2416 = vmatprep.subr.bf16.mxu0 0
    %2417 = vmatpush1.bf16.msra.mxu0 %v2414
    %2418 = vmatprep.subr.bf16.mxu0 0
    %2419 = vmatpush1.bf16.msra.mxu0 0
    %2420 = vmatprep.subr.bf16.mxu0 0
    %2421 = vmatpush1.bf16.msra.mxu0 0
    %2422 = vmatprep.subr.bf16.mxu0 0
    %2423 = vmatpush1.bf16.msra.mxu0 0
    %2424 = vmatprep.subr.bf16.mxu0 0
    %2425 = vmatpush1.bf16.msra.mxu0 0
    %2426 = vmatprep.subr.bf16.mxu0 0
    %2427 = vmatpush1.bf16.msra.mxu0 0
    %2428 = vmatprep.subr.bf16.mxu0 0
    %2429 = vmatpush1.bf16.msra.mxu0 0
    %2430 = vmatprep.subr.bf16.mxu0 0
    %2431 = vmatpush1.bf16.msra.mxu0 0
    %2432 = vmatprep.subr.bf16.mxu0 0
    %2433 = vmatpush1.bf16.msra.mxu0 0
    %2434 = vmatprep.subr.bf16.mxu0 0
    %2435 = vmatpush1.bf16.msra.mxu0 0
    %2436 = vmatprep.subr.bf16.mxu0 0
    %2437 = vmatpush1.bf16.msra.mxu0 0
    %2438 = vmatprep.subr.bf16.mxu0 0
    %2439 = vmatpush1.bf16.msra.mxu0 0
    %2440 = vmatprep.subr.bf16.mxu0 0
    %2441 = vmatpush1.bf16.msra.mxu0 0
    %2442 = vmatprep.subr.bf16.mxu0 0
    %2443 = vmatpush1.bf16.msra.mxu0 0
    %2444 = vmatprep.subr.bf16.mxu0 0
    %2445 = vmatpush1.bf16.msra.mxu0 0
    %2446 = vmatprep.subr.bf16.mxu0 0
    %2447 = vmatpush1.bf16.msra.mxu0 0
    %2448 = vmatprep.mubr.bf16.mxu0 0
    %2449 = vmatmul.mubr.bf16.gmra.mrb[0].mxu0 %v2411
    %v2450 = vpop.f32.mrb[0].mxu0
    %v2451 = vadd.f32 0.0, %v2450
    %v2452 = vpop.f32.mrb[0].mxu0
    %v2453 = vpop.f32.mrb[0].mxu0
    %v2454 = vpop.f32.mrb[0].mxu0
    %2455 = vdwg.mxu0
    %2456 = vrot.lane.b32.xlu0 %v1747, 80
    %v2457 = vpop.permute.xlu0 %2456
    %v2459 = vsel %vm331, %v2407, 0
    %v2462 = vsel %vm361, %v2457, 0
    %2464 = vmatprep.subr.bf16.mxu0 0
    %2465 = vmatpush1.bf16.msra.mxu0 %v2462
    %2466 = vmatprep.subr.bf16.mxu0 0
    %2467 = vmatpush1.bf16.msra.mxu0 0
    %2468 = vmatprep.subr.bf16.mxu0 0
    %2469 = vmatpush1.bf16.msra.mxu0 0
    %2470 = vmatprep.subr.bf16.mxu0 0
    %2471 = vmatpush1.bf16.msra.mxu0 0
    %2472 = vmatprep.subr.bf16.mxu0 0
    %2473 = vmatpush1.bf16.msra.mxu0 0
    %2474 = vmatprep.subr.bf16.mxu0 0
    %2475 = vmatpush1.bf16.msra.mxu0 0
    %2476 = vmatprep.subr.bf16.mxu0 0
    %2477 = vmatpush1.bf16.msra.mxu0 0
    %2478 = vmatprep.subr.bf16.mxu0 0
    %2479 = vmatpush1.bf16.msra.mxu0 0
    %2480 = vmatprep.subr.bf16.mxu0 0
    %2481 = vmatpush1.bf16.msra.mxu0 0
    %2482 = vmatprep.subr.bf16.mxu0 0
    %2483 = vmatpush1.bf16.msra.mxu0 0
    %2484 = vmatprep.subr.bf16.mxu0 0
    %2485 = vmatpush1.bf16.msra.mxu0 0
    %2486 = vmatprep.subr.bf16.mxu0 0
    %2487 = vmatpush1.bf16.msra.mxu0 0
    %2488 = vmatprep.subr.bf16.mxu0 0
    %2489 = vmatpush1.bf16.msra.mxu0 0
    %2490 = vmatprep.subr.bf16.mxu0 0
    %2491 = vmatpush1.bf16.msra.mxu0 0
    %2492 = vmatprep.subr.bf16.mxu0 0
    %2493 = vmatpush1.bf16.msra.mxu0 0
    %2494 = vmatprep.subr.bf16.mxu0 0
    %2495 = vmatpush1.bf16.msra.mxu0 0
    %2496 = vmatprep.mubr.bf16.mxu0 0
    %2497 = vmatmul.mubr.bf16.gmra.mrb[0].mxu0 %v2459
    %v2498 = vpop.f32.mrb[0].mxu0
    %v2499 = vadd.f32 0.0, %v2498
    %v2500 = vpop.f32.mrb[0].mxu0
    %v2501 = vpop.f32.mrb[0].mxu0
    %v2502 = vpop.f32.mrb[0].mxu0
    %2503 = vdwg.mxu0
    %2506 = vrot.lane.b32.xlu0 %v2010, 16
    %v2507 = vpop.permute.xlu0 %2506
    %2508 = vrot.lane.b32.xlu0 %v2059, 16
    %v2509 = vpop.permute.xlu0 %2508
    %2514 = vrot.lane.b32.xlu0 %v2231, 32
    %v2515 = vpop.permute.xlu0 %2514
    %2516 = vrot.lane.b32.xlu0 %v2279, 32
    %v2517 = vpop.permute.xlu0 %2516
    %2522 = vrot.lane.b32.xlu0 %v2451, 48
    %v2523 = vpop.permute.xlu0 %2522
    %2524 = vrot.lane.b32.xlu0 %v2499, 48
    %v2525 = vpop.permute.xlu0 %2524
    %v2528 = vsel %vm235, %v1789, %v2507
    %v2529 = vsel %vm235, %v1835, %v2509
    %v2530 = vsel %vm1141, %v2528, %v2515
    %v2531 = vsel %vm1141, %v2529, %v2517
    %v2532 = vsel %vm1144, %v2530, %v2523
    %v2533 = vsel %vm1144, %v2531, %v2525
    %v2534 = vpack.c.bf16 %v2533, %v2532
    %v2543 = vunpack.c.l.b16 %v1478
    %v2544 = vunpack.c.l.b16 %v1479
    %v2545 = vunpack.c.l.b16 %v1480
    %v2546 = vunpack.c.l.b16 %v1481
    %v2547 = vunpack.c.l.b16 %v1482
    %v2548 = vunpack.c.l.b16 %v1483
    %v2549 = vunpack.c.l.b16 %v1484
    %v2550 = vunpack.c.l.b16 %v1485
    %v2551 = vpack.c.b16 %v2544, %v2543
    %v2552 = vpack.c.b16 %v2546, %v2545
    %v2553 = vpack.c.b16 %v2548, %v2547
    %v2554 = vpack.c.b16 %v2550, %v2549
    %v2560 = vsel %vm28, %v2534, 0
    %2562 = vmatprep.subr.bf16.mxu0 0
    %2563 = vmatpush1.bf16.msra.mxu0 %v2551
    %2564 = vmatprep.subr.bf16.mxu0 0
    %2565 = vmatpush1.bf16.msra.mxu0 %v2552
    %2566 = vmatprep.subr.bf16.mxu0 0
    %2567 = vmatpush1.bf16.msra.mxu0 %v2553
    %2568 = vmatprep.subr.bf16.mxu0 0
    %2569 = vmatpush1.bf16.msra.mxu0 %v2554
    %2570 = vmatprep.subr.bf16.mxu0 0
    %2571 = vmatpush1.bf16.msra.mxu0 0
    %2572 = vmatprep.subr.bf16.mxu0 0
    %2573 = vmatpush1.bf16.msra.mxu0 0
    %2574 = vmatprep.subr.bf16.mxu0 0
    %2575 = vmatpush1.bf16.msra.mxu0 0
    %2576 = vmatprep.subr.bf16.mxu0 0
    %2577 = vmatpush1.bf16.msra.mxu0 0
    %2578 = vmatprep.subr.bf16.mxu0 0
    %2579 = vmatpush1.bf16.msra.mxu0 0
    %2580 = vmatprep.subr.bf16.mxu0 0
    %2581 = vmatpush1.bf16.msra.mxu0 0
    %2582 = vmatprep.subr.bf16.mxu0 0
    %2583 = vmatpush1.bf16.msra.mxu0 0
    %2584 = vmatprep.subr.bf16.mxu0 0
    %2585 = vmatpush1.bf16.msra.mxu0 0
    %2586 = vmatprep.subr.bf16.mxu0 0
    %2587 = vmatpush1.bf16.msra.mxu0 0
    %2588 = vmatprep.subr.bf16.mxu0 0
    %2589 = vmatpush1.bf16.msra.mxu0 0
    %2590 = vmatprep.subr.bf16.mxu0 0
    %2591 = vmatpush1.bf16.msra.mxu0 0
    %2592 = vmatprep.subr.bf16.mxu0 0
    %2593 = vmatpush1.bf16.msra.mxu0 0
    %2594 = vmatprep.mubr.bf16.mxu0 0
    %2595 = vmatmul.mubr.bf16.gmra.mrb[0].mxu0 %v2560
    %v2596 = vpop.f32.mrb[0].mxu0
    %v2597 = vadd.f32 %v1513, %v2596
    %v2598 = vpop.f32.mrb[0].mxu0
    %v2599 = vpop.f32.mrb[0].mxu0
    %v2600 = vadd.f32 %v1513, %v2599
    %v2601 = vpop.f32.mrb[0].mxu0
    %2602 = vdwg.mxu0
    %v2603 = vadd.f32 %v1467, %v2597
    %v2604 = vadd.f32 %v1468, %v2600
    %v2605 = vsel %vm28, %v2603, 0.0
    %2606 = vadd.xlane.f32.xlu0 %v2605
    %v2607 = vpop.xlane.xlu0 %2606
    %v2608 = vsel %vm28, %v2604, 0.0
    %2609 = vadd.xlane.f32.xlu0 %v2608
    %v2610 = vpop.xlane.xlu0 %2609
    %v2611 = vmul.f32 %v2607, %v35
    %v2612 = vmul.f32 %v2610, %v35
    %v2613 = vmul.f32 %v2603, %v2603
    %v2614 = vmul.f32 %v2604, %v2604
    %v2615 = vsel %vm28, %v2613, 0.0
    %2616 = vadd.xlane.f32.xlu0 %v2615
    %v2617 = vpop.xlane.xlu0 %2616
    %v2618 = vsel %vm28, %v2614, 0.0
    %2619 = vadd.xlane.f32.xlu0 %v2618
    %v2620 = vpop.xlane.xlu0 %2619
    %v2621 = vmul.f32 %v2617, %v35
    %v2622 = vmul.f32 %v2620, %v35
    %v2623 = vmul.f32 %v2611, %v2611
    %v2624 = vmul.f32 %v2612, %v2612
    %v2625 = vsub.f32 %v2621, %v2623
    %v2626 = vsub.f32 %v2622, %v2624
    %v2627 = vadd.f32 %v2625, 1e-05
    %v2628 = vadd.f32 %v2626, 1e-05
    %v2629 = vrsqrt.pop %v2627
    %v2630 = vrsqrt.pop %v2628
    %v2631 = vmul.f32 %v1514, %v2629
    %v2632 = vmul.f32 %v1514, %v2630
    %v2633 = vmul.f32 %v2603, %v2631
    %v2634 = vmul.f32 %v2604, %v2632
    %v2635 = vmul.f32 %v2611, %v2631
    %v2636 = vmul.f32 %v2612, %v2632
    %v2637 = vsub.f32 %v1515, %v2635
    %v2638 = vsub.f32 %v1515, %v2636
    %v2639 = vadd.f32 %v2633, %v2637
    %v2640 = vadd.f32 %v2634, %v2638
    %v2641 = vpack.c.bf16 %v2640, %v2639
    %v2650 = vunpack.c.l.b16 %v1486
    %v2651 = vunpack.c.l.b16 %v1487
    %v2652 = vunpack.c.l.b16 %v1488
    %v2653 = vunpack.c.l.b16 %v1489
    %v2654 = vunpack.c.l.b16 %v1490
    %v2655 = vunpack.c.l.b16 %v1491
    %v2656 = vunpack.c.l.b16 %v1492
    %v2657 = vunpack.c.l.b16 %v1493
    %v2658 = vpack.c.b16 %v2651, %v2650
    %v2659 = vpack.c.b16 %v2653, %v2652
    %v2660 = vpack.c.b16 %v2655, %v2654
    %v2661 = vpack.c.b16 %v2657, %v2656
    %v2667 = vsel %vm28, %v2641, 0
    %2669 = vmatprep.subr.bf16.mxu0 0
    %2670 = vmatpush1.bf16.msra.mxu0 %v2658
    %2671 = vmatprep.subr.bf16.mxu0 0
    %2672 = vmatpush1.bf16.msra.mxu0 %v2659
    %2673 = vmatprep.subr.bf16.mxu0 0
    %2674 = vmatpush1.bf16.msra.mxu0 %v2660
    %2675 = vmatprep.subr.bf16.mxu0 0
    %2676 = vmatpush1.bf16.msra.mxu0 %v2661
    %2677 = vmatprep.subr.bf16.mxu0 0
    %2678 = vmatpush1.bf16.msra.mxu0 0
    %2679 = vmatprep.subr.bf16.mxu0 0
    %2680 = vmatpush1.bf16.msra.mxu0 0
    %2681 = vmatprep.subr.bf16.mxu0 0
    %2682 = vmatpush1.bf16.msra.mxu0 0
    %2683 = vmatprep.subr.bf16.mxu0 0
    %2684 = vmatpush1.bf16.msra.mxu0 0
    %2685 = vmatprep.subr.bf16.mxu0 0
    %2686 = vmatpush1.bf16.msra.mxu0 0
    %2687 = vmatprep.subr.bf16.mxu0 0
    %2688 = vmatpush1.bf16.msra.mxu0 0
    %2689 = vmatprep.subr.bf16.mxu0 0
    %2690 = vmatpush1.bf16.msra.mxu0 0
    %2691 = vmatprep.subr.bf16.mxu0 0
    %2692 = vmatpush1.bf16.msra.mxu0 0
    %2693 = vmatprep.subr.bf16.mxu0 0
    %2694 = vmatpush1.bf16.msra.mxu0 0
    %2695 = vmatprep.subr.bf16.mxu0 0
    %2696 = vmatpush1.bf16.msra.mxu0 0
    %2697 = vmatprep.subr.bf16.mxu0 0
    %2698 = vmatpush1.bf16.msra.mxu0 0
    %2699 = vmatprep.subr.bf16.mxu0 0
    %2700 = vmatpush1.bf16.msra.mxu0 0
    %2701 = vmatprep.mubr.bf16.mxu0 0
    %2702 = vmatmul.mubr.bf16.gmra.mrb[0].mxu0 %v2667
    %v2703 = vpop.f32.mrb[0].mxu0
    %v2704 = vadd.f32 %v1516, %v2703
    %v2705 = vpop.f32.mrb[0].mxu0
    %v2706 = vpop.f32.mrb[0].mxu0
    %v2707 = vadd.f32 %v1516, %v2706
    %v2708 = vpop.f32.mrb[0].mxu0
    %2709 = vdwg.mxu0
    %v2710 = vmul.f32 %v2704, %v2704
    %v2711 = vmul.f32 %v2707, %v2707
    %v2712 = vmul.f32 %v2704, %v2710
    %v2713 = vmul.f32 %v2707, %v2711
    %v2714 = vmul.f32 %v2712, 0.044715
    %v2715 = vmul.f32 %v2713, 0.044715
    %v2716 = vadd.f32 %v2704, %v2714
    %v2717 = vadd.f32 %v2707, %v2715
    %v2718 = vmul.f32 %v2716, 0.7978846
    %v2719 = vmul.f32 %v2717, 0.7978846
    %v2720 = vtanh.pop %v2718
    %v2721 = vtanh.pop %v2719
    %v2722 = vadd.f32 %v2720, 1.0
    %v2723 = vadd.f32 %v2721, 1.0
    %v2724 = vmul.f32 %v2722, 0.5
    %v2725 = vmul.f32 %v2723, 0.5
    %v2726 = vmul.f32 %v2704, %v2724
    %v2727 = vmul.f32 %v2707, %v2725
    %v2728 = vpack.c.bf16 %v2727, %v2726
    %v2745 = vunpack.c.l.b16 %v1495
    %v2746 = vunpack.c.l.b16 %v1496
    %v2747 = vunpack.c.l.b16 %v1497
    %v2748 = vunpack.c.l.b16 %v1498
    %v2749 = vunpack.c.l.b16 %v1499
    %v2750 = vunpack.c.l.b16 %v1500
    %v2751 = vunpack.c.l.b16 %v1501
    %v2752 = vunpack.c.l.b16 %v1502
    %v2753 = vunpack.c.l.b16 %v1503
    %v2754 = vunpack.c.l.b16 %v1504
    %v2755 = vunpack.c.l.b16 %v1505
    %v2756 = vunpack.c.l.b16 %v1506
    %v2757 = vunpack.c.l.b16 %v1507
    %v2758 = vunpack.c.l.b16 %v1508
    %v2759 = vunpack.c.l.b16 %v1509
    %v2760 = vunpack.c.l.b16 %v1510
    %v2761 = vpack.c.b16 %v2746, %v2745
    %v2762 = vpack.c.b16 %v2748, %v2747
    %v2763 = vpack.c.b16 %v2750, %v2749
    %v2764 = vpack.c.b16 %v2752, %v2751
    %v2765 = vpack.c.b16 %v2754, %v2753
    %v2766 = vpack.c.b16 %v2756, %v2755
    %v2767 = vpack.c.b16 %v2758, %v2757
    %v2768 = vpack.c.b16 %v2760, %v2759
    %2777 = vmatprep.subr.bf16.mxu0 0
    %2778 = vmatpush1.bf16.msra.mxu0 %v2761
    %2779 = vmatprep.subr.bf16.mxu0 0
    %2780 = vmatpush1.bf16.msra.mxu0 %v2762
    %2781 = vmatprep.subr.bf16.mxu0 0
    %2782 = vmatpush1.bf16.msra.mxu0 %v2763
    %2783 = vmatprep.subr.bf16.mxu0 0
    %2784 = vmatpush1.bf16.msra.mxu0 %v2764
    %2785 = vmatprep.subr.bf16.mxu0 0
    %2786 = vmatpush1.bf16.msra.mxu0 %v2765
    %2787 = vmatprep.subr.bf16.mxu0 0
    %2788 = vmatpush1.bf16.msra.mxu0 %v2766
    %2789 = vmatprep.subr.bf16.mxu0 0
    %2790 = vmatpush1.bf16.msra.mxu0 %v2767
    %2791 = vmatprep.subr.bf16.mxu0 0
    %2792 = vmatpush1.bf16.msra.mxu0 %v2768
    %2793 = vmatprep.subr.bf16.mxu0 0
    %2794 = vmatpush1.bf16.msra.mxu0 0
    %2795 = vmatprep.subr.bf16.mxu0 0
    %2796 = vmatpush1.bf16.msra.mxu0 0
    %2797 = vmatprep.subr.bf16.mxu0 0
    %2798 = vmatpush1.bf16.msra.mxu0 0
    %2799 = vmatprep.subr.bf16.mxu0 0
    %2800 = vmatpush1.bf16.msra.mxu0 0
    %2801 = vmatprep.subr.bf16.mxu0 0
    %2802 = vmatpush1.bf16.msra.mxu0 0
    %2803 = vmatprep.subr.bf16.mxu0 0
    %2804 = vmatpush1.bf16.msra.mxu0 0
    %2805 = vmatprep.subr.bf16.mxu0 0
    %2806 = vmatpush1.bf16.msra.mxu0 0
    %2807 = vmatprep.subr.bf16.mxu0 0
    %2808 = vmatpush1.bf16.msra.mxu0 0
    %2809 = vmatprep.mubr.bf16.mxu0 0
    %2810 = vmatmul.mubr.bf16.gmra.mrb[0].mxu0 %v2728
    %v2811 = vpop.f32.mrb[0].mxu0
    %v2812 = vadd.f32 %v1517, %v2811
    %v2813 = vpop.f32.mrb[0].mxu0
    %v2814 = vpop.f32.mrb[0].mxu0
    %v2815 = vadd.f32 %v1517, %v2814
    %v2816 = vpop.f32.mrb[0].mxu0
    %2817 = vdwg.mxu0
    %v2818 = vadd.f32 %v2639, %v2812
    %v2819 = vadd.f32 %v2640, %v2815
    %v2820 = vsel %vm28, %v2818, 0.0
    %2821 = vadd.xlane.f32.xlu0 %v2820
    %v2822 = vpop.xlane.xlu0 %2821
    %v2823 = vsel %vm28, %v2819, 0.0
    %2824 = vadd.xlane.f32.xlu0 %v2823
    %v2825 = vpop.xlane.xlu0 %2824
    %v2826 = vmul.f32 %v2822, %v35
    %v2827 = vmul.f32 %v2825, %v35
    %v2828 = vmul.f32 %v2818, %v2818
    %v2829 = vmul.f32 %v2819, %v2819
    %v2830 = vsel %vm28, %v2828, 0.0
    %2831 = vadd.xlane.f32.xlu0 %v2830
    %v2832 = vpop.xlane.xlu0 %2831
    %v2833 = vsel %vm28, %v2829, 0.0
    %2834 = vadd.xlane.f32.xlu0 %v2833
    %v2835 = vpop.xlane.xlu0 %2834
    %v2836 = vmul.f32 %v2832, %v35
    %v2837 = vmul.f32 %v2835, %v35
    %v2838 = vmul.f32 %v2826, %v2826
    %v2839 = vmul.f32 %v2827, %v2827
    %v2840 = vsub.f32 %v2836, %v2838
    %v2841 = vsub.f32 %v2837, %v2839
    %v2842 = vadd.f32 %v2840, 1e-05
    %v2843 = vadd.f32 %v2841, 1e-05
    %v2844 = vrsqrt.pop %v2842
    %v2845 = vrsqrt.pop %v2843
    %v2846 = vmul.f32 %v1518, %v2844
    %v2847 = vmul.f32 %v1518, %v2845
    %v2848 = vmul.f32 %v2818, %v2846
    %v2849 = vmul.f32 %v2819, %v2847
    %v2850 = vmul.f32 %v2826, %v2846
    %v2851 = vmul.f32 %v2827, %v2847
    %v2852 = vsub.f32 %v1519, %v2850
    %v2853 = vsub.f32 %v1519, %v2851
    %v2854 = vadd.f32 %v2848, %v2852
    %v2855 = vadd.f32 %v2849, %v2853
    %v2857 = vrot.slane %v2855, 7
    %vm2859 = vcmask 1040384
    %v2860 = vsel %vm2859, %v2854, %v2857
    %v2861 = vld [vmem:[%s2 + $0x10] sm:$0xf]
    %v2862 = vld [vmem:[%s2 + $0x24] sm:$0xf]
    %v2863 = vld [vmem:[%s2 + $0x38] sm:$0xf]
    %v2864 = vld [vmem:[%s2 + $0x4c] sm:$0xf]
    %v2865 = vld [vmem:[%s2 + $0x60] sm:$0xf]
    %v2866 = vld [vmem:[%s2 + $0x74] sm:$0xf]
    %v2867 = vld [vmem:[%s2 + $0x88] sm:$0xf]
    %v2868 = vld [vmem:[%s2 + $0x9c] sm:$0xf]
    %v2869 = vpack.c.bf16 %v2860, %v2860
    %v2878 = vunpack.c.l.b16 %v2861
    %v2879 = vunpack.c.l.b16 %v2862
    %v2880 = vunpack.c.l.b16 %v2863
    %v2881 = vunpack.c.l.b16 %v2864
    %v2882 = vunpack.c.l.b16 %v2865
    %v2883 = vunpack.c.l.b16 %v2866
    %v2884 = vunpack.c.l.b16 %v2867
    %v2885 = vunpack.c.l.b16 %v2868
    %v2886 = vpack.c.b16 %v2879, %v2878
    %v2887 = vpack.c.b16 %v2881, %v2880
    %v2888 = vpack.c.b16 %v2883, %v2882
    %v2889 = vpack.c.b16 %v2885, %v2884
    %v2895 = vsel %vm28, %v2869, 0
    %2897 = vmatprep.subr.bf16.mxu0 0
    %2898 = vmatpush1.bf16.msra.mxu0 %v2886
    %2899 = vmatprep.subr.bf16.mxu0 0
    %2900 = vmatpush1.bf16.msra.mxu0 %v2887
    %2901 = vmatprep.subr.bf16.mxu0 0
    %2902 = vmatpush1.bf16.msra.mxu0 %v2888
    %2903 = vmatprep.subr.bf16.mxu0 0
    %2904 = vmatpush1.bf16.msra.mxu0 %v2889
    %2905 = vmatprep.subr.bf16.mxu0 0
    %2906 = vmatpush1.bf16.msra.mxu0 0
    %2907 = vmatprep.subr.bf16.mxu0 0
    %2908 = vmatpush1.bf16.msra.mxu0 0
    %2909 = vmatprep.subr.bf16.mxu0 0
    %2910 = vmatpush1.bf16.msra.mxu0 0
    %2911 = vmatprep.subr.bf16.mxu0 0
    %2912 = vmatpush1.bf16.msra.mxu0 0
    %2913 = vmatprep.subr.bf16.mxu0 0
    %2914 = vmatpush1.bf16.msra.mxu0 0
    %2915 = vmatprep.subr.bf16.mxu0 0
    %2916 = vmatpush1.bf16.msra.mxu0 0
    %2917 = vmatprep.subr.bf16.mxu0 0
    %2918 = vmatpush1.bf16.msra.mxu0 0
    %2919 = vmatprep.subr.bf16.mxu0 0
    %2920 = vmatpush1.bf16.msra.mxu0 0
    %2921 = vmatprep.subr.bf16.mxu0 0
    %2922 = vmatpush1.bf16.msra.mxu0 0
    %2923 = vmatprep.subr.bf16.mxu0 0
    %2924 = vmatpush1.bf16.msra.mxu0 0
    %2925 = vmatprep.subr.bf16.mxu0 0
    %2926 = vmatpush1.bf16.msra.mxu0 0
    %2927 = vmatprep.subr.bf16.mxu0 0
    %2928 = vmatpush1.bf16.msra.mxu0 0
    %2929 = vmatprep.mubr.bf16.mxu0 0
    %2930 = vmatmul.mubr.bf16.gmra.mrb[0].mxu0 %v2895
    %v2931 = vpop.f32.mrb[0].mxu0
    %v2932 = vadd.f32 %v25, %v2931
    %v2933 = vpop.f32.mrb[0].mxu0
    %v2934 = vpop.f32.mrb[0].mxu0
    %v2935 = vpop.f32.mrb[0].mxu0
    %2936 = vdwg.mxu0
    %2937 = vst [vmem:[#allocation2] sm:$0x3] %v2932
    // Predicated region
    $region22: #{rumour_cls_forward.1} parent=1 // pred_check
      _
    $region23: #{rumour_cls_forward.1} parent=1 // pred_check_branch
      %2939 = sbr.rel (0) target = $region25
    $region24: #{rumour_cls_forward.1} parent=1 // pred_region
      %s2941 = ssub.s32 32, 32
      %2942 = vsyncadd [#allocation3], %s2941
      %s2944 = sshll.u32 [#allocation2], 4
      %s2945 = int_to_ptr.vmem [resolvable:$true] %s2944
      %2947 = dma.vmem_to_hbm [thread:$0]  %s2945, 32, %s5, [#allocation3]
    $region25: #{rumour_cls_forward.1} parent=1 // pred_fallthru
      _
    // Predicated region
    $region26: #{rumour_cls_forward.1} parent=1 // pred_check
      _
    $region27: #{rumour_cls_forward.1} parent=1 // pred_check_branch
      %2949 = sbr.rel (0) target = $region29
    $region28: #{rumour_cls_forward.1} parent=1 // pred_region
      %2950 = dma.done [#allocation3], 32
    $region29: #{rumour_cls_forward.1} parent=1 // pred_fallthru
      _
    %2951 = vsyncpa [#allocation3], 1

</llo_original>
